<compile_context>
chip_gen: v7x
topology: tpu7x:2x2x1
jax: 0.10.0
libtpu: 0.0.40
codegen_flags: <defaults>
</compile_context>

<pallas_src>
import functools

import jax
import jax.numpy as jnp
from jax import lax
from jax.experimental import pallas as pl
from jax.experimental.pallas import tpu as pltpu

EPS = 1e-5


def _bn_rows(h, gamma, beta):
    """BatchNorm over rows of (R, C): one-pass biased stats, var clamped >= 0."""
    mu = jnp.mean(h, axis=0, keepdims=True)
    ms = jnp.mean(h * h, axis=0, keepdims=True)
    var = jnp.maximum(ms - mu * mu, 0.0)          # f32 cancellation can go < 0
    return (h - mu) * lax.rsqrt(var + EPS) * gamma + beta


def vae_encoder_block_kernel(
    x_ref,                                # (B, L, 256) f32, NLC
    w1c_ref, b1_ref, g1_ref, be1_ref,     # (256, 192) dot_dtype, (1,64) f32 x3
    w2_ref, b2_ref, g2_ref, be2_ref,      # (64, 64)   dot_dtype, (1,64) f32 x3
    w3c_ref, b3_ref, g3_ref, be3_ref,     # (192, 256) dot_dtype, (1,256) f32 x3
    out_ref,                              # (B, L, 256) f32
    *, precision, dot_dtype,
):
    B, L, C = x_ref.shape
    R = B * L
    dot = functools.partial(jnp.dot, preferred_element_type=jnp.float32,
                            precision=precision)

    x2d = x_ref[...].reshape(R, C)

    # Sequence-edge masks: row r = b*L + l.  Shifted taps that fall outside
    # [0, L) within a batch are zeroed, so the flat sublane roll may wrap
    # across batch boundaries — the wrapped rows are exactly the masked ones.
    row = lax.broadcasted_iota(jnp.int32, (R, 1), 0)
    l_idx = row % L
    not_first = l_idx != 0            # keep the l-1 tap
    not_last = l_idx != (L - 1)       # keep the l+1 tap

    # ---- Conv1d(256 -> 64, k=3, pad=1): ONE fused (R,256)x(256,192) dot -----
    # w1c columns [k*64:(k+1)*64] hold tap k; recombine the three tap outputs
    # with sublane rolls (XLU) + edge masks (VPU select).
    y = dot(x2d.astype(dot_dtype), w1c_ref[...])               # (R, 192) f32
    y0 = y[:, 0:64]
    y1 = y[:, 64:128]
    y2 = y[:, 128:192]
    h1 = (y1
          + jnp.where(not_first, pltpu.roll(y0, shift=1, axis=0), 0.0)      # y0[l-1]
          + jnp.where(not_last, pltpu.roll(y2, shift=R - 1, axis=0), 0.0)   # y2[l+1]
          + b1_ref[...])

    # ---- BatchNorm1d(64) + ReLU ---------------------------------------------
    h1 = jnp.maximum(_bn_rows(h1, g1_ref[...], be1_ref[...]), 0.0)

    # ---- Conv1d(64 -> 64, k=1) == matmul, + BN + ReLU -----------------------
    h2 = dot(h1.astype(dot_dtype), w2_ref[...]) + b2_ref[...]
    h2 = jnp.maximum(_bn_rows(h2, g2_ref[...], be2_ref[...]), 0.0)

    # ---- Conv1d(64 -> 256, k=3, pad=1): im2col K=192, ONE fused dot ---------
    h2m = jnp.where(not_first, pltpu.roll(h2, shift=1, axis=0), 0.0)        # h2[l-1]
    h2p = jnp.where(not_last, pltpu.roll(h2, shift=R - 1, axis=0), 0.0)     # h2[l+1]
    a_cat = jnp.concatenate([h2m, h2, h2p], axis=1).astype(dot_dtype)       # (R, 192)
    h3 = dot(a_cat, w3c_ref[...]) + b3_ref[...]

    # ---- BatchNorm1d(256), no ReLU here --------------------------------------
    h3 = _bn_rows(h3, g3_ref[...], be3_ref[...])

    # ---- residual (res=True; requires C == 256) ------------------------------
    y3 = (x2d + h3).reshape(B, L, C)

    # ---- InstanceNorm1d(256): per-(batch, channel) stats over L, no affine ---
    mu = jnp.mean(y3, axis=1, keepdims=True)
    ms = jnp.mean(y3 * y3, axis=1, keepdims=True)
    var = jnp.maximum(ms - mu * mu, 0.0)
    y3 = (y3 - mu) * lax.rsqrt(var + EPS)

    # ---- final ReLU -----------------------------------------------------------
    out_ref[...] = jnp.maximum(y3, 0.0)


def _vmem_limit_bytes():
    """Generation-aware scoped-VMEM limit with headroom for compiler scratch."""
    cap = 128 * 1024 * 1024
    try:
        info = pltpu.get_tpu_info()
        cap = int(getattr(info, "vmem_capacity_bytes", cap) or cap)
    except Exception:
        pass
    # ~75% of physical per-core VMEM, capped at 112 MiB, floored at 32 MiB.
    return max(32 * 1024 * 1024, min((cap * 3) // 4, 112 * 1024 * 1024))


def vae_encoder_block_nlc(x_blc, p, *, faithful=False):
    """Native entry point.  x_blc: (B, L, 256) f32.  Returns (B, L, 256) f32.

    faithful=False -> bf16 matmul operands, single-pass MXU (fast path).
    faithful=True  -> f32 operands + lax.Precision.HIGHEST (validation path).
    Prefer integrating at this (B, L, C) layout so no transposes are needed;
    L a multiple of 8 keeps the (B,L,C)<->(B*L,C) reshapes free.
    """
    B, L, Cin = x_blc.shape
    assert Cin == 256, "residual path (res=True) requires in_channel == 256"

    dot_dtype = jnp.float32 if faithful else jnp.bfloat16
    precision = lax.Precision.HIGHEST if faithful else None

    # torch Conv1d weights (O, I, K) -> fused MXU-friendly layouts
    w1_kio = jnp.transpose(p["w1"], (2, 1, 0))                          # (3,256,64)
    w1c = jnp.concatenate([w1_kio[0], w1_kio[1], w1_kio[2]], axis=1)    # (256,192)
    w2 = p["w2"][:, :, 0].T                                             # (64,64)
    w3c = jnp.transpose(p["w3"], (2, 1, 0)).reshape(192, 256)           # (192,256)
    row = lambda v: v.reshape(1, -1).astype(jnp.float32)

    ins = (x_blc.astype(jnp.float32),
           w1c.astype(dot_dtype), row(p["b1"]), row(p["g1"]), row(p["be1"]),
           w2.astype(dot_dtype), row(p["b2"]), row(p["g2"]), row(p["be2"]),
           w3c.astype(dot_dtype), row(p["b3"]), row(p["g3"]), row(p["be3"]))

    vmem = pl.BlockSpec(memory_space=pltpu.MemorySpace.VMEM)
    kernel = functools.partial(vae_encoder_block_kernel,
                               precision=precision, dot_dtype=dot_dtype)
    return pl.pallas_call(
        kernel,
        out_shape=jax.ShapeDtypeStruct((B, L, 256), jnp.float32),
        in_specs=[vmem] * len(ins),
        out_specs=vmem,
        compiler_params=pltpu.CompilerParams(
            vmem_limit_bytes=_vmem_limit_bytes()),
    )(*ins)


def vae_encoder_block(x_ncl, p, *, faithful=False):
    """PyTorch-layout wrapper.  x_ncl: (B, 256, L) f32.  Returns (B, 256, L).

    NOTE: the two transposes are full HBM round trips; when the surrounding
    model can stay in (B, L, C), call vae_encoder_block_nlc directly.
    """
    x_blc = jnp.transpose(x_ncl, (0, 2, 1))
    out_blc = vae_encoder_block_nlc(x_blc, p, faithful=faithful)
    return jnp.transpose(out_blc, (0, 2, 1))


def init_params(key, in_channel=256, k=3):
    keys = jax.random.split(key, 12)
    n = lambda kk, shape, s=0.05: s * jax.random.normal(kk, shape, jnp.float32)
    return dict(
        w1=n(keys[0], (64, in_channel, k)), b1=n(keys[1], (64,)),
        g1=1.0 + n(keys[2], (64,)), be1=n(keys[3], (64,)),
        w2=n(keys[4], (64, 64, 1)), b2=n(keys[5], (64,)),
        g2=1.0 + n(keys[6], (64,)), be2=n(keys[7], (64,)),
        w3=n(keys[8], (256, 64, k)), b3=n(keys[9], (256,)),
        g3=1.0 + n(keys[10], (256,)), be3=n(keys[11], (256,)),
    )


def reference_forward(x_ncl, p):
    """Pure-JAX f32 reference (same math as the torch module, NCL layout)."""
    def conv1d(x, w, b, pad):
        y = lax.conv_general_dilated(
            x, w, window_strides=(1,), padding=[(pad, pad)],
            dimension_numbers=("NCH", "OIH", "NCH"),
            precision=lax.Precision.HIGHEST)
        return y + b[None, :, None]

    def bn(x, g, be):
        mu = jnp.mean(x, axis=(0, 2), keepdims=True)
        var = jnp.mean((x - mu) ** 2, axis=(0, 2), keepdims=True)
        return (x - mu) * lax.rsqrt(var + EPS) * g[None, :, None] + be[None, :, None]

    h = jax.nn.relu(bn(conv1d(x_ncl, p["w1"], p["b1"], 1), p["g1"], p["be1"]))
    h = jax.nn.relu(bn(conv1d(h, p["w2"], p["b2"], 0), p["g2"], p["be2"]))
    h = bn(conv1d(h, p["w3"], p["b3"], 1), p["g3"], p["be3"])
    y = x_ncl + h                                        # res=True
    mu = jnp.mean(y, axis=2, keepdims=True)
    var = jnp.mean((y - mu) ** 2, axis=2, keepdims=True)
    y = (y - mu) * lax.rsqrt(var + EPS)                  # InstanceNorm1d, no affine
    return jax.nn.relu(y)


if __name__ == "__main__":
    key = jax.random.PRNGKey(0)
    kp, kx = jax.random.split(key)

    B, Cin, L = 2, 256, 16          # residual path fixes in_channel == 256
    params = init_params(kp, in_channel=Cin, k=3)
    x = jax.random.normal(kx, (B, Cin, L), jnp.float32)

    ref = jax.block_until_ready(reference_forward(x, params))

    # f32-faithful path: structural check of fused convs / roll-based shifts /
    # one-pass clamped stats against the f32 reference.
    out_hi = jax.block_until_ready(vae_encoder_block(x, params, faithful=True))
    assert out_hi.shape == (B, 256, L), out_hi.shape
    err_hi = float(jnp.max(jnp.abs(out_hi - ref)))
    if not bool(jnp.allclose(out_hi, ref, atol=1e-3, rtol=1e-3)):
        raise AssertionError(
            f"faithful path vs reference mismatch, max abs err = {err_hi}")

    # Fast path (bf16 matmul operands, default MXU precision): production
    # config from the perf review, validated at matmul-truncation accuracy.
    # NOTE: BN/InstanceNorm statistics are computed from bf16-truncated matmul
    # outputs on this path (accepted by design).
    out_fast = jax.block_until_ready(vae_encoder_block(x, params))
    assert out_fast.shape == (B, 256, L), out_fast.shape
    rel_l2 = float(jnp.linalg.norm(out_fast - ref)
                   / (jnp.linalg.norm(ref) + 1e-12))
    if not rel_l2 < 3e-2:
        raise AssertionError(
            f"fast (bf16) path rel-L2 error too large: {rel_l2}")

    print("KERNEL_OK")
</pallas_src>

<mosaic_0001>
module attributes {stable_mosaic.version = 11 : i64} {
  func.func @vae_encoder_block_kernel(%arg0: memref<2x16x256xf32, #tpu.memory_space<vmem>>, %arg1: memref<256x192xf32, #tpu.memory_space<vmem>>, %arg2: memref<1x64xf32, #tpu.memory_space<vmem>>, %arg3: memref<1x64xf32, #tpu.memory_space<vmem>>, %arg4: memref<1x64xf32, #tpu.memory_space<vmem>>, %arg5: memref<64x64xf32, #tpu.memory_space<vmem>>, %arg6: memref<1x64xf32, #tpu.memory_space<vmem>>, %arg7: memref<1x64xf32, #tpu.memory_space<vmem>>, %arg8: memref<1x64xf32, #tpu.memory_space<vmem>>, %arg9: memref<192x256xf32, #tpu.memory_space<vmem>>, %arg10: memref<1x256xf32, #tpu.memory_space<vmem>>, %arg11: memref<1x256xf32, #tpu.memory_space<vmem>>, %arg12: memref<1x256xf32, #tpu.memory_space<vmem>>, %arg13: memref<2x16x256xf32, #tpu.memory_space<vmem>>) attributes {dimension_semantics = [], scalar_prefetch = 0 : i64, scratch_operands = 0 : i64, tpu.core_type = #tpu.core_type<tc>} {
    %c0 = arith.constant 0 : index
    %c0_0 = arith.constant 0 : index
    %c0_1 = arith.constant 0 : index
    %0 = vector.load %arg0[%c0, %c0_0, %c0_1] : memref<2x16x256xf32, #tpu.memory_space<vmem>>, vector<2x16x256xf32>
    %1 = vector.shape_cast %0 : vector<2x16x256xf32> to vector<32x256xf32>
    %2 = tpu.iota {dimensions = array<i32: 0>} : vector<32x1xi32>
    %c16_i32 = arith.constant 16 : i32
    %c0_i32 = arith.constant 0 : i32
    %3 = arith.cmpi eq, %c16_i32, %c0_i32 : i32
    %c1_i32 = arith.constant 1 : i32
    %4 = arith.select %3, %c1_i32, %c16_i32 : i32
    %5 = vector.broadcast %4 : i32 to vector<32x1xi32>
    %6 = arith.remsi %2, %5 : vector<32x1xi32>
    %c0_i32_2 = arith.constant 0 : i32
    %7 = vector.broadcast %c0_i32_2 : i32 to vector<32x1xi32>
    %8 = arith.cmpi ne, %6, %7 : vector<32x1xi32>
    %c0_i32_3 = arith.constant 0 : i32
    %9 = vector.broadcast %c0_i32_3 : i32 to vector<32x1xi32>
    %10 = arith.cmpi slt, %6, %9 : vector<32x1xi32>
    %c0_i32_4 = arith.constant 0 : i32
    %11 = arith.cmpi slt, %4, %c0_i32_4 : i32
    %12 = vector.broadcast %11 : i1 to vector<32x1xi1>
    %13 = vector.broadcast %12 : vector<32x1xi1> to vector<32x1xi1>
    %14 = arith.xori %10, %13 : vector<32x1xi1>
    %15 = arith.andi %14, %8 : vector<32x1xi1>
    %16 = vector.broadcast %4 : i32 to vector<32x1xi32>
    %17 = arith.addi %6, %16 : vector<32x1xi32>
    %18 = arith.select %15, %17, %6 : vector<32x1xi1>, vector<32x1xi32>
    %c0_i32_5 = arith.constant 0 : i32
    %19 = vector.broadcast %c0_i32_5 : i32 to vector<32x1xi32>
    %20 = arith.cmpi ne, %18, %19 : vector<32x1xi32>
    %c15_i32 = arith.constant 15 : i32
    %21 = vector.broadcast %c15_i32 : i32 to vector<32x1xi32>
    %22 = arith.cmpi ne, %18, %21 : vector<32x1xi32>
    %c0_6 = arith.constant 0 : index
    %c0_7 = arith.constant 0 : index
    %23 = vector.load %arg1[%c0_6, %c0_7] : memref<256x192xf32, #tpu.memory_space<vmem>>, vector<256x192xf32>
    %cst = arith.constant dense<0.000000e+00> : vector<32x192xf32>
    %24 = tpu.matmul %1, %23, %cst {dimension_numbers = #tpu.dot_dimension_numbers<[1], [0], [0], [1], [0, 0, 1, 1], [], []>, precision = #tpu.contract_precision<fp32>} : vector<32x256xf32>, vector<256x192xf32>, vector<32x192xf32> -> vector<32x192xf32>
    %25 = vector.extract_strided_slice %24 {offsets = [0, 0], sizes = [32, 64], strides = [1, 1]} : vector<32x192xf32> to vector<32x64xf32>
    %26 = vector.extract_strided_slice %24 {offsets = [0, 64], sizes = [32, 64], strides = [1, 1]} : vector<32x192xf32> to vector<32x64xf32>
    %27 = vector.extract_strided_slice %24 {offsets = [0, 128], sizes = [32, 64], strides = [1, 1]} : vector<32x192xf32> to vector<32x64xf32>
    %c1_i32_8 = arith.constant 1 : i32
    %28 = tpu.dynamic_rotate %25 by %c1_i32_8 dim 0 : vector<32x64xf32>, i32 -> vector<32x64xf32>
    %cst_9 = arith.constant 0.000000e+00 : f32
    %29 = vector.shape_cast %20 : vector<32x1xi1> to vector<32x1xi1>
    %30 = vector.broadcast %29 : vector<32x1xi1> to vector<32x64xi1>
    %31 = vector.broadcast %cst_9 : f32 to vector<32x64xf32>
    %32 = arith.select %30, %28, %31 : vector<32x64xi1>, vector<32x64xf32>
    %33 = arith.addf %26, %32 : vector<32x64xf32>
    %c31_i32 = arith.constant 31 : i32
    %34 = tpu.dynamic_rotate %27 by %c31_i32 dim 0 : vector<32x64xf32>, i32 -> vector<32x64xf32>
    %cst_10 = arith.constant 0.000000e+00 : f32
    %35 = vector.shape_cast %22 : vector<32x1xi1> to vector<32x1xi1>
    %36 = vector.broadcast %35 : vector<32x1xi1> to vector<32x64xi1>
    %37 = vector.broadcast %cst_10 : f32 to vector<32x64xf32>
    %38 = arith.select %36, %34, %37 : vector<32x64xi1>, vector<32x64xf32>
    %39 = arith.addf %33, %38 : vector<32x64xf32>
    %c0_11 = arith.constant 0 : index
    %c0_12 = arith.constant 0 : index
    %40 = vector.load %arg2[%c0_11, %c0_12] : memref<1x64xf32, #tpu.memory_space<vmem>>, vector<1x64xf32>
    %41 = vector.broadcast %40 : vector<1x64xf32> to vector<32x64xf32>
    %42 = arith.addf %39, %41 : vector<32x64xf32>
    %c0_13 = arith.constant 0 : index
    %c0_14 = arith.constant 0 : index
    %43 = vector.load %arg3[%c0_13, %c0_14] : memref<1x64xf32, #tpu.memory_space<vmem>>, vector<1x64xf32>
    %c0_15 = arith.constant 0 : index
    %c0_16 = arith.constant 0 : index
    %44 = vector.load %arg4[%c0_15, %c0_16] : memref<1x64xf32, #tpu.memory_space<vmem>>, vector<1x64xf32>
    %cst_17 = arith.constant dense<0.000000e+00> : vector<64xf32>
    %45 = vector.multi_reduction <add>, %42, %cst_17 [0] : vector<32x64xf32> to vector<64xf32>
    %46 = vector.shape_cast %45 : vector<64xf32> to vector<1x64xf32>
    %cst_18 = arith.constant 3.200000e+01 : f32
    %47 = vector.broadcast %cst_18 : f32 to vector<1x64xf32>
    %48 = arith.divf %46, %47 : vector<1x64xf32>
    %49 = arith.mulf %42, %42 : vector<32x64xf32>
    %cst_19 = arith.constant dense<0.000000e+00> : vector<64xf32>
    %50 = vector.multi_reduction <add>, %49, %cst_19 [0] : vector<32x64xf32> to vector<64xf32>
    %51 = vector.shape_cast %50 : vector<64xf32> to vector<1x64xf32>
    %cst_20 = arith.constant 3.200000e+01 : f32
    %52 = vector.broadcast %cst_20 : f32 to vector<1x64xf32>
    %53 = arith.divf %51, %52 : vector<1x64xf32>
    %54 = arith.mulf %48, %48 : vector<1x64xf32>
    %55 = arith.subf %53, %54 : vector<1x64xf32>
    %cst_21 = arith.constant 0.000000e+00 : f32
    %56 = vector.broadcast %cst_21 : f32 to vector<1x64xf32>
    %57 = arith.maximumf %55, %56 : vector<1x64xf32>
    %58 = vector.broadcast %48 : vector<1x64xf32> to vector<32x64xf32>
    %59 = arith.subf %42, %58 : vector<32x64xf32>
    %cst_22 = arith.constant 9.99999974E-6 : f32
    %60 = vector.broadcast %cst_22 : f32 to vector<1x64xf32>
    %61 = arith.addf %57, %60 : vector<1x64xf32>
    %62 = math.rsqrt %61 : vector<1x64xf32>
    %63 = vector.broadcast %62 : vector<1x64xf32> to vector<32x64xf32>
    %64 = arith.mulf %59, %63 : vector<32x64xf32>
    %65 = vector.broadcast %43 : vector<1x64xf32> to vector<32x64xf32>
    %66 = arith.mulf %64, %65 : vector<32x64xf32>
    %67 = vector.broadcast %44 : vector<1x64xf32> to vector<32x64xf32>
    %68 = arith.addf %66, %67 : vector<32x64xf32>
    %cst_23 = arith.constant 0.000000e+00 : f32
    %69 = vector.broadcast %cst_23 : f32 to vector<32x64xf32>
    %70 = arith.maximumf %68, %69 : vector<32x64xf32>
    %c0_24 = arith.constant 0 : index
    %c0_25 = arith.constant 0 : index
    %71 = vector.load %arg5[%c0_24, %c0_25] : memref<64x64xf32, #tpu.memory_space<vmem>>, vector<64x64xf32>
    %cst_26 = arith.constant dense<0.000000e+00> : vector<32x64xf32>
    %72 = tpu.matmul %70, %71, %cst_26 {dimension_numbers = #tpu.dot_dimension_numbers<[1], [0], [0], [1], [0, 0, 1, 1], [], []>, precision = #tpu.contract_precision<fp32>} : vector<32x64xf32>, vector<64x64xf32>, vector<32x64xf32> -> vector<32x64xf32>
    %c0_27 = arith.constant 0 : index
    %c0_28 = arith.constant 0 : index
    %73 = vector.load %arg6[%c0_27, %c0_28] : memref<1x64xf32, #tpu.memory_space<vmem>>, vector<1x64xf32>
    %74 = vector.broadcast %73 : vector<1x64xf32> to vector<32x64xf32>
    %75 = arith.addf %72, %74 : vector<32x64xf32>
    %c0_29 = arith.constant 0 : index
    %c0_30 = arith.constant 0 : index
    %76 = vector.load %arg7[%c0_29, %c0_30] : memref<1x64xf32, #tpu.memory_space<vmem>>, vector<1x64xf32>
    %c0_31 = arith.constant 0 : index
    %c0_32 = arith.constant 0 : index
    %77 = vector.load %arg8[%c0_31, %c0_32] : memref<1x64xf32, #tpu.memory_space<vmem>>, vector<1x64xf32>
    %cst_33 = arith.constant dense<0.000000e+00> : vector<64xf32>
    %78 = vector.multi_reduction <add>, %75, %cst_33 [0] : vector<32x64xf32> to vector<64xf32>
    %79 = vector.shape_cast %78 : vector<64xf32> to vector<1x64xf32>
    %cst_34 = arith.constant 3.200000e+01 : f32
    %80 = vector.broadcast %cst_34 : f32 to vector<1x64xf32>
    %81 = arith.divf %79, %80 : vector<1x64xf32>
    %82 = arith.mulf %75, %75 : vector<32x64xf32>
    %cst_35 = arith.constant dense<0.000000e+00> : vector<64xf32>
    %83 = vector.multi_reduction <add>, %82, %cst_35 [0] : vector<32x64xf32> to vector<64xf32>
    %84 = vector.shape_cast %83 : vector<64xf32> to vector<1x64xf32>
    %cst_36 = arith.constant 3.200000e+01 : f32
    %85 = vector.broadcast %cst_36 : f32 to vector<1x64xf32>
    %86 = arith.divf %84, %85 : vector<1x64xf32>
    %87 = arith.mulf %81, %81 : vector<1x64xf32>
    %88 = arith.subf %86, %87 : vector<1x64xf32>
    %cst_37 = arith.constant 0.000000e+00 : f32
    %89 = vector.broadcast %cst_37 : f32 to vector<1x64xf32>
    %90 = arith.maximumf %88, %89 : vector<1x64xf32>
    %91 = vector.broadcast %81 : vector<1x64xf32> to vector<32x64xf32>
    %92 = arith.subf %75, %91 : vector<32x64xf32>
    %cst_38 = arith.constant 9.99999974E-6 : f32
    %93 = vector.broadcast %cst_38 : f32 to vector<1x64xf32>
    %94 = arith.addf %90, %93 : vector<1x64xf32>
    %95 = math.rsqrt %94 : vector<1x64xf32>
    %96 = vector.broadcast %95 : vector<1x64xf32> to vector<32x64xf32>
    %97 = arith.mulf %92, %96 : vector<32x64xf32>
    %98 = vector.broadcast %76 : vector<1x64xf32> to vector<32x64xf32>
    %99 = arith.mulf %97, %98 : vector<32x64xf32>
    %100 = vector.broadcast %77 : vector<1x64xf32> to vector<32x64xf32>
    %101 = arith.addf %99, %100 : vector<32x64xf32>
    %cst_39 = arith.constant 0.000000e+00 : f32
    %102 = vector.broadcast %cst_39 : f32 to vector<32x64xf32>
    %103 = arith.maximumf %101, %102 : vector<32x64xf32>
    %c1_i32_40 = arith.constant 1 : i32
    %104 = tpu.dynamic_rotate %103 by %c1_i32_40 dim 0 : vector<32x64xf32>, i32 -> vector<32x64xf32>
    %cst_41 = arith.constant 0.000000e+00 : f32
    %105 = vector.shape_cast %20 : vector<32x1xi1> to vector<32x1xi1>
    %106 = vector.broadcast %105 : vector<32x1xi1> to vector<32x64xi1>
    %107 = vector.broadcast %cst_41 : f32 to vector<32x64xf32>
    %108 = arith.select %106, %104, %107 : vector<32x64xi1>, vector<32x64xf32>
    %c31_i32_42 = arith.constant 31 : i32
    %109 = tpu.dynamic_rotate %103 by %c31_i32_42 dim 0 : vector<32x64xf32>, i32 -> vector<32x64xf32>
    %cst_43 = arith.constant 0.000000e+00 : f32
    %110 = vector.shape_cast %22 : vector<32x1xi1> to vector<32x1xi1>
    %111 = vector.broadcast %110 : vector<32x1xi1> to vector<32x64xi1>
    %112 = vector.broadcast %cst_43 : f32 to vector<32x64xf32>
    %113 = arith.select %111, %109, %112 : vector<32x64xi1>, vector<32x64xf32>
    %114 = tpu.concatenate %108, %103, %113 in 1 : vector<32x64xf32>, vector<32x64xf32>, vector<32x64xf32> -> vector<32x192xf32>
    %c0_44 = arith.constant 0 : index
    %c0_45 = arith.constant 0 : index
    %115 = vector.load %arg9[%c0_44, %c0_45] : memref<192x256xf32, #tpu.memory_space<vmem>>, vector<192x256xf32>
    %cst_46 = arith.constant dense<0.000000e+00> : vector<32x256xf32>
    %116 = tpu.matmul %114, %115, %cst_46 {dimension_numbers = #tpu.dot_dimension_numbers<[1], [0], [0], [1], [0, 0, 1, 1], [], []>, precision = #tpu.contract_precision<fp32>} : vector<32x192xf32>, vector<192x256xf32>, vector<32x256xf32> -> vector<32x256xf32>
    %c0_47 = arith.constant 0 : index
    %c0_48 = arith.constant 0 : index
    %117 = vector.load %arg10[%c0_47, %c0_48] : memref<1x256xf32, #tpu.memory_space<vmem>>, vector<1x256xf32>
    %118 = vector.broadcast %117 : vector<1x256xf32> to vector<32x256xf32>
    %119 = arith.addf %116, %118 : vector<32x256xf32>
    %c0_49 = arith.constant 0 : index
    %c0_50 = arith.constant 0 : index
    %120 = vector.load %arg11[%c0_49, %c0_50] : memref<1x256xf32, #tpu.memory_space<vmem>>, vector<1x256xf32>
    %c0_51 = arith.constant 0 : index
    %c0_52 = arith.constant 0 : index
    %121 = vector.load %arg12[%c0_51, %c0_52] : memref<1x256xf32, #tpu.memory_space<vmem>>, vector<1x256xf32>
    %cst_53 = arith.constant dense<0.000000e+00> : vector<256xf32>
    %122 = vector.multi_reduction <add>, %119, %cst_53 [0] : vector<32x256xf32> to vector<256xf32>
    %123 = vector.shape_cast %122 : vector<256xf32> to vector<1x256xf32>
    %cst_54 = arith.constant 3.200000e+01 : f32
    %124 = vector.broadcast %cst_54 : f32 to vector<1x256xf32>
    %125 = arith.divf %123, %124 : vector<1x256xf32>
    %126 = arith.mulf %119, %119 : vector<32x256xf32>
    %cst_55 = arith.constant dense<0.000000e+00> : vector<256xf32>
    %127 = vector.multi_reduction <add>, %126, %cst_55 [0] : vector<32x256xf32> to vector<256xf32>
    %128 = vector.shape_cast %127 : vector<256xf32> to vector<1x256xf32>
    %cst_56 = arith.constant 3.200000e+01 : f32
    %129 = vector.broadcast %cst_56 : f32 to vector<1x256xf32>
    %130 = arith.divf %128, %129 : vector<1x256xf32>
    %131 = arith.mulf %125, %125 : vector<1x256xf32>
    %132 = arith.subf %130, %131 : vector<1x256xf32>
    %cst_57 = arith.constant 0.000000e+00 : f32
    %133 = vector.broadcast %cst_57 : f32 to vector<1x256xf32>
    %134 = arith.maximumf %132, %133 : vector<1x256xf32>
    %135 = vector.broadcast %125 : vector<1x256xf32> to vector<32x256xf32>
    %136 = arith.subf %119, %135 : vector<32x256xf32>
    %cst_58 = arith.constant 9.99999974E-6 : f32
    %137 = vector.broadcast %cst_58 : f32 to vector<1x256xf32>
    %138 = arith.addf %134, %137 : vector<1x256xf32>
    %139 = math.rsqrt %138 : vector<1x256xf32>
    %140 = vector.broadcast %139 : vector<1x256xf32> to vector<32x256xf32>
    %141 = arith.mulf %136, %140 : vector<32x256xf32>
    %142 = vector.broadcast %120 : vector<1x256xf32> to vector<32x256xf32>
    %143 = arith.mulf %141, %142 : vector<32x256xf32>
    %144 = vector.broadcast %121 : vector<1x256xf32> to vector<32x256xf32>
    %145 = arith.addf %143, %144 : vector<32x256xf32>
    %146 = arith.addf %1, %145 : vector<32x256xf32>
    %147 = vector.shape_cast %146 : vector<32x256xf32> to vector<2x16x256xf32>
    %cst_59 = arith.constant dense<0.000000e+00> : vector<2x256xf32>
    %148 = vector.multi_reduction <add>, %147, %cst_59 [1] : vector<2x16x256xf32> to vector<2x256xf32>
    %149 = vector.shape_cast %148 : vector<2x256xf32> to vector<2x1x256xf32>
    %cst_60 = arith.constant 1.600000e+01 : f32
    %150 = vector.broadcast %cst_60 : f32 to vector<2x1x256xf32>
    %151 = arith.divf %149, %150 : vector<2x1x256xf32>
    %152 = arith.mulf %147, %147 : vector<2x16x256xf32>
    %cst_61 = arith.constant dense<0.000000e+00> : vector<2x256xf32>
    %153 = vector.multi_reduction <add>, %152, %cst_61 [1] : vector<2x16x256xf32> to vector<2x256xf32>
    %154 = vector.shape_cast %153 : vector<2x256xf32> to vector<2x1x256xf32>
    %cst_62 = arith.constant 1.600000e+01 : f32
    %155 = vector.broadcast %cst_62 : f32 to vector<2x1x256xf32>
    %156 = arith.divf %154, %155 : vector<2x1x256xf32>
    %157 = arith.mulf %151, %151 : vector<2x1x256xf32>
    %158 = arith.subf %156, %157 : vector<2x1x256xf32>
    %cst_63 = arith.constant 0.000000e+00 : f32
    %159 = vector.broadcast %cst_63 : f32 to vector<2x1x256xf32>
    %160 = arith.maximumf %158, %159 : vector<2x1x256xf32>
    %161 = vector.broadcast %151 : vector<2x1x256xf32> to vector<2x16x256xf32>
    %162 = arith.subf %147, %161 : vector<2x16x256xf32>
    %cst_64 = arith.constant 9.99999974E-6 : f32
    %163 = vector.broadcast %cst_64 : f32 to vector<2x1x256xf32>
    %164 = arith.addf %160, %163 : vector<2x1x256xf32>
    %165 = math.rsqrt %164 : vector<2x1x256xf32>
    %166 = vector.broadcast %165 : vector<2x1x256xf32> to vector<2x16x256xf32>
    %167 = arith.mulf %162, %166 : vector<2x16x256xf32>
    %cst_65 = arith.constant 0.000000e+00 : f32
    %168 = vector.broadcast %cst_65 : f32 to vector<2x16x256xf32>
    %169 = arith.maximumf %167, %168 : vector<2x16x256xf32>
    %c0_66 = arith.constant 0 : index
    %c0_67 = arith.constant 0 : index
    %c0_68 = arith.constant 0 : index
    %170 = vector.load %arg13[%c0_66, %c0_67, %c0_68] : memref<2x16x256xf32, #tpu.memory_space<vmem>>, vector<2x16x256xf32>
    tpu.vector_store %arg13[%c0_66, %c0_67, %c0_68], %169 {strides = array<i32>} : memref<2x16x256xf32, #tpu.memory_space<vmem>>, vector<2x16x256xf32>,
    return
  }
}

</mosaic_0001>

<llo_original>
// kernel: tpu_custom_call.1
$region0: #{tpu_custom_call.1}
  #allocation0 [shape = 'u32[]', space=smem, size = 0x4, offset = 0x4, fixed_abs, tag = 'smem constant byte address 0x4 - core index']
  #allocation1 [shape = 'u32[144,128]{1,0:T(1,128)}', space=vmem, size = 0x12000, scoped, tag = 'internal scratch']
  %s0 = inlined_call_operand.hbm [shape: f32[2,16,256], index: 0, kind: input, shape index: {}]
  %s1 = inlined_call_operand.hbm [shape: f32[256,192], index: 1, kind: input, shape index: {}]
  %s2 = inlined_call_operand.hbm [shape: f32[1,64], index: 2, kind: input, shape index: {}]
  %s3 = inlined_call_operand.hbm [shape: f32[1,64], index: 3, kind: input, shape index: {}]
  %s4 = inlined_call_operand.hbm [shape: f32[1,64], index: 4, kind: input, shape index: {}]
  %s5 = inlined_call_operand.hbm [shape: f32[64,64], index: 5, kind: input, shape index: {}]
  %s6 = inlined_call_operand.hbm [shape: f32[1,64], index: 6, kind: input, shape index: {}]
  %s7 = inlined_call_operand.hbm [shape: f32[1,64], index: 7, kind: input, shape index: {}]
  %s8 = inlined_call_operand.hbm [shape: f32[1,64], index: 8, kind: input, shape index: {}]
  %s9 = inlined_call_operand.hbm [shape: f32[192,256], index: 9, kind: input, shape index: {}]
  %s10 = inlined_call_operand.hbm [shape: f32[1,256], index: 10, kind: input, shape index: {}]
  %s11 = inlined_call_operand.hbm [shape: f32[1,256], index: 11, kind: input, shape index: {}]
  %s12 = inlined_call_operand.hbm [shape: f32[1,256], index: 12, kind: input, shape index: {}]
  %s13 = inlined_call_operand.hbm [shape: f32[2,16,256], index: 13, kind: output, shape index: {}]
  %s14 = sld [smem:[#allocation0]]
  $region114: #{tpu_custom_call.1} parent=0
    _
  %s16 = ssub.s32 1, %s14
  %s17 = scalar_select 0, %s16, %s14
  $region1: #{tpu_custom_call.1} parent=0
    #allocation2 [shape = 'u8[32768]{0}', space=vmem, size = 0x8000, scoped, tag = 'input window, operand 0, single buffered']
    #allocation3 [shape = 's32[1]{0}', space=sflag, size = 0x4, scoped, tag = 'scoped memory for tpu_custom_call.1']
    #allocation4 [shape = 's32[1]{0}', space=sflag, size = 0x4, scoped, tag = 'scoped memory for tpu_custom_call.1']
    #allocation5 [shape = 'u8[262144]{0}', space=vmem, size = 0x40000, scoped, tag = 'input window, operand 1, single buffered']
    #allocation6 [shape = 's32[1]{0}', space=sflag, size = 0x4, scoped, tag = 'scoped memory for tpu_custom_call.1']
    #allocation7 [shape = 'u8[512]{0}', space=vmem, size = 0x400, scoped, tag = 'input window, operand 2, single buffered']
    #allocation8 [shape = 'u8[512]{0}', space=vmem, size = 0x400, scoped, tag = 'input window, operand 3, single buffered']
    #allocation9 [shape = 's32[1]{0}', space=sflag, size = 0x4, scoped, tag = 'scoped memory for tpu_custom_call.1']
    #allocation10 [shape = 'u8[512]{0}', space=vmem, size = 0x400, scoped, tag = 'input window, operand 4, single buffered']
    #allocation11 [shape = 'u8[32768]{0}', space=vmem, size = 0x8000, scoped, tag = 'input window, operand 5, single buffered']
    #allocation12 [shape = 's32[1]{0}', space=sflag, size = 0x4, scoped, tag = 'scoped memory for tpu_custom_call.1']
    #allocation13 [shape = 'u8[512]{0}', space=vmem, size = 0x400, scoped, tag = 'input window, operand 6, single buffered']
    #allocation14 [shape = 'u8[512]{0}', space=vmem, size = 0x400, scoped, tag = 'input window, operand 7, single buffered']
    #allocation15 [shape = 's32[1]{0}', space=sflag, size = 0x4, scoped, tag = 'scoped memory for tpu_custom_call.1']
    #allocation16 [shape = 'u8[512]{0}', space=vmem, size = 0x400, scoped, tag = 'input window, operand 8, single buffered']
    #allocation17 [shape = 'u8[196608]{0}', space=vmem, size = 0x30000, scoped, tag = 'input window, operand 9, single buffered']
    #allocation18 [shape = 's32[1]{0}', space=sflag, size = 0x4, scoped, tag = 'scoped memory for tpu_custom_call.1']
    #allocation19 [shape = 'u8[1024]{0}', space=vmem, size = 0x400, scoped, tag = 'input window, operand 10, single buffered']
    #allocation20 [shape = 'u8[1024]{0}', space=vmem, size = 0x400, scoped, tag = 'input window, operand 11, single buffered']
    #allocation21 [shape = 's32[1]{0}', space=sflag, size = 0x4, scoped, tag = 'scoped memory for tpu_custom_call.1']
    #allocation22 [shape = 'u8[1024]{0}', space=vmem, size = 0x400, scoped, tag = 'input window, operand 12, single buffered']
    #allocation23 [shape = 'u8[32768]{0}', space=vmem, size = 0x8000, scoped, tag = 'output window, operand 0, single buffered']
    %18 = vsyncpa [#allocation3], 0
    %19 = vsyncpa [#allocation6], 0
    %20 = vsyncpa [#allocation9], 0
    %21 = vsyncpa [#allocation12], 0
    %22 = vsyncpa [#allocation15], 0
    %23 = vsyncpa [#allocation18], 0
    %24 = vsyncpa [#allocation21], 0
    %25 = vsyncpa [#allocation4], 0
    // Predicated region
    $region2: #{tpu_custom_call.1} parent=1 // pred_check
      _
    $region3: #{tpu_custom_call.1} parent=1 // pred_check_branch
      %27 = sbr.rel (0) target = $region5
    $region4: #{tpu_custom_call.1} parent=1 // pred_region
      %s29 = ssub.s32 1024, 1024
      %30 = vsyncadd [#allocation3], %s29
      %s31 = sshll.u32 [#allocation2], 4
      %s32 = int_to_ptr.vmem [resolvable:$true] %s31
      %37 = dma.hbm_to_vmem [thread:$0]  %s0, 1024, %s32, [#allocation3], 256, 256, 16
    $region5: #{tpu_custom_call.1} parent=1 // pred_fallthru
      _
    // Predicated region
    $region6: #{tpu_custom_call.1} parent=1 // pred_check
      _
    $region7: #{tpu_custom_call.1} parent=1 // pred_check_branch
      %39 = sbr.rel (0) target = $region9
    $region8: #{tpu_custom_call.1} parent=1 // pred_region
      %s41 = ssub.s32 8192, 8192
      %42 = vsyncadd [#allocation6], %s41
      %s43 = sshll.u32 [#allocation5], 4
      %s44 = int_to_ptr.vmem [resolvable:$true] %s43
      %49 = dma.hbm_to_vmem [thread:$0]  %s1, 8192, %s44, [#allocation6], 256, 256, 16
    $region9: #{tpu_custom_call.1} parent=1 // pred_fallthru
      _
    // Predicated region
    $region10: #{tpu_custom_call.1} parent=1 // pred_check
      _
    $region11: #{tpu_custom_call.1} parent=1 // pred_check_branch
      %51 = sbr.rel (0) target = $region13
    $region12: #{tpu_custom_call.1} parent=1 // pred_region
      %s53 = ssub.s32 16, 16
      %54 = vsyncadd [#allocation6], %s53
      %s56 = sshll.u32 [#allocation7], 4
      %s57 = int_to_ptr.vmem [resolvable:$true] %s56
      %59 = dma.hbm_to_vmem [thread:$0]  %s2, 16, %s57, [#allocation6]
    $region13: #{tpu_custom_call.1} parent=1 // pred_fallthru
      _
    // Predicated region
    $region14: #{tpu_custom_call.1} parent=1 // pred_check
      _
    $region15: #{tpu_custom_call.1} parent=1 // pred_check_branch
      %61 = sbr.rel (0) target = $region17
    $region16: #{tpu_custom_call.1} parent=1 // pred_region
      %s63 = ssub.s32 16, 16
      %64 = vsyncadd [#allocation9], %s63
      %s66 = sshll.u32 [#allocation8], 4
      %s67 = int_to_ptr.vmem [resolvable:$true] %s66
      %69 = dma.hbm_to_vmem [thread:$0]  %s3, 16, %s67, [#allocation9]
    $region17: #{tpu_custom_call.1} parent=1 // pred_fallthru
      _
    // Predicated region
    $region18: #{tpu_custom_call.1} parent=1 // pred_check
      _
    $region19: #{tpu_custom_call.1} parent=1 // pred_check_branch
      %71 = sbr.rel (0) target = $region21
    $region20: #{tpu_custom_call.1} parent=1 // pred_region
      %s73 = ssub.s32 16, 16
      %74 = vsyncadd [#allocation9], %s73
      %s76 = sshll.u32 [#allocation10], 4
      %s77 = int_to_ptr.vmem [resolvable:$true] %s76
      %79 = dma.hbm_to_vmem [thread:$0]  %s4, 16, %s77, [#allocation9]
    $region21: #{tpu_custom_call.1} parent=1 // pred_fallthru
      _
    // Predicated region
    $region22: #{tpu_custom_call.1} parent=1 // pred_check
      _
    $region23: #{tpu_custom_call.1} parent=1 // pred_check_branch
      %81 = sbr.rel (0) target = $region25
    $region24: #{tpu_custom_call.1} parent=1 // pred_region
      %s83 = ssub.s32 1024, 1024
      %84 = vsyncadd [#allocation12], %s83
      %s85 = sshll.u32 [#allocation11], 4
      %s86 = int_to_ptr.vmem [resolvable:$true] %s85
      %91 = dma.hbm_to_vmem [thread:$0]  %s5, 1024, %s86, [#allocation12], 128, 128, 8
    $region25: #{tpu_custom_call.1} parent=1 // pred_fallthru
      _
    // Predicated region
    $region26: #{tpu_custom_call.1} parent=1 // pred_check
      _
    $region27: #{tpu_custom_call.1} parent=1 // pred_check_branch
      %93 = sbr.rel (0) target = $region29
    $region28: #{tpu_custom_call.1} parent=1 // pred_region
      %s95 = ssub.s32 16, 16
      %96 = vsyncadd [#allocation12], %s95
      %s98 = sshll.u32 [#allocation13], 4
      %s99 = int_to_ptr.vmem [resolvable:$true] %s98
      %101 = dma.hbm_to_vmem [thread:$0]  %s6, 16, %s99, [#allocation12]
    $region29: #{tpu_custom_call.1} parent=1 // pred_fallthru
      _
    // Predicated region
    $region30: #{tpu_custom_call.1} parent=1 // pred_check
      _
    $region31: #{tpu_custom_call.1} parent=1 // pred_check_branch
      %103 = sbr.rel (0) target = $region33
    $region32: #{tpu_custom_call.1} parent=1 // pred_region
      %s105 = ssub.s32 16, 16
      %106 = vsyncadd [#allocation15], %s105
      %s108 = sshll.u32 [#allocation14], 4
      %s109 = int_to_ptr.vmem [resolvable:$true] %s108
      %111 = dma.hbm_to_vmem [thread:$0]  %s7, 16, %s109, [#allocation15]
    $region33: #{tpu_custom_call.1} parent=1 // pred_fallthru
      _
    // Predicated region
    $region34: #{tpu_custom_call.1} parent=1 // pred_check
      _
    $region35: #{tpu_custom_call.1} parent=1 // pred_check_branch
      %113 = sbr.rel (0) target = $region37
    $region36: #{tpu_custom_call.1} parent=1 // pred_region
      %s115 = ssub.s32 16, 16
      %116 = vsyncadd [#allocation15], %s115
      %s118 = sshll.u32 [#allocation16], 4
      %s119 = int_to_ptr.vmem [resolvable:$true] %s118
      %121 = dma.hbm_to_vmem [thread:$0]  %s8, 16, %s119, [#allocation15]
    $region37: #{tpu_custom_call.1} parent=1 // pred_fallthru
      _
    // Predicated region
    $region38: #{tpu_custom_call.1} parent=1 // pred_check
      _
    $region39: #{tpu_custom_call.1} parent=1 // pred_check_branch
      %123 = sbr.rel (0) target = $region41
    $region40: #{tpu_custom_call.1} parent=1 // pred_region
      %s125 = ssub.s32 6144, 6144
      %126 = vsyncadd [#allocation18], %s125
      %s127 = sshll.u32 [#allocation17], 4
      %s128 = int_to_ptr.vmem [resolvable:$true] %s127
      %133 = dma.hbm_to_vmem [thread:$0]  %s9, 6144, %s128, [#allocation18], 256, 256, 16
    $region41: #{tpu_custom_call.1} parent=1 // pred_fallthru
      _
    // Predicated region
    $region42: #{tpu_custom_call.1} parent=1 // pred_check
      _
    $region43: #{tpu_custom_call.1} parent=1 // pred_check_branch
      %135 = sbr.rel (0) target = $region45
    $region44: #{tpu_custom_call.1} parent=1 // pred_region
      %s137 = ssub.s32 32, 32
      %138 = vsyncadd [#allocation18], %s137
      %s140 = sshll.u32 [#allocation19], 4
      %s141 = int_to_ptr.vmem [resolvable:$true] %s140
      %143 = dma.hbm_to_vmem [thread:$0]  %s10, 32, %s141, [#allocation18]
    $region45: #{tpu_custom_call.1} parent=1 // pred_fallthru
      _
    // Predicated region
    $region46: #{tpu_custom_call.1} parent=1 // pred_check
      _
    $region47: #{tpu_custom_call.1} parent=1 // pred_check_branch
      %145 = sbr.rel (0) target = $region49
    $region48: #{tpu_custom_call.1} parent=1 // pred_region
      %s147 = ssub.s32 32, 32
      %148 = vsyncadd [#allocation21], %s147
      %s150 = sshll.u32 [#allocation20], 4
      %s151 = int_to_ptr.vmem [resolvable:$true] %s150
      %153 = dma.hbm_to_vmem [thread:$0]  %s11, 32, %s151, [#allocation21]
    $region49: #{tpu_custom_call.1} parent=1 // pred_fallthru
      _
    // Predicated region
    $region50: #{tpu_custom_call.1} parent=1 // pred_check
      _
    $region51: #{tpu_custom_call.1} parent=1 // pred_check_branch
      %155 = sbr.rel (0) target = $region53
    $region52: #{tpu_custom_call.1} parent=1 // pred_region
      %s157 = ssub.s32 32, 32
      %158 = vsyncadd [#allocation21], %s157
      %s160 = sshll.u32 [#allocation22], 4
      %s161 = int_to_ptr.vmem [resolvable:$true] %s160
      %163 = dma.hbm_to_vmem [thread:$0]  %s12, 32, %s161, [#allocation21]
    $region53: #{tpu_custom_call.1} parent=1 // pred_fallthru
      _
    // Predicated region
    $region54: #{tpu_custom_call.1} parent=1 // pred_check
      _
    $region55: #{tpu_custom_call.1} parent=1 // pred_check_branch
      %165 = sbr.rel (0) target = $region57
    $region56: #{tpu_custom_call.1} parent=1 // pred_region
      %166 = dma.done [#allocation3], 1024
    $region57: #{tpu_custom_call.1} parent=1 // pred_fallthru
      _
    // Predicated region
    $region58: #{tpu_custom_call.1} parent=1 // pred_check
      _
    $region59: #{tpu_custom_call.1} parent=1 // pred_check_branch
      %168 = sbr.rel (0) target = $region61
    $region60: #{tpu_custom_call.1} parent=1 // pred_region
      %169 = dma.done [#allocation6], 8192
    $region61: #{tpu_custom_call.1} parent=1 // pred_fallthru
      _
    // Predicated region
    $region62: #{tpu_custom_call.1} parent=1 // pred_check
      _
    $region63: #{tpu_custom_call.1} parent=1 // pred_check_branch
      %171 = sbr.rel (0) target = $region65
    $region64: #{tpu_custom_call.1} parent=1 // pred_region
      %172 = dma.done [#allocation6], 16
    $region65: #{tpu_custom_call.1} parent=1 // pred_fallthru
      _
    // Predicated region
    $region66: #{tpu_custom_call.1} parent=1 // pred_check
      _
    $region67: #{tpu_custom_call.1} parent=1 // pred_check_branch
      %174 = sbr.rel (0) target = $region69
    $region68: #{tpu_custom_call.1} parent=1 // pred_region
      %175 = dma.done [#allocation9], 16
    $region69: #{tpu_custom_call.1} parent=1 // pred_fallthru
      _
    // Predicated region
    $region70: #{tpu_custom_call.1} parent=1 // pred_check
      _
    $region71: #{tpu_custom_call.1} parent=1 // pred_check_branch
      %177 = sbr.rel (0) target = $region73
    $region72: #{tpu_custom_call.1} parent=1 // pred_region
      %178 = dma.done [#allocation9], 16
    $region73: #{tpu_custom_call.1} parent=1 // pred_fallthru
      _
    // Predicated region
    $region74: #{tpu_custom_call.1} parent=1 // pred_check
      _
    $region75: #{tpu_custom_call.1} parent=1 // pred_check_branch
      %180 = sbr.rel (0) target = $region77
    $region76: #{tpu_custom_call.1} parent=1 // pred_region
      %181 = dma.done [#allocation12], 1024
    $region77: #{tpu_custom_call.1} parent=1 // pred_fallthru
      _
    // Predicated region
    $region78: #{tpu_custom_call.1} parent=1 // pred_check
      _
    $region79: #{tpu_custom_call.1} parent=1 // pred_check_branch
      %183 = sbr.rel (0) target = $region81
    $region80: #{tpu_custom_call.1} parent=1 // pred_region
      %184 = dma.done [#allocation12], 16
    $region81: #{tpu_custom_call.1} parent=1 // pred_fallthru
      _
    // Predicated region
    $region82: #{tpu_custom_call.1} parent=1 // pred_check
      _
    $region83: #{tpu_custom_call.1} parent=1 // pred_check_branch
      %186 = sbr.rel (0) target = $region85
    $region84: #{tpu_custom_call.1} parent=1 // pred_region
      %187 = dma.done [#allocation15], 16
    $region85: #{tpu_custom_call.1} parent=1 // pred_fallthru
      _
    // Predicated region
    $region86: #{tpu_custom_call.1} parent=1 // pred_check
      _
    $region87: #{tpu_custom_call.1} parent=1 // pred_check_branch
      %189 = sbr.rel (0) target = $region89
    $region88: #{tpu_custom_call.1} parent=1 // pred_region
      %190 = dma.done [#allocation15], 16
    $region89: #{tpu_custom_call.1} parent=1 // pred_fallthru
      _
    // Predicated region
    $region90: #{tpu_custom_call.1} parent=1 // pred_check
      _
    $region91: #{tpu_custom_call.1} parent=1 // pred_check_branch
      %192 = sbr.rel (0) target = $region93
    $region92: #{tpu_custom_call.1} parent=1 // pred_region
      %193 = dma.done [#allocation18], 6144
    $region93: #{tpu_custom_call.1} parent=1 // pred_fallthru
      _
    // Predicated region
    $region94: #{tpu_custom_call.1} parent=1 // pred_check
      _
    $region95: #{tpu_custom_call.1} parent=1 // pred_check_branch
      %195 = sbr.rel (0) target = $region97
    $region96: #{tpu_custom_call.1} parent=1 // pred_region
      %196 = dma.done [#allocation18], 32
    $region97: #{tpu_custom_call.1} parent=1 // pred_fallthru
      _
    // Predicated region
    $region98: #{tpu_custom_call.1} parent=1 // pred_check
      _
    $region99: #{tpu_custom_call.1} parent=1 // pred_check_branch
      %198 = sbr.rel (0) target = $region101
    $region100: #{tpu_custom_call.1} parent=1 // pred_region
      %199 = dma.done [#allocation21], 32
    $region101: #{tpu_custom_call.1} parent=1 // pred_fallthru
      _
    // Predicated region
    $region102: #{tpu_custom_call.1} parent=1 // pred_check
      _
    $region103: #{tpu_custom_call.1} parent=1 // pred_check_branch
      %201 = sbr.rel (0) target = $region105
    $region104: #{tpu_custom_call.1} parent=1 // pred_region
      %202 = dma.done [#allocation21], 32
    $region105: #{tpu_custom_call.1} parent=1 // pred_fallthru
      _
    %v203 = vld [vmem:[#allocation2] sm:$0xff]
    %v204 = vld [vmem:[#allocation2 + $0x8] sm:$0xff]
    %v205 = vld [vmem:[#allocation2 + $0x10] sm:$0xff]
    %v206 = vld [vmem:[#allocation2 + $0x18] sm:$0xff]
    %v207 = vld [vmem:[#allocation2 + $0x20] sm:$0xff]
    %v208 = vld [vmem:[#allocation2 + $0x28] sm:$0xff]
    %v209 = vld [vmem:[#allocation2 + $0x30] sm:$0xff]
    %v210 = vld [vmem:[#allocation2 + $0x38] sm:$0xff]
    %v211 = vlaneseq
    %v212 = vshrl.u32 %v211, 7
    %v213 = vadd.s32 %v212, 8
    %v214 = vadd.s32 %v212, 16
    %v215 = vadd.s32 %v212, 24
    %vm216 = vcmp.lt.s32.totalorder %v212, 0
    %v217 = vsub.s32 0, %v212
    %v218 = vsel %vm216, %v217, %v212
    %v219 = vshrl.u32 %v218, 4
    %v220 = vand.u32 %v218, 15
    %v221 = vsub.s32 0, %v220
    %v222 = vsel %vm216, %v221, %v220
    %vm223 = vcmp.lt.s32.totalorder %v213, 0
    %v224 = vsub.s32 0, %v213
    %v225 = vsel %vm223, %v224, %v213
    %v226 = vshrl.u32 %v225, 4
    %v227 = vand.u32 %v225, 15
    %v228 = vsub.s32 0, %v227
    %v229 = vsel %vm223, %v228, %v227
    %vm230 = vcmp.lt.s32.totalorder %v214, 0
    %v231 = vsub.s32 0, %v214
    %v232 = vsel %vm230, %v231, %v214
    %v233 = vshrl.u32 %v232, 4
    %v234 = vand.u32 %v232, 15
    %v235 = vsub.s32 0, %v234
    %v236 = vsel %vm230, %v235, %v234
    %vm237 = vcmp.lt.s32.totalorder %v215, 0
    %v238 = vsub.s32 0, %v215
    %v239 = vsel %vm237, %v238, %v215
    %v240 = vshrl.u32 %v239, 4
    %v241 = vand.u32 %v239, 15
    %v242 = vsub.s32 0, %v241
    %v243 = vsel %vm237, %v242, %v241
    %vm244 = vcmp.ne.s32.totalorder %v222, 0
    %vm245 = vcmp.ne.s32.totalorder %v229, 0
    %vm246 = vcmp.ne.s32.totalorder %v236, 0
    %vm247 = vcmp.ne.s32.totalorder %v243, 0
    %vm248 = vcmp.lt.s32.totalorder %v222, 0
    %vm249 = vcmp.lt.s32.totalorder %v229, 0
    %vm250 = vcmp.lt.s32.totalorder %v236, 0
    %vm251 = vcmp.lt.s32.totalorder %v243, 0
    %vm252 = vmand %vm248, %vm244
    %vm253 = vmand %vm249, %vm245
    %vm254 = vmand %vm250, %vm246
    %vm255 = vmand %vm251, %vm247
    %v256 = vadd.s32 %v222, 16
    %v257 = vadd.s32 %v229, 16
    %v258 = vadd.s32 %v236, 16
    %v259 = vadd.s32 %v243, 16
    %v260 = vsel %vm252, %v256, %v222
    %v261 = vsel %vm253, %v257, %v229
    %v262 = vsel %vm254, %v258, %v236
    %v263 = vsel %vm255, %v259, %v243
    %vm264 = vcmp.ne.s32.totalorder %v260, 0
    %vm265 = vcmp.ne.s32.totalorder %v261, 0
    %vm266 = vcmp.ne.s32.totalorder %v262, 0
    %vm267 = vcmp.ne.s32.totalorder %v263, 0
    %vm268 = vcmp.ne.s32.totalorder %v260, 15
    %vm269 = vcmp.ne.s32.totalorder %v261, 15
    %vm270 = vcmp.ne.s32.totalorder %v262, 15
    %vm271 = vcmp.ne.s32.totalorder %v263, 15
    %v272 = vld [vmem:[#allocation5] sm:$0xff]
    %v273 = vld [vmem:[#allocation5 + $0x8] sm:$0xff]
    %v274 = vld [vmem:[#allocation5 + $0x10] sm:$0xff]
    %v275 = vld [vmem:[#allocation5 + $0x18] sm:$0xff]
    %v276 = vld [vmem:[#allocation5 + $0x20] sm:$0xff]
    %v277 = vld [vmem:[#allocation5 + $0x28] sm:$0xff]
    %v278 = vld [vmem:[#allocation5 + $0x30] sm:$0xff]
    %v279 = vld [vmem:[#allocation5 + $0x38] sm:$0xff]
    %v280 = vld [vmem:[#allocation5 + $0x40] sm:$0xff]
    %v281 = vld [vmem:[#allocation5 + $0x48] sm:$0xff]
    %v282 = vld [vmem:[#allocation5 + $0x50] sm:$0xff]
    %v283 = vld [vmem:[#allocation5 + $0x58] sm:$0xff]
    %v284 = vld [vmem:[#allocation5 + $0x60] sm:$0xff]
    %v285 = vld [vmem:[#allocation5 + $0x68] sm:$0xff]
    %v286 = vld [vmem:[#allocation5 + $0x70] sm:$0xff]
    %v287 = vld [vmem:[#allocation5 + $0x78] sm:$0xff]
    %v288 = vld [vmem:[#allocation5 + $0x80] sm:$0xff]
    %v289 = vld [vmem:[#allocation5 + $0x88] sm:$0xff]
    %v290 = vld [vmem:[#allocation5 + $0x90] sm:$0xff]
    %v291 = vld [vmem:[#allocation5 + $0x98] sm:$0xff]
    %v292 = vld [vmem:[#allocation5 + $0xa0] sm:$0xff]
    %v293 = vld [vmem:[#allocation5 + $0xa8] sm:$0xff]
    %v294 = vld [vmem:[#allocation5 + $0xb0] sm:$0xff]
    %v295 = vld [vmem:[#allocation5 + $0xb8] sm:$0xff]
    %v296 = vld [vmem:[#allocation5 + $0xc0] sm:$0xff]
    %v297 = vld [vmem:[#allocation5 + $0xc8] sm:$0xff]
    %v298 = vld [vmem:[#allocation5 + $0xd0] sm:$0xff]
    %v299 = vld [vmem:[#allocation5 + $0xd8] sm:$0xff]
    %v300 = vld [vmem:[#allocation5 + $0xe0] sm:$0xff]
    %v301 = vld [vmem:[#allocation5 + $0xe8] sm:$0xff]
    %v302 = vld [vmem:[#allocation5 + $0xf0] sm:$0xff]
    %v303 = vld [vmem:[#allocation5 + $0xf8] sm:$0xff]
    %v304 = vld [vmem:[#allocation5 + $0x100] sm:$0xff]
    %v305 = vld [vmem:[#allocation5 + $0x108] sm:$0xff]
    %v306 = vld [vmem:[#allocation5 + $0x110] sm:$0xff]
    %v307 = vld [vmem:[#allocation5 + $0x118] sm:$0xff]
    %v308 = vld [vmem:[#allocation5 + $0x120] sm:$0xff]
    %v309 = vld [vmem:[#allocation5 + $0x128] sm:$0xff]
    %v310 = vld [vmem:[#allocation5 + $0x130] sm:$0xff]
    %v311 = vld [vmem:[#allocation5 + $0x138] sm:$0xff]
    %v312 = vld [vmem:[#allocation5 + $0x140] sm:$0xff]
    %v313 = vld [vmem:[#allocation5 + $0x148] sm:$0xff]
    %v314 = vld [vmem:[#allocation5 + $0x150] sm:$0xff]
    %v315 = vld [vmem:[#allocation5 + $0x158] sm:$0xff]
    %v316 = vld [vmem:[#allocation5 + $0x160] sm:$0xff]
    %v317 = vld [vmem:[#allocation5 + $0x168] sm:$0xff]
    %v318 = vld [vmem:[#allocation5 + $0x170] sm:$0xff]
    %v319 = vld [vmem:[#allocation5 + $0x178] sm:$0xff]
    %v320 = vld [vmem:[#allocation5 + $0x180] sm:$0xff]
    %v321 = vld [vmem:[#allocation5 + $0x188] sm:$0xff]
    %v322 = vld [vmem:[#allocation5 + $0x190] sm:$0xff]
    %v323 = vld [vmem:[#allocation5 + $0x198] sm:$0xff]
    %v324 = vld [vmem:[#allocation5 + $0x1a0] sm:$0xff]
    %v325 = vld [vmem:[#allocation5 + $0x1a8] sm:$0xff]
    %v326 = vld [vmem:[#allocation5 + $0x1b0] sm:$0xff]
    %v327 = vld [vmem:[#allocation5 + $0x1b8] sm:$0xff]
    %v328 = vld [vmem:[#allocation5 + $0x1c0] sm:$0xff]
    %v329 = vld [vmem:[#allocation5 + $0x1c8] sm:$0xff]
    %v330 = vld [vmem:[#allocation5 + $0x1d0] sm:$0xff]
    %v331 = vld [vmem:[#allocation5 + $0x1d8] sm:$0xff]
    %v332 = vld [vmem:[#allocation5 + $0x1e0] sm:$0xff]
    %v333 = vld [vmem:[#allocation5 + $0x1e8] sm:$0xff]
    %v334 = vld [vmem:[#allocation5 + $0x1f0] sm:$0xff]
    %v335 = vld [vmem:[#allocation5 + $0x1f8] sm:$0xff]
    %v336 = vand.u32 %v273, 4294901760
    %337 = vmatprep.subr.mxu0 %v336
    %v338 = vand.u32 %v272, 4294901760
    %339 = vmatpush1.msra.mxu0 %v338
    %v340 = vand.u32 %v275, 4294901760
    %341 = vmatprep.subr.mxu0 %v340
    %v342 = vand.u32 %v274, 4294901760
    %343 = vmatpush1.msra.mxu0 %v342
    %v344 = vand.u32 %v277, 4294901760
    %345 = vmatprep.subr.mxu0 %v344
    %v346 = vand.u32 %v276, 4294901760
    %347 = vmatpush1.msra.mxu0 %v346
    %v348 = vand.u32 %v279, 4294901760
    %349 = vmatprep.subr.mxu0 %v348
    %v350 = vand.u32 %v278, 4294901760
    %351 = vmatpush1.msra.mxu0 %v350
    %v352 = vand.u32 %v281, 4294901760
    %353 = vmatprep.subr.mxu0 %v352
    %v354 = vand.u32 %v280, 4294901760
    %355 = vmatpush1.msra.mxu0 %v354
    %v356 = vand.u32 %v283, 4294901760
    %357 = vmatprep.subr.mxu0 %v356
    %v358 = vand.u32 %v282, 4294901760
    %359 = vmatpush1.msra.mxu0 %v358
    %v360 = vand.u32 %v285, 4294901760
    %361 = vmatprep.subr.mxu0 %v360
    %v362 = vand.u32 %v284, 4294901760
    %363 = vmatpush1.msra.mxu0 %v362
    %v364 = vand.u32 %v287, 4294901760
    %365 = vmatprep.subr.mxu0 %v364
    %v366 = vand.u32 %v286, 4294901760
    %367 = vmatpush1.msra.mxu0 %v366
    %v368 = vand.u32 %v289, 4294901760
    %369 = vmatprep.subr.mxu0 %v368
    %v370 = vand.u32 %v288, 4294901760
    %371 = vmatpush1.msra.mxu0 %v370
    %v372 = vand.u32 %v291, 4294901760
    %373 = vmatprep.subr.mxu0 %v372
    %v374 = vand.u32 %v290, 4294901760
    %375 = vmatpush1.msra.mxu0 %v374
    %v376 = vand.u32 %v293, 4294901760
    %377 = vmatprep.subr.mxu0 %v376
    %v378 = vand.u32 %v292, 4294901760
    %379 = vmatpush1.msra.mxu0 %v378
    %v380 = vand.u32 %v295, 4294901760
    %381 = vmatprep.subr.mxu0 %v380
    %v382 = vand.u32 %v294, 4294901760
    %383 = vmatpush1.msra.mxu0 %v382
    %v384 = vand.u32 %v297, 4294901760
    %385 = vmatprep.subr.mxu0 %v384
    %v386 = vand.u32 %v296, 4294901760
    %387 = vmatpush1.msra.mxu0 %v386
    %v388 = vand.u32 %v299, 4294901760
    %389 = vmatprep.subr.mxu0 %v388
    %v390 = vand.u32 %v298, 4294901760
    %391 = vmatpush1.msra.mxu0 %v390
    %v392 = vand.u32 %v301, 4294901760
    %393 = vmatprep.subr.mxu0 %v392
    %v394 = vand.u32 %v300, 4294901760
    %395 = vmatpush1.msra.mxu0 %v394
    %v396 = vand.u32 %v303, 4294901760
    %397 = vmatprep.subr.mxu0 %v396
    %v398 = vand.u32 %v302, 4294901760
    %399 = vmatpush1.msra.mxu0 %v398
    %v400 = vand.u32 %v305, 4294901760
    %401 = vmatprep.subr.mxu0 %v400
    %v402 = vand.u32 %v304, 4294901760
    %403 = vmatpush1.msra.mxu0 %v402
    %v404 = vand.u32 %v307, 4294901760
    %405 = vmatprep.subr.mxu0 %v404
    %v406 = vand.u32 %v306, 4294901760
    %407 = vmatpush1.msra.mxu0 %v406
    %v408 = vand.u32 %v309, 4294901760
    %409 = vmatprep.subr.mxu0 %v408
    %v410 = vand.u32 %v308, 4294901760
    %411 = vmatpush1.msra.mxu0 %v410
    %v412 = vand.u32 %v311, 4294901760
    %413 = vmatprep.subr.mxu0 %v412
    %v414 = vand.u32 %v310, 4294901760
    %415 = vmatpush1.msra.mxu0 %v414
    %v416 = vand.u32 %v313, 4294901760
    %417 = vmatprep.subr.mxu0 %v416
    %v418 = vand.u32 %v312, 4294901760
    %419 = vmatpush1.msra.mxu0 %v418
    %v420 = vand.u32 %v315, 4294901760
    %421 = vmatprep.subr.mxu0 %v420
    %v422 = vand.u32 %v314, 4294901760
    %423 = vmatpush1.msra.mxu0 %v422
    %v424 = vand.u32 %v317, 4294901760
    %425 = vmatprep.subr.mxu0 %v424
    %v426 = vand.u32 %v316, 4294901760
    %427 = vmatpush1.msra.mxu0 %v426
    %v428 = vand.u32 %v319, 4294901760
    %429 = vmatprep.subr.mxu0 %v428
    %v430 = vand.u32 %v318, 4294901760
    %431 = vmatpush1.msra.mxu0 %v430
    %v432 = vand.u32 %v321, 4294901760
    %433 = vmatprep.subr.mxu0 %v432
    %v434 = vand.u32 %v320, 4294901760
    %435 = vmatpush1.msra.mxu0 %v434
    %v436 = vand.u32 %v323, 4294901760
    %437 = vmatprep.subr.mxu0 %v436
    %v438 = vand.u32 %v322, 4294901760
    %439 = vmatpush1.msra.mxu0 %v438
    %v440 = vand.u32 %v325, 4294901760
    %441 = vmatprep.subr.mxu0 %v440
    %v442 = vand.u32 %v324, 4294901760
    %443 = vmatpush1.msra.mxu0 %v442
    %v444 = vand.u32 %v327, 4294901760
    %445 = vmatprep.subr.mxu0 %v444
    %v446 = vand.u32 %v326, 4294901760
    %447 = vmatpush1.msra.mxu0 %v446
    %v448 = vand.u32 %v329, 4294901760
    %449 = vmatprep.subr.mxu0 %v448
    %v450 = vand.u32 %v328, 4294901760
    %451 = vmatpush1.msra.mxu0 %v450
    %v452 = vand.u32 %v331, 4294901760
    %453 = vmatprep.subr.mxu0 %v452
    %v454 = vand.u32 %v330, 4294901760
    %455 = vmatpush1.msra.mxu0 %v454
    %v456 = vand.u32 %v333, 4294901760
    %457 = vmatprep.subr.mxu0 %v456
    %v458 = vand.u32 %v332, 4294901760
    %459 = vmatpush1.msra.mxu0 %v458
    %v460 = vand.u32 %v335, 4294901760
    %461 = vmatprep.subr.mxu0 %v460
    %v462 = vand.u32 %v334, 4294901760
    %463 = vmatpush1.msra.mxu0 %v462
    %v464 = vand.u32 %v204, 4294901760
    %v465 = vsub.f32 %v204, %v464
    %v466 = vand.u32 %v465, 4294901760
    %v467 = vsub.f32 %v465, %v466
    %v468 = vand.u32 %v467, 4294901760
    %469 = vmatprep.mubr.f32.mxu0 %v468
    %v470 = vand.u32 %v203, 4294901760
    %v471 = vsub.f32 %v203, %v470
    %v472 = vand.u32 %v471, 4294901760
    %v473 = vsub.f32 %v471, %v472
    %v474 = vand.u32 %v473, 4294901760
    %475 = vmatmul.mubr.f32.gmra.mrb[0].mxu0 %v474
    %v476 = vpop.f32.mrb[0].mxu0
    %v477 = vadd.f32 0.0, %v476
    %v478 = vpop.f32.mrb[0].mxu0
    %v479 = vadd.f32 0.0, %v478
    %v480 = vand.u32 %v206, 4294901760
    %v481 = vsub.f32 %v206, %v480
    %v482 = vand.u32 %v481, 4294901760
    %v483 = vsub.f32 %v481, %v482
    %v484 = vand.u32 %v483, 4294901760
    %485 = vmatprep.mubr.f32.mxu0 %v484
    %v486 = vand.u32 %v205, 4294901760
    %v487 = vsub.f32 %v205, %v486
    %v488 = vand.u32 %v487, 4294901760
    %v489 = vsub.f32 %v487, %v488
    %v490 = vand.u32 %v489, 4294901760
    %491 = vmatmul.mubr.f32.gmra.mrb[0].mxu0 %v490
    %v492 = vpop.f32.mrb[0].mxu0
    %v493 = vadd.f32 0.0, %v492
    %v494 = vpop.f32.mrb[0].mxu0
    %v495 = vadd.f32 0.0, %v494
    %v496 = vand.u32 %v208, 4294901760
    %v497 = vsub.f32 %v208, %v496
    %v498 = vand.u32 %v497, 4294901760
    %v499 = vsub.f32 %v497, %v498
    %v500 = vand.u32 %v499, 4294901760
    %501 = vmatprep.mubr.f32.mxu0 %v500
    %v502 = vand.u32 %v207, 4294901760
    %v503 = vsub.f32 %v207, %v502
    %v504 = vand.u32 %v503, 4294901760
    %v505 = vsub.f32 %v503, %v504
    %v506 = vand.u32 %v505, 4294901760
    %507 = vmatmul.mubr.f32.gmra.mrb[0].mxu0 %v506
    %v508 = vpop.f32.mrb[0].mxu0
    %v509 = vadd.f32 0.0, %v508
    %v510 = vpop.f32.mrb[0].mxu0
    %v511 = vadd.f32 0.0, %v510
    %v512 = vand.u32 %v210, 4294901760
    %v513 = vsub.f32 %v210, %v512
    %v514 = vand.u32 %v513, 4294901760
    %v515 = vsub.f32 %v513, %v514
    %v516 = vand.u32 %v515, 4294901760
    %517 = vmatprep.mubr.f32.mxu0 %v516
    %v518 = vand.u32 %v209, 4294901760
    %v519 = vsub.f32 %v209, %v518
    %v520 = vand.u32 %v519, 4294901760
    %v521 = vsub.f32 %v519, %v520
    %v522 = vand.u32 %v521, 4294901760
    %523 = vmatmul.mubr.f32.gmra.mrb[0].mxu0 %v522
    %v524 = vpop.f32.mrb[0].mxu0
    %v525 = vadd.f32 0.0, %v524
    %v526 = vpop.f32.mrb[0].mxu0
    %v527 = vadd.f32 0.0, %v526
    %528 = vdwg.mxu0
    %v529 = vand.u32 %v273, 4294901760
    %v530 = vsub.f32 %v273, %v529
    %v531 = vand.u32 %v530, 4294901760
    %v532 = vsub.f32 %v530, %v531
    %v533 = vand.u32 %v532, 4294901760
    %534 = vmatprep.subr.mxu0 %v533
    %v535 = vand.u32 %v272, 4294901760
    %v536 = vsub.f32 %v272, %v535
    %v537 = vand.u32 %v536, 4294901760
    %v538 = vsub.f32 %v536, %v537
    %v539 = vand.u32 %v538, 4294901760
    %540 = vmatpush1.msra.mxu0 %v539
    %v541 = vand.u32 %v275, 4294901760
    %v542 = vsub.f32 %v275, %v541
    %v543 = vand.u32 %v542, 4294901760
    %v544 = vsub.f32 %v542, %v543
    %v545 = vand.u32 %v544, 4294901760
    %546 = vmatprep.subr.mxu0 %v545
    %v547 = vand.u32 %v274, 4294901760
    %v548 = vsub.f32 %v274, %v547
    %v549 = vand.u32 %v548, 4294901760
    %v550 = vsub.f32 %v548, %v549
    %v551 = vand.u32 %v550, 4294901760
    %552 = vmatpush1.msra.mxu0 %v551
    %v553 = vand.u32 %v277, 4294901760
    %v554 = vsub.f32 %v277, %v553
    %v555 = vand.u32 %v554, 4294901760
    %v556 = vsub.f32 %v554, %v555
    %v557 = vand.u32 %v556, 4294901760
    %558 = vmatprep.subr.mxu0 %v557
    %v559 = vand.u32 %v276, 4294901760
    %v560 = vsub.f32 %v276, %v559
    %v561 = vand.u32 %v560, 4294901760
    %v562 = vsub.f32 %v560, %v561
    %v563 = vand.u32 %v562, 4294901760
    %564 = vmatpush1.msra.mxu0 %v563
    %v565 = vand.u32 %v279, 4294901760
    %v566 = vsub.f32 %v279, %v565
    %v567 = vand.u32 %v566, 4294901760
    %v568 = vsub.f32 %v566, %v567
    %v569 = vand.u32 %v568, 4294901760
    %570 = vmatprep.subr.mxu0 %v569
    %v571 = vand.u32 %v278, 4294901760
    %v572 = vsub.f32 %v278, %v571
    %v573 = vand.u32 %v572, 4294901760
    %v574 = vsub.f32 %v572, %v573
    %v575 = vand.u32 %v574, 4294901760
    %576 = vmatpush1.msra.mxu0 %v575
    %v577 = vand.u32 %v281, 4294901760
    %v578 = vsub.f32 %v281, %v577
    %v579 = vand.u32 %v578, 4294901760
    %v580 = vsub.f32 %v578, %v579
    %v581 = vand.u32 %v580, 4294901760
    %582 = vmatprep.subr.mxu0 %v581
    %v583 = vand.u32 %v280, 4294901760
    %v584 = vsub.f32 %v280, %v583
    %v585 = vand.u32 %v584, 4294901760
    %v586 = vsub.f32 %v584, %v585
    %v587 = vand.u32 %v586, 4294901760
    %588 = vmatpush1.msra.mxu0 %v587
    %v589 = vand.u32 %v283, 4294901760
    %v590 = vsub.f32 %v283, %v589
    %v591 = vand.u32 %v590, 4294901760
    %v592 = vsub.f32 %v590, %v591
    %v593 = vand.u32 %v592, 4294901760
    %594 = vmatprep.subr.mxu0 %v593
    %v595 = vand.u32 %v282, 4294901760
    %v596 = vsub.f32 %v282, %v595
    %v597 = vand.u32 %v596, 4294901760
    %v598 = vsub.f32 %v596, %v597
    %v599 = vand.u32 %v598, 4294901760
    %600 = vmatpush1.msra.mxu0 %v599
    %v601 = vand.u32 %v285, 4294901760
    %v602 = vsub.f32 %v285, %v601
    %v603 = vand.u32 %v602, 4294901760
    %v604 = vsub.f32 %v602, %v603
    %v605 = vand.u32 %v604, 4294901760
    %606 = vmatprep.subr.mxu0 %v605
    %v607 = vand.u32 %v284, 4294901760
    %v608 = vsub.f32 %v284, %v607
    %v609 = vand.u32 %v608, 4294901760
    %v610 = vsub.f32 %v608, %v609
    %v611 = vand.u32 %v610, 4294901760
    %612 = vmatpush1.msra.mxu0 %v611
    %v613 = vand.u32 %v287, 4294901760
    %v614 = vsub.f32 %v287, %v613
    %v615 = vand.u32 %v614, 4294901760
    %v616 = vsub.f32 %v614, %v615
    %v617 = vand.u32 %v616, 4294901760
    %618 = vmatprep.subr.mxu0 %v617
    %v619 = vand.u32 %v286, 4294901760
    %v620 = vsub.f32 %v286, %v619
    %v621 = vand.u32 %v620, 4294901760
    %v622 = vsub.f32 %v620, %v621
    %v623 = vand.u32 %v622, 4294901760
    %624 = vmatpush1.msra.mxu0 %v623
    %v625 = vand.u32 %v289, 4294901760
    %v626 = vsub.f32 %v289, %v625
    %v627 = vand.u32 %v626, 4294901760
    %v628 = vsub.f32 %v626, %v627
    %v629 = vand.u32 %v628, 4294901760
    %630 = vmatprep.subr.mxu0 %v629
    %v631 = vand.u32 %v288, 4294901760
    %v632 = vsub.f32 %v288, %v631
    %v633 = vand.u32 %v632, 4294901760
    %v634 = vsub.f32 %v632, %v633
    %v635 = vand.u32 %v634, 4294901760
    %636 = vmatpush1.msra.mxu0 %v635
    %v637 = vand.u32 %v291, 4294901760
    %v638 = vsub.f32 %v291, %v637
    %v639 = vand.u32 %v638, 4294901760
    %v640 = vsub.f32 %v638, %v639
    %v641 = vand.u32 %v640, 4294901760
    %642 = vmatprep.subr.mxu0 %v641
    %v643 = vand.u32 %v290, 4294901760
    %v644 = vsub.f32 %v290, %v643
    %v645 = vand.u32 %v644, 4294901760
    %v646 = vsub.f32 %v644, %v645
    %v647 = vand.u32 %v646, 4294901760
    %648 = vmatpush1.msra.mxu0 %v647
    %v649 = vand.u32 %v293, 4294901760
    %v650 = vsub.f32 %v293, %v649
    %v651 = vand.u32 %v650, 4294901760
    %v652 = vsub.f32 %v650, %v651
    %v653 = vand.u32 %v652, 4294901760
    %654 = vmatprep.subr.mxu0 %v653
    %v655 = vand.u32 %v292, 4294901760
    %v656 = vsub.f32 %v292, %v655
    %v657 = vand.u32 %v656, 4294901760
    %v658 = vsub.f32 %v656, %v657
    %v659 = vand.u32 %v658, 4294901760
    %660 = vmatpush1.msra.mxu0 %v659
    %v661 = vand.u32 %v295, 4294901760
    %v662 = vsub.f32 %v295, %v661
    %v663 = vand.u32 %v662, 4294901760
    %v664 = vsub.f32 %v662, %v663
    %v665 = vand.u32 %v664, 4294901760
    %666 = vmatprep.subr.mxu0 %v665
    %v667 = vand.u32 %v294, 4294901760
    %v668 = vsub.f32 %v294, %v667
    %v669 = vand.u32 %v668, 4294901760
    %v670 = vsub.f32 %v668, %v669
    %v671 = vand.u32 %v670, 4294901760
    %672 = vmatpush1.msra.mxu0 %v671
    %v673 = vand.u32 %v297, 4294901760
    %v674 = vsub.f32 %v297, %v673
    %v675 = vand.u32 %v674, 4294901760
    %v676 = vsub.f32 %v674, %v675
    %v677 = vand.u32 %v676, 4294901760
    %678 = vmatprep.subr.mxu0 %v677
    %v679 = vand.u32 %v296, 4294901760
    %v680 = vsub.f32 %v296, %v679
    %v681 = vand.u32 %v680, 4294901760
    %v682 = vsub.f32 %v680, %v681
    %v683 = vand.u32 %v682, 4294901760
    %684 = vmatpush1.msra.mxu0 %v683
    %v685 = vand.u32 %v299, 4294901760
    %v686 = vsub.f32 %v299, %v685
    %v687 = vand.u32 %v686, 4294901760
    %v688 = vsub.f32 %v686, %v687
    %v689 = vand.u32 %v688, 4294901760
    %690 = vmatprep.subr.mxu0 %v689
    %v691 = vand.u32 %v298, 4294901760
    %v692 = vsub.f32 %v298, %v691
    %v693 = vand.u32 %v692, 4294901760
    %v694 = vsub.f32 %v692, %v693
    %v695 = vand.u32 %v694, 4294901760
    %696 = vmatpush1.msra.mxu0 %v695
    %v697 = vand.u32 %v301, 4294901760
    %v698 = vsub.f32 %v301, %v697
    %v699 = vand.u32 %v698, 4294901760
    %v700 = vsub.f32 %v698, %v699
    %v701 = vand.u32 %v700, 4294901760
    %702 = vmatprep.subr.mxu0 %v701
    %v703 = vand.u32 %v300, 4294901760
    %v704 = vsub.f32 %v300, %v703
    %v705 = vand.u32 %v704, 4294901760
    %v706 = vsub.f32 %v704, %v705
    %v707 = vand.u32 %v706, 4294901760
    %708 = vmatpush1.msra.mxu0 %v707
    %v709 = vand.u32 %v303, 4294901760
    %v710 = vsub.f32 %v303, %v709
    %v711 = vand.u32 %v710, 4294901760
    %v712 = vsub.f32 %v710, %v711
    %v713 = vand.u32 %v712, 4294901760
    %714 = vmatprep.subr.mxu0 %v713
    %v715 = vand.u32 %v302, 4294901760
    %v716 = vsub.f32 %v302, %v715
    %v717 = vand.u32 %v716, 4294901760
    %v718 = vsub.f32 %v716, %v717
    %v719 = vand.u32 %v718, 4294901760
    %720 = vmatpush1.msra.mxu0 %v719
    %v721 = vand.u32 %v305, 4294901760
    %v722 = vsub.f32 %v305, %v721
    %v723 = vand.u32 %v722, 4294901760
    %v724 = vsub.f32 %v722, %v723
    %v725 = vand.u32 %v724, 4294901760
    %726 = vmatprep.subr.mxu0 %v725
    %v727 = vand.u32 %v304, 4294901760
    %v728 = vsub.f32 %v304, %v727
    %v729 = vand.u32 %v728, 4294901760
    %v730 = vsub.f32 %v728, %v729
    %v731 = vand.u32 %v730, 4294901760
    %732 = vmatpush1.msra.mxu0 %v731
    %v733 = vand.u32 %v307, 4294901760
    %v734 = vsub.f32 %v307, %v733
    %v735 = vand.u32 %v734, 4294901760
    %v736 = vsub.f32 %v734, %v735
    %v737 = vand.u32 %v736, 4294901760
    %738 = vmatprep.subr.mxu0 %v737
    %v739 = vand.u32 %v306, 4294901760
    %v740 = vsub.f32 %v306, %v739
    %v741 = vand.u32 %v740, 4294901760
    %v742 = vsub.f32 %v740, %v741
    %v743 = vand.u32 %v742, 4294901760
    %744 = vmatpush1.msra.mxu0 %v743
    %v745 = vand.u32 %v309, 4294901760
    %v746 = vsub.f32 %v309, %v745
    %v747 = vand.u32 %v746, 4294901760
    %v748 = vsub.f32 %v746, %v747
    %v749 = vand.u32 %v748, 4294901760
    %750 = vmatprep.subr.mxu0 %v749
    %v751 = vand.u32 %v308, 4294901760
    %v752 = vsub.f32 %v308, %v751
    %v753 = vand.u32 %v752, 4294901760
    %v754 = vsub.f32 %v752, %v753
    %v755 = vand.u32 %v754, 4294901760
    %756 = vmatpush1.msra.mxu0 %v755
    %v757 = vand.u32 %v311, 4294901760
    %v758 = vsub.f32 %v311, %v757
    %v759 = vand.u32 %v758, 4294901760
    %v760 = vsub.f32 %v758, %v759
    %v761 = vand.u32 %v760, 4294901760
    %762 = vmatprep.subr.mxu0 %v761
    %v763 = vand.u32 %v310, 4294901760
    %v764 = vsub.f32 %v310, %v763
    %v765 = vand.u32 %v764, 4294901760
    %v766 = vsub.f32 %v764, %v765
    %v767 = vand.u32 %v766, 4294901760
    %768 = vmatpush1.msra.mxu0 %v767
    %v769 = vand.u32 %v313, 4294901760
    %v770 = vsub.f32 %v313, %v769
    %v771 = vand.u32 %v770, 4294901760
    %v772 = vsub.f32 %v770, %v771
    %v773 = vand.u32 %v772, 4294901760
    %774 = vmatprep.subr.mxu0 %v773
    %v775 = vand.u32 %v312, 4294901760
    %v776 = vsub.f32 %v312, %v775
    %v777 = vand.u32 %v776, 4294901760
    %v778 = vsub.f32 %v776, %v777
    %v779 = vand.u32 %v778, 4294901760
    %780 = vmatpush1.msra.mxu0 %v779
    %v781 = vand.u32 %v315, 4294901760
    %v782 = vsub.f32 %v315, %v781
    %v783 = vand.u32 %v782, 4294901760
    %v784 = vsub.f32 %v782, %v783
    %v785 = vand.u32 %v784, 4294901760
    %786 = vmatprep.subr.mxu0 %v785
    %v787 = vand.u32 %v314, 4294901760
    %v788 = vsub.f32 %v314, %v787
    %v789 = vand.u32 %v788, 4294901760
    %v790 = vsub.f32 %v788, %v789
    %v791 = vand.u32 %v790, 4294901760
    %792 = vmatpush1.msra.mxu0 %v791
    %v793 = vand.u32 %v317, 4294901760
    %v794 = vsub.f32 %v317, %v793
    %v795 = vand.u32 %v794, 4294901760
    %v796 = vsub.f32 %v794, %v795
    %v797 = vand.u32 %v796, 4294901760
    %798 = vmatprep.subr.mxu0 %v797
    %v799 = vand.u32 %v316, 4294901760
    %v800 = vsub.f32 %v316, %v799
    %v801 = vand.u32 %v800, 4294901760
    %v802 = vsub.f32 %v800, %v801
    %v803 = vand.u32 %v802, 4294901760
    %804 = vmatpush1.msra.mxu0 %v803
    %v805 = vand.u32 %v319, 4294901760
    %v806 = vsub.f32 %v319, %v805
    %v807 = vand.u32 %v806, 4294901760
    %v808 = vsub.f32 %v806, %v807
    %v809 = vand.u32 %v808, 4294901760
    %810 = vmatprep.subr.mxu0 %v809
    %v811 = vand.u32 %v318, 4294901760
    %v812 = vsub.f32 %v318, %v811
    %v813 = vand.u32 %v812, 4294901760
    %v814 = vsub.f32 %v812, %v813
    %v815 = vand.u32 %v814, 4294901760
    %816 = vmatpush1.msra.mxu0 %v815
    %v817 = vand.u32 %v321, 4294901760
    %v818 = vsub.f32 %v321, %v817
    %v819 = vand.u32 %v818, 4294901760
    %v820 = vsub.f32 %v818, %v819
    %v821 = vand.u32 %v820, 4294901760
    %822 = vmatprep.subr.mxu0 %v821
    %v823 = vand.u32 %v320, 4294901760
    %v824 = vsub.f32 %v320, %v823
    %v825 = vand.u32 %v824, 4294901760
    %v826 = vsub.f32 %v824, %v825
    %v827 = vand.u32 %v826, 4294901760
    %828 = vmatpush1.msra.mxu0 %v827
    %v829 = vand.u32 %v323, 4294901760
    %v830 = vsub.f32 %v323, %v829
    %v831 = vand.u32 %v830, 4294901760
    %v832 = vsub.f32 %v830, %v831
    %v833 = vand.u32 %v832, 4294901760
    %834 = vmatprep.subr.mxu0 %v833
    %v835 = vand.u32 %v322, 4294901760
    %v836 = vsub.f32 %v322, %v835
    %v837 = vand.u32 %v836, 4294901760
    %v838 = vsub.f32 %v836, %v837
    %v839 = vand.u32 %v838, 4294901760
    %840 = vmatpush1.msra.mxu0 %v839
    %v841 = vand.u32 %v325, 4294901760
    %v842 = vsub.f32 %v325, %v841
    %v843 = vand.u32 %v842, 4294901760
    %v844 = vsub.f32 %v842, %v843
    %v845 = vand.u32 %v844, 4294901760
    %846 = vmatprep.subr.mxu0 %v845
    %v847 = vand.u32 %v324, 4294901760
    %v848 = vsub.f32 %v324, %v847
    %v849 = vand.u32 %v848, 4294901760
    %v850 = vsub.f32 %v848, %v849
    %v851 = vand.u32 %v850, 4294901760
    %852 = vmatpush1.msra.mxu0 %v851
    %v853 = vand.u32 %v327, 4294901760
    %v854 = vsub.f32 %v327, %v853
    %v855 = vand.u32 %v854, 4294901760
    %v856 = vsub.f32 %v854, %v855
    %v857 = vand.u32 %v856, 4294901760
    %858 = vmatprep.subr.mxu0 %v857
    %v859 = vand.u32 %v326, 4294901760
    %v860 = vsub.f32 %v326, %v859
    %v861 = vand.u32 %v860, 4294901760
    %v862 = vsub.f32 %v860, %v861
    %v863 = vand.u32 %v862, 4294901760
    %864 = vmatpush1.msra.mxu0 %v863
    %v865 = vand.u32 %v329, 4294901760
    %v866 = vsub.f32 %v329, %v865
    %v867 = vand.u32 %v866, 4294901760
    %v868 = vsub.f32 %v866, %v867
    %v869 = vand.u32 %v868, 4294901760
    %870 = vmatprep.subr.mxu0 %v869
    %v871 = vand.u32 %v328, 4294901760
    %v872 = vsub.f32 %v328, %v871
    %v873 = vand.u32 %v872, 4294901760
    %v874 = vsub.f32 %v872, %v873
    %v875 = vand.u32 %v874, 4294901760
    %876 = vmatpush1.msra.mxu0 %v875
    %v877 = vand.u32 %v331, 4294901760
    %v878 = vsub.f32 %v331, %v877
    %v879 = vand.u32 %v878, 4294901760
    %v880 = vsub.f32 %v878, %v879
    %v881 = vand.u32 %v880, 4294901760
    %882 = vmatprep.subr.mxu0 %v881
    %v883 = vand.u32 %v330, 4294901760
    %v884 = vsub.f32 %v330, %v883
    %v885 = vand.u32 %v884, 4294901760
    %v886 = vsub.f32 %v884, %v885
    %v887 = vand.u32 %v886, 4294901760
    %888 = vmatpush1.msra.mxu0 %v887
    %v889 = vand.u32 %v333, 4294901760
    %v890 = vsub.f32 %v333, %v889
    %v891 = vand.u32 %v890, 4294901760
    %v892 = vsub.f32 %v890, %v891
    %v893 = vand.u32 %v892, 4294901760
    %894 = vmatprep.subr.mxu0 %v893
    %v895 = vand.u32 %v332, 4294901760
    %v896 = vsub.f32 %v332, %v895
    %v897 = vand.u32 %v896, 4294901760
    %v898 = vsub.f32 %v896, %v897
    %v899 = vand.u32 %v898, 4294901760
    %900 = vmatpush1.msra.mxu0 %v899
    %v901 = vand.u32 %v335, 4294901760
    %v902 = vsub.f32 %v335, %v901
    %v903 = vand.u32 %v902, 4294901760
    %v904 = vsub.f32 %v902, %v903
    %v905 = vand.u32 %v904, 4294901760
    %906 = vmatprep.subr.mxu0 %v905
    %v907 = vand.u32 %v334, 4294901760
    %v908 = vsub.f32 %v334, %v907
    %v909 = vand.u32 %v908, 4294901760
    %v910 = vsub.f32 %v908, %v909
    %v911 = vand.u32 %v910, 4294901760
    %912 = vmatpush1.msra.mxu0 %v911
    %v913 = vand.u32 %v204, 4294901760
    %914 = vmatprep.mubr.f32.mxu0 %v913
    %v915 = vand.u32 %v203, 4294901760
    %916 = vmatmul.mubr.f32.gmra.mrb[0].mxu0 %v915
    %v917 = vpop.f32.mrb[0].mxu0
    %v918 = vadd.f32 %v477, %v917
    %v919 = vpop.f32.mrb[0].mxu0
    %v920 = vadd.f32 %v479, %v919
    %v921 = vand.u32 %v206, 4294901760
    %922 = vmatprep.mubr.f32.mxu0 %v921
    %v923 = vand.u32 %v205, 4294901760
    %924 = vmatmul.mubr.f32.gmra.mrb[0].mxu0 %v923
    %v925 = vpop.f32.mrb[0].mxu0
    %v926 = vadd.f32 %v493, %v925
    %v927 = vpop.f32.mrb[0].mxu0
    %v928 = vadd.f32 %v495, %v927
    %v929 = vand.u32 %v208, 4294901760
    %930 = vmatprep.mubr.f32.mxu0 %v929
    %v931 = vand.u32 %v207, 4294901760
    %932 = vmatmul.mubr.f32.gmra.mrb[0].mxu0 %v931
    %v933 = vpop.f32.mrb[0].mxu0
    %v934 = vadd.f32 %v509, %v933
    %v935 = vpop.f32.mrb[0].mxu0
    %v936 = vadd.f32 %v511, %v935
    %v937 = vand.u32 %v210, 4294901760
    %938 = vmatprep.mubr.f32.mxu0 %v937
    %v939 = vand.u32 %v209, 4294901760
    %940 = vmatmul.mubr.f32.gmra.mrb[0].mxu0 %v939
    %v941 = vpop.f32.mrb[0].mxu0
    %v942 = vadd.f32 %v525, %v941
    %v943 = vpop.f32.mrb[0].mxu0
    %v944 = vadd.f32 %v527, %v943
    %945 = vdwg.mxu0
    %v946 = vand.u32 %v273, 4294901760
    %v947 = vsub.f32 %v273, %v946
    %948 = vmatprep.subr.mxu0 %v947
    %v949 = vand.u32 %v272, 4294901760
    %v950 = vsub.f32 %v272, %v949
    %951 = vmatpush1.msra.mxu0 %v950
    %v952 = vand.u32 %v275, 4294901760
    %v953 = vsub.f32 %v275, %v952
    %954 = vmatprep.subr.mxu0 %v953
    %v955 = vand.u32 %v274, 4294901760
    %v956 = vsub.f32 %v274, %v955
    %957 = vmatpush1.msra.mxu0 %v956
    %v958 = vand.u32 %v277, 4294901760
    %v959 = vsub.f32 %v277, %v958
    %960 = vmatprep.subr.mxu0 %v959
    %v961 = vand.u32 %v276, 4294901760
    %v962 = vsub.f32 %v276, %v961
    %963 = vmatpush1.msra.mxu0 %v962
    %v964 = vand.u32 %v279, 4294901760
    %v965 = vsub.f32 %v279, %v964
    %966 = vmatprep.subr.mxu0 %v965
    %v967 = vand.u32 %v278, 4294901760
    %v968 = vsub.f32 %v278, %v967
    %969 = vmatpush1.msra.mxu0 %v968
    %v970 = vand.u32 %v281, 4294901760
    %v971 = vsub.f32 %v281, %v970
    %972 = vmatprep.subr.mxu0 %v971
    %v973 = vand.u32 %v280, 4294901760
    %v974 = vsub.f32 %v280, %v973
    %975 = vmatpush1.msra.mxu0 %v974
    %v976 = vand.u32 %v283, 4294901760
    %v977 = vsub.f32 %v283, %v976
    %978 = vmatprep.subr.mxu0 %v977
    %v979 = vand.u32 %v282, 4294901760
    %v980 = vsub.f32 %v282, %v979
    %981 = vmatpush1.msra.mxu0 %v980
    %v982 = vand.u32 %v285, 4294901760
    %v983 = vsub.f32 %v285, %v982
    %984 = vmatprep.subr.mxu0 %v983
    %v985 = vand.u32 %v284, 4294901760
    %v986 = vsub.f32 %v284, %v985
    %987 = vmatpush1.msra.mxu0 %v986
    %v988 = vand.u32 %v287, 4294901760
    %v989 = vsub.f32 %v287, %v988
    %990 = vmatprep.subr.mxu0 %v989
    %v991 = vand.u32 %v286, 4294901760
    %v992 = vsub.f32 %v286, %v991
    %993 = vmatpush1.msra.mxu0 %v992
    %v994 = vand.u32 %v289, 4294901760
    %v995 = vsub.f32 %v289, %v994
    %996 = vmatprep.subr.mxu0 %v995
    %v997 = vand.u32 %v288, 4294901760
    %v998 = vsub.f32 %v288, %v997
    %999 = vmatpush1.msra.mxu0 %v998
    %v1000 = vand.u32 %v291, 4294901760
    %v1001 = vsub.f32 %v291, %v1000
    %1002 = vmatprep.subr.mxu0 %v1001
    %v1003 = vand.u32 %v290, 4294901760
    %v1004 = vsub.f32 %v290, %v1003
    %1005 = vmatpush1.msra.mxu0 %v1004
    %v1006 = vand.u32 %v293, 4294901760
    %v1007 = vsub.f32 %v293, %v1006
    %1008 = vmatprep.subr.mxu0 %v1007
    %v1009 = vand.u32 %v292, 4294901760
    %v1010 = vsub.f32 %v292, %v1009
    %1011 = vmatpush1.msra.mxu0 %v1010
    %v1012 = vand.u32 %v295, 4294901760
    %v1013 = vsub.f32 %v295, %v1012
    %1014 = vmatprep.subr.mxu0 %v1013
    %v1015 = vand.u32 %v294, 4294901760
    %v1016 = vsub.f32 %v294, %v1015
    %1017 = vmatpush1.msra.mxu0 %v1016
    %v1018 = vand.u32 %v297, 4294901760
    %v1019 = vsub.f32 %v297, %v1018
    %1020 = vmatprep.subr.mxu0 %v1019
    %v1021 = vand.u32 %v296, 4294901760
    %v1022 = vsub.f32 %v296, %v1021
    %1023 = vmatpush1.msra.mxu0 %v1022
    %v1024 = vand.u32 %v299, 4294901760
    %v1025 = vsub.f32 %v299, %v1024
    %1026 = vmatprep.subr.mxu0 %v1025
    %v1027 = vand.u32 %v298, 4294901760
    %v1028 = vsub.f32 %v298, %v1027
    %1029 = vmatpush1.msra.mxu0 %v1028
    %v1030 = vand.u32 %v301, 4294901760
    %v1031 = vsub.f32 %v301, %v1030
    %1032 = vmatprep.subr.mxu0 %v1031
    %v1033 = vand.u32 %v300, 4294901760
    %v1034 = vsub.f32 %v300, %v1033
    %1035 = vmatpush1.msra.mxu0 %v1034
    %v1036 = vand.u32 %v303, 4294901760
    %v1037 = vsub.f32 %v303, %v1036
    %1038 = vmatprep.subr.mxu0 %v1037
    %v1039 = vand.u32 %v302, 4294901760
    %v1040 = vsub.f32 %v302, %v1039
    %1041 = vmatpush1.msra.mxu0 %v1040
    %v1042 = vand.u32 %v305, 4294901760
    %v1043 = vsub.f32 %v305, %v1042
    %1044 = vmatprep.subr.mxu0 %v1043
    %v1045 = vand.u32 %v304, 4294901760
    %v1046 = vsub.f32 %v304, %v1045
    %1047 = vmatpush1.msra.mxu0 %v1046
    %v1048 = vand.u32 %v307, 4294901760
    %v1049 = vsub.f32 %v307, %v1048
    %1050 = vmatprep.subr.mxu0 %v1049
    %v1051 = vand.u32 %v306, 4294901760
    %v1052 = vsub.f32 %v306, %v1051
    %1053 = vmatpush1.msra.mxu0 %v1052
    %v1054 = vand.u32 %v309, 4294901760
    %v1055 = vsub.f32 %v309, %v1054
    %1056 = vmatprep.subr.mxu0 %v1055
    %v1057 = vand.u32 %v308, 4294901760
    %v1058 = vsub.f32 %v308, %v1057
    %1059 = vmatpush1.msra.mxu0 %v1058
    %v1060 = vand.u32 %v311, 4294901760
    %v1061 = vsub.f32 %v311, %v1060
    %1062 = vmatprep.subr.mxu0 %v1061
    %v1063 = vand.u32 %v310, 4294901760
    %v1064 = vsub.f32 %v310, %v1063
    %1065 = vmatpush1.msra.mxu0 %v1064
    %v1066 = vand.u32 %v313, 4294901760
    %v1067 = vsub.f32 %v313, %v1066
    %1068 = vmatprep.subr.mxu0 %v1067
    %v1069 = vand.u32 %v312, 4294901760
    %v1070 = vsub.f32 %v312, %v1069
    %1071 = vmatpush1.msra.mxu0 %v1070
    %v1072 = vand.u32 %v315, 4294901760
    %v1073 = vsub.f32 %v315, %v1072
    %1074 = vmatprep.subr.mxu0 %v1073
    %v1075 = vand.u32 %v314, 4294901760
    %v1076 = vsub.f32 %v314, %v1075
    %1077 = vmatpush1.msra.mxu0 %v1076
    %v1078 = vand.u32 %v317, 4294901760
    %v1079 = vsub.f32 %v317, %v1078
    %1080 = vmatprep.subr.mxu0 %v1079
    %v1081 = vand.u32 %v316, 4294901760
    %v1082 = vsub.f32 %v316, %v1081
    %1083 = vmatpush1.msra.mxu0 %v1082
    %v1084 = vand.u32 %v319, 4294901760
    %v1085 = vsub.f32 %v319, %v1084
    %1086 = vmatprep.subr.mxu0 %v1085
    %v1087 = vand.u32 %v318, 4294901760
    %v1088 = vsub.f32 %v318, %v1087
    %1089 = vmatpush1.msra.mxu0 %v1088
    %v1090 = vand.u32 %v321, 4294901760
    %v1091 = vsub.f32 %v321, %v1090
    %1092 = vmatprep.subr.mxu0 %v1091
    %v1093 = vand.u32 %v320, 4294901760
    %v1094 = vsub.f32 %v320, %v1093
    %1095 = vmatpush1.msra.mxu0 %v1094
    %v1096 = vand.u32 %v323, 4294901760
    %v1097 = vsub.f32 %v323, %v1096
    %1098 = vmatprep.subr.mxu0 %v1097
    %v1099 = vand.u32 %v322, 4294901760
    %v1100 = vsub.f32 %v322, %v1099
    %1101 = vmatpush1.msra.mxu0 %v1100
    %v1102 = vand.u32 %v325, 4294901760
    %v1103 = vsub.f32 %v325, %v1102
    %1104 = vmatprep.subr.mxu0 %v1103
    %v1105 = vand.u32 %v324, 4294901760
    %v1106 = vsub.f32 %v324, %v1105
    %1107 = vmatpush1.msra.mxu0 %v1106
    %v1108 = vand.u32 %v327, 4294901760
    %v1109 = vsub.f32 %v327, %v1108
    %1110 = vmatprep.subr.mxu0 %v1109
    %v1111 = vand.u32 %v326, 4294901760
    %v1112 = vsub.f32 %v326, %v1111
    %1113 = vmatpush1.msra.mxu0 %v1112
    %v1114 = vand.u32 %v329, 4294901760
    %v1115 = vsub.f32 %v329, %v1114
    %1116 = vmatprep.subr.mxu0 %v1115
    %v1117 = vand.u32 %v328, 4294901760
    %v1118 = vsub.f32 %v328, %v1117
    %1119 = vmatpush1.msra.mxu0 %v1118
    %v1120 = vand.u32 %v331, 4294901760
    %v1121 = vsub.f32 %v331, %v1120
    %1122 = vmatprep.subr.mxu0 %v1121
    %v1123 = vand.u32 %v330, 4294901760
    %v1124 = vsub.f32 %v330, %v1123
    %1125 = vmatpush1.msra.mxu0 %v1124
    %v1126 = vand.u32 %v333, 4294901760
    %v1127 = vsub.f32 %v333, %v1126
    %1128 = vmatprep.subr.mxu0 %v1127
    %v1129 = vand.u32 %v332, 4294901760
    %v1130 = vsub.f32 %v332, %v1129
    %1131 = vmatpush1.msra.mxu0 %v1130
    %v1132 = vand.u32 %v335, 4294901760
    %v1133 = vsub.f32 %v335, %v1132
    %1134 = vmatprep.subr.mxu0 %v1133
    %v1135 = vand.u32 %v334, 4294901760
    %v1136 = vsub.f32 %v334, %v1135
    %1137 = vmatpush1.msra.mxu0 %v1136
    %v1138 = vand.u32 %v204, 4294901760
    %v1139 = vsub.f32 %v204, %v1138
    %1140 = vmatprep.mubr.f32.mxu0 %v1139
    %v1141 = vand.u32 %v203, 4294901760
    %v1142 = vsub.f32 %v203, %v1141
    %1143 = vmatmul.mubr.f32.gmra.mrb[0].mxu0 %v1142
    %v1144 = vpop.f32.mrb[0].mxu0
    %v1145 = vadd.f32 %v918, %v1144
    %v1146 = vpop.f32.mrb[0].mxu0
    %v1147 = vadd.f32 %v920, %v1146
    %v1148 = vand.u32 %v206, 4294901760
    %v1149 = vsub.f32 %v206, %v1148
    %1150 = vmatprep.mubr.f32.mxu0 %v1149
    %v1151 = vand.u32 %v205, 4294901760
    %v1152 = vsub.f32 %v205, %v1151
    %1153 = vmatmul.mubr.f32.gmra.mrb[0].mxu0 %v1152
    %v1154 = vpop.f32.mrb[0].mxu0
    %v1155 = vadd.f32 %v926, %v1154
    %v1156 = vpop.f32.mrb[0].mxu0
    %v1157 = vadd.f32 %v928, %v1156
    %v1158 = vand.u32 %v208, 4294901760
    %v1159 = vsub.f32 %v208, %v1158
    %1160 = vmatprep.mubr.f32.mxu0 %v1159
    %v1161 = vand.u32 %v207, 4294901760
    %v1162 = vsub.f32 %v207, %v1161
    %1163 = vmatmul.mubr.f32.gmra.mrb[0].mxu0 %v1162
    %v1164 = vpop.f32.mrb[0].mxu0
    %v1165 = vadd.f32 %v934, %v1164
    %v1166 = vpop.f32.mrb[0].mxu0
    %v1167 = vadd.f32 %v936, %v1166
    %v1168 = vand.u32 %v210, 4294901760
    %v1169 = vsub.f32 %v210, %v1168
    %1170 = vmatprep.mubr.f32.mxu0 %v1169
    %v1171 = vand.u32 %v209, 4294901760
    %v1172 = vsub.f32 %v209, %v1171
    %1173 = vmatmul.mubr.f32.gmra.mrb[0].mxu0 %v1172
    %v1174 = vpop.f32.mrb[0].mxu0
    %v1175 = vadd.f32 %v942, %v1174
    %v1176 = vpop.f32.mrb[0].mxu0
    %v1177 = vadd.f32 %v944, %v1176
    %1178 = vdwg.mxu0
    %v1179 = vand.u32 %v273, 4294901760
    %1180 = vmatprep.subr.mxu0 %v1179
    %v1181 = vand.u32 %v272, 4294901760
    %1182 = vmatpush1.msra.mxu0 %v1181
    %v1183 = vand.u32 %v275, 4294901760
    %1184 = vmatprep.subr.mxu0 %v1183
    %v1185 = vand.u32 %v274, 4294901760
    %1186 = vmatpush1.msra.mxu0 %v1185
    %v1187 = vand.u32 %v277, 4294901760
    %1188 = vmatprep.subr.mxu0 %v1187
    %v1189 = vand.u32 %v276, 4294901760
    %1190 = vmatpush1.msra.mxu0 %v1189
    %v1191 = vand.u32 %v279, 4294901760
    %1192 = vmatprep.subr.mxu0 %v1191
    %v1193 = vand.u32 %v278, 4294901760
    %1194 = vmatpush1.msra.mxu0 %v1193
    %v1195 = vand.u32 %v281, 4294901760
    %1196 = vmatprep.subr.mxu0 %v1195
    %v1197 = vand.u32 %v280, 4294901760
    %1198 = vmatpush1.msra.mxu0 %v1197
    %v1199 = vand.u32 %v283, 4294901760
    %1200 = vmatprep.subr.mxu0 %v1199
    %v1201 = vand.u32 %v282, 4294901760
    %1202 = vmatpush1.msra.mxu0 %v1201
    %v1203 = vand.u32 %v285, 4294901760
    %1204 = vmatprep.subr.mxu0 %v1203
    %v1205 = vand.u32 %v284, 4294901760
    %1206 = vmatpush1.msra.mxu0 %v1205
    %v1207 = vand.u32 %v287, 4294901760
    %1208 = vmatprep.subr.mxu0 %v1207
    %v1209 = vand.u32 %v286, 4294901760
    %1210 = vmatpush1.msra.mxu0 %v1209
    %v1211 = vand.u32 %v289, 4294901760
    %1212 = vmatprep.subr.mxu0 %v1211
    %v1213 = vand.u32 %v288, 4294901760
    %1214 = vmatpush1.msra.mxu0 %v1213
    %v1215 = vand.u32 %v291, 4294901760
    %1216 = vmatprep.subr.mxu0 %v1215
    %v1217 = vand.u32 %v290, 4294901760
    %1218 = vmatpush1.msra.mxu0 %v1217
    %v1219 = vand.u32 %v293, 4294901760
    %1220 = vmatprep.subr.mxu0 %v1219
    %v1221 = vand.u32 %v292, 4294901760
    %1222 = vmatpush1.msra.mxu0 %v1221
    %v1223 = vand.u32 %v295, 4294901760
    %1224 = vmatprep.subr.mxu0 %v1223
    %v1225 = vand.u32 %v294, 4294901760
    %1226 = vmatpush1.msra.mxu0 %v1225
    %v1227 = vand.u32 %v297, 4294901760
    %1228 = vmatprep.subr.mxu0 %v1227
    %v1229 = vand.u32 %v296, 4294901760
    %1230 = vmatpush1.msra.mxu0 %v1229
    %v1231 = vand.u32 %v299, 4294901760
    %1232 = vmatprep.subr.mxu0 %v1231
    %v1233 = vand.u32 %v298, 4294901760
    %1234 = vmatpush1.msra.mxu0 %v1233
    %v1235 = vand.u32 %v301, 4294901760
    %1236 = vmatprep.subr.mxu0 %v1235
    %v1237 = vand.u32 %v300, 4294901760
    %1238 = vmatpush1.msra.mxu0 %v1237
    %v1239 = vand.u32 %v303, 4294901760
    %1240 = vmatprep.subr.mxu0 %v1239
    %v1241 = vand.u32 %v302, 4294901760
    %1242 = vmatpush1.msra.mxu0 %v1241
    %v1243 = vand.u32 %v305, 4294901760
    %1244 = vmatprep.subr.mxu0 %v1243
    %v1245 = vand.u32 %v304, 4294901760
    %1246 = vmatpush1.msra.mxu0 %v1245
    %v1247 = vand.u32 %v307, 4294901760
    %1248 = vmatprep.subr.mxu0 %v1247
    %v1249 = vand.u32 %v306, 4294901760
    %1250 = vmatpush1.msra.mxu0 %v1249
    %v1251 = vand.u32 %v309, 4294901760
    %1252 = vmatprep.subr.mxu0 %v1251
    %v1253 = vand.u32 %v308, 4294901760
    %1254 = vmatpush1.msra.mxu0 %v1253
    %v1255 = vand.u32 %v311, 4294901760
    %1256 = vmatprep.subr.mxu0 %v1255
    %v1257 = vand.u32 %v310, 4294901760
    %1258 = vmatpush1.msra.mxu0 %v1257
    %v1259 = vand.u32 %v313, 4294901760
    %1260 = vmatprep.subr.mxu0 %v1259
    %v1261 = vand.u32 %v312, 4294901760
    %1262 = vmatpush1.msra.mxu0 %v1261
    %v1263 = vand.u32 %v315, 4294901760
    %1264 = vmatprep.subr.mxu0 %v1263
    %v1265 = vand.u32 %v314, 4294901760
    %1266 = vmatpush1.msra.mxu0 %v1265
    %v1267 = vand.u32 %v317, 4294901760
    %1268 = vmatprep.subr.mxu0 %v1267
    %v1269 = vand.u32 %v316, 4294901760
    %1270 = vmatpush1.msra.mxu0 %v1269
    %v1271 = vand.u32 %v319, 4294901760
    %1272 = vmatprep.subr.mxu0 %v1271
    %v1273 = vand.u32 %v318, 4294901760
    %1274 = vmatpush1.msra.mxu0 %v1273
    %v1275 = vand.u32 %v321, 4294901760
    %1276 = vmatprep.subr.mxu0 %v1275
    %v1277 = vand.u32 %v320, 4294901760
    %1278 = vmatpush1.msra.mxu0 %v1277
    %v1279 = vand.u32 %v323, 4294901760
    %1280 = vmatprep.subr.mxu0 %v1279
    %v1281 = vand.u32 %v322, 4294901760
    %1282 = vmatpush1.msra.mxu0 %v1281
    %v1283 = vand.u32 %v325, 4294901760
    %1284 = vmatprep.subr.mxu0 %v1283
    %v1285 = vand.u32 %v324, 4294901760
    %1286 = vmatpush1.msra.mxu0 %v1285
    %v1287 = vand.u32 %v327, 4294901760
    %1288 = vmatprep.subr.mxu0 %v1287
    %v1289 = vand.u32 %v326, 4294901760
    %1290 = vmatpush1.msra.mxu0 %v1289
    %v1291 = vand.u32 %v329, 4294901760
    %1292 = vmatprep.subr.mxu0 %v1291
    %v1293 = vand.u32 %v328, 4294901760
    %1294 = vmatpush1.msra.mxu0 %v1293
    %v1295 = vand.u32 %v331, 4294901760
    %1296 = vmatprep.subr.mxu0 %v1295
    %v1297 = vand.u32 %v330, 4294901760
    %1298 = vmatpush1.msra.mxu0 %v1297
    %v1299 = vand.u32 %v333, 4294901760
    %1300 = vmatprep.subr.mxu0 %v1299
    %v1301 = vand.u32 %v332, 4294901760
    %1302 = vmatpush1.msra.mxu0 %v1301
    %v1303 = vand.u32 %v335, 4294901760
    %1304 = vmatprep.subr.mxu0 %v1303
    %v1305 = vand.u32 %v334, 4294901760
    %1306 = vmatpush1.msra.mxu0 %v1305
    %v1307 = vand.u32 %v204, 4294901760
    %v1308 = vsub.f32 %v204, %v1307
    %v1309 = vand.u32 %v1308, 4294901760
    %1310 = vmatprep.mubr.f32.mxu0 %v1309
    %v1311 = vand.u32 %v203, 4294901760
    %v1312 = vsub.f32 %v203, %v1311
    %v1313 = vand.u32 %v1312, 4294901760
    %1314 = vmatmul.mubr.f32.gmra.mrb[0].mxu0 %v1313
    %v1315 = vpop.f32.mrb[0].mxu0
    %v1316 = vadd.f32 %v1145, %v1315
    %v1317 = vpop.f32.mrb[0].mxu0
    %v1318 = vadd.f32 %v1147, %v1317
    %v1319 = vand.u32 %v206, 4294901760
    %v1320 = vsub.f32 %v206, %v1319
    %v1321 = vand.u32 %v1320, 4294901760
    %1322 = vmatprep.mubr.f32.mxu0 %v1321
    %v1323 = vand.u32 %v205, 4294901760
    %v1324 = vsub.f32 %v205, %v1323
    %v1325 = vand.u32 %v1324, 4294901760
    %1326 = vmatmul.mubr.f32.gmra.mrb[0].mxu0 %v1325
    %v1327 = vpop.f32.mrb[0].mxu0
    %v1328 = vadd.f32 %v1155, %v1327
    %v1329 = vpop.f32.mrb[0].mxu0
    %v1330 = vadd.f32 %v1157, %v1329
    %v1331 = vand.u32 %v208, 4294901760
    %v1332 = vsub.f32 %v208, %v1331
    %v1333 = vand.u32 %v1332, 4294901760
    %1334 = vmatprep.mubr.f32.mxu0 %v1333
    %v1335 = vand.u32 %v207, 4294901760
    %v1336 = vsub.f32 %v207, %v1335
    %v1337 = vand.u32 %v1336, 4294901760
    %1338 = vmatmul.mubr.f32.gmra.mrb[0].mxu0 %v1337
    %v1339 = vpop.f32.mrb[0].mxu0
    %v1340 = vadd.f32 %v1165, %v1339
    %v1341 = vpop.f32.mrb[0].mxu0
    %v1342 = vadd.f32 %v1167, %v1341
    %v1343 = vand.u32 %v210, 4294901760
    %v1344 = vsub.f32 %v210, %v1343
    %v1345 = vand.u32 %v1344, 4294901760
    %1346 = vmatprep.mubr.f32.mxu0 %v1345
    %v1347 = vand.u32 %v209, 4294901760
    %v1348 = vsub.f32 %v209, %v1347
    %v1349 = vand.u32 %v1348, 4294901760
    %1350 = vmatmul.mubr.f32.gmra.mrb[0].mxu0 %v1349
    %v1351 = vpop.f32.mrb[0].mxu0
    %v1352 = vadd.f32 %v1175, %v1351
    %v1353 = vpop.f32.mrb[0].mxu0
    %v1354 = vadd.f32 %v1177, %v1353
    %1355 = vdwg.mxu0
    %v1356 = vand.u32 %v273, 4294901760
    %v1357 = vsub.f32 %v273, %v1356
    %v1358 = vand.u32 %v1357, 4294901760
    %1359 = vmatprep.subr.mxu0 %v1358
    %v1360 = vand.u32 %v272, 4294901760
    %v1361 = vsub.f32 %v272, %v1360
    %v1362 = vand.u32 %v1361, 4294901760
    %1363 = vmatpush1.msra.mxu0 %v1362
    %v1364 = vand.u32 %v275, 4294901760
    %v1365 = vsub.f32 %v275, %v1364
    %v1366 = vand.u32 %v1365, 4294901760
    %1367 = vmatprep.subr.mxu0 %v1366
    %v1368 = vand.u32 %v274, 4294901760
    %v1369 = vsub.f32 %v274, %v1368
    %v1370 = vand.u32 %v1369, 4294901760
    %1371 = vmatpush1.msra.mxu0 %v1370
    %v1372 = vand.u32 %v277, 4294901760
    %v1373 = vsub.f32 %v277, %v1372
    %v1374 = vand.u32 %v1373, 4294901760
    %1375 = vmatprep.subr.mxu0 %v1374
    %v1376 = vand.u32 %v276, 4294901760
    %v1377 = vsub.f32 %v276, %v1376
    %v1378 = vand.u32 %v1377, 4294901760
    %1379 = vmatpush1.msra.mxu0 %v1378
    %v1380 = vand.u32 %v279, 4294901760
    %v1381 = vsub.f32 %v279, %v1380
    %v1382 = vand.u32 %v1381, 4294901760
    %1383 = vmatprep.subr.mxu0 %v1382
    %v1384 = vand.u32 %v278, 4294901760
    %v1385 = vsub.f32 %v278, %v1384
    %v1386 = vand.u32 %v1385, 4294901760
    %1387 = vmatpush1.msra.mxu0 %v1386
    %v1388 = vand.u32 %v281, 4294901760
    %v1389 = vsub.f32 %v281, %v1388
    %v1390 = vand.u32 %v1389, 4294901760
    %1391 = vmatprep.subr.mxu0 %v1390
    %v1392 = vand.u32 %v280, 4294901760
    %v1393 = vsub.f32 %v280, %v1392
    %v1394 = vand.u32 %v1393, 4294901760
    %1395 = vmatpush1.msra.mxu0 %v1394
    %v1396 = vand.u32 %v283, 4294901760
    %v1397 = vsub.f32 %v283, %v1396
    %v1398 = vand.u32 %v1397, 4294901760
    %1399 = vmatprep.subr.mxu0 %v1398
    %v1400 = vand.u32 %v282, 4294901760
    %v1401 = vsub.f32 %v282, %v1400
    %v1402 = vand.u32 %v1401, 4294901760
    %1403 = vmatpush1.msra.mxu0 %v1402
    %v1404 = vand.u32 %v285, 4294901760
    %v1405 = vsub.f32 %v285, %v1404
    %v1406 = vand.u32 %v1405, 4294901760
    %1407 = vmatprep.subr.mxu0 %v1406
    %v1408 = vand.u32 %v284, 4294901760
    %v1409 = vsub.f32 %v284, %v1408
    %v1410 = vand.u32 %v1409, 4294901760
    %1411 = vmatpush1.msra.mxu0 %v1410
    %v1412 = vand.u32 %v287, 4294901760
    %v1413 = vsub.f32 %v287, %v1412
    %v1414 = vand.u32 %v1413, 4294901760
    %1415 = vmatprep.subr.mxu0 %v1414
    %v1416 = vand.u32 %v286, 4294901760
    %v1417 = vsub.f32 %v286, %v1416
    %v1418 = vand.u32 %v1417, 4294901760
    %1419 = vmatpush1.msra.mxu0 %v1418
    %v1420 = vand.u32 %v289, 4294901760
    %v1421 = vsub.f32 %v289, %v1420
    %v1422 = vand.u32 %v1421, 4294901760
    %1423 = vmatprep.subr.mxu0 %v1422
    %v1424 = vand.u32 %v288, 4294901760
    %v1425 = vsub.f32 %v288, %v1424
    %v1426 = vand.u32 %v1425, 4294901760
    %1427 = vmatpush1.msra.mxu0 %v1426
    %v1428 = vand.u32 %v291, 4294901760
    %v1429 = vsub.f32 %v291, %v1428
    %v1430 = vand.u32 %v1429, 4294901760
    %1431 = vmatprep.subr.mxu0 %v1430
    %v1432 = vand.u32 %v290, 4294901760
    %v1433 = vsub.f32 %v290, %v1432
    %v1434 = vand.u32 %v1433, 4294901760
    %1435 = vmatpush1.msra.mxu0 %v1434
    %v1436 = vand.u32 %v293, 4294901760
    %v1437 = vsub.f32 %v293, %v1436
    %v1438 = vand.u32 %v1437, 4294901760
    %1439 = vmatprep.subr.mxu0 %v1438
    %v1440 = vand.u32 %v292, 4294901760
    %v1441 = vsub.f32 %v292, %v1440
    %v1442 = vand.u32 %v1441, 4294901760
    %1443 = vmatpush1.msra.mxu0 %v1442
    %v1444 = vand.u32 %v295, 4294901760
    %v1445 = vsub.f32 %v295, %v1444
    %v1446 = vand.u32 %v1445, 4294901760
    %1447 = vmatprep.subr.mxu0 %v1446
    %v1448 = vand.u32 %v294, 4294901760
    %v1449 = vsub.f32 %v294, %v1448
    %v1450 = vand.u32 %v1449, 4294901760
    %1451 = vmatpush1.msra.mxu0 %v1450
    %v1452 = vand.u32 %v297, 4294901760
    %v1453 = vsub.f32 %v297, %v1452
    %v1454 = vand.u32 %v1453, 4294901760
    %1455 = vmatprep.subr.mxu0 %v1454
    %v1456 = vand.u32 %v296, 4294901760
    %v1457 = vsub.f32 %v296, %v1456
    %v1458 = vand.u32 %v1457, 4294901760
    %1459 = vmatpush1.msra.mxu0 %v1458
    %v1460 = vand.u32 %v299, 4294901760
    %v1461 = vsub.f32 %v299, %v1460
    %v1462 = vand.u32 %v1461, 4294901760
    %1463 = vmatprep.subr.mxu0 %v1462
    %v1464 = vand.u32 %v298, 4294901760
    %v1465 = vsub.f32 %v298, %v1464
    %v1466 = vand.u32 %v1465, 4294901760
    %1467 = vmatpush1.msra.mxu0 %v1466
    %v1468 = vand.u32 %v301, 4294901760
    %v1469 = vsub.f32 %v301, %v1468
    %v1470 = vand.u32 %v1469, 4294901760
    %1471 = vmatprep.subr.mxu0 %v1470
    %v1472 = vand.u32 %v300, 4294901760
    %v1473 = vsub.f32 %v300, %v1472
    %v1474 = vand.u32 %v1473, 4294901760
    %1475 = vmatpush1.msra.mxu0 %v1474
    %v1476 = vand.u32 %v303, 4294901760
    %v1477 = vsub.f32 %v303, %v1476
    %v1478 = vand.u32 %v1477, 4294901760
    %1479 = vmatprep.subr.mxu0 %v1478
    %v1480 = vand.u32 %v302, 4294901760
    %v1481 = vsub.f32 %v302, %v1480
    %v1482 = vand.u32 %v1481, 4294901760
    %1483 = vmatpush1.msra.mxu0 %v1482
    %v1484 = vand.u32 %v305, 4294901760
    %v1485 = vsub.f32 %v305, %v1484
    %v1486 = vand.u32 %v1485, 4294901760
    %1487 = vmatprep.subr.mxu0 %v1486
    %v1488 = vand.u32 %v304, 4294901760
    %v1489 = vsub.f32 %v304, %v1488
    %v1490 = vand.u32 %v1489, 4294901760
    %1491 = vmatpush1.msra.mxu0 %v1490
    %v1492 = vand.u32 %v307, 4294901760
    %v1493 = vsub.f32 %v307, %v1492
    %v1494 = vand.u32 %v1493, 4294901760
    %1495 = vmatprep.subr.mxu0 %v1494
    %v1496 = vand.u32 %v306, 4294901760
    %v1497 = vsub.f32 %v306, %v1496
    %v1498 = vand.u32 %v1497, 4294901760
    %1499 = vmatpush1.msra.mxu0 %v1498
    %v1500 = vand.u32 %v309, 4294901760
    %v1501 = vsub.f32 %v309, %v1500
    %v1502 = vand.u32 %v1501, 4294901760
    %1503 = vmatprep.subr.mxu0 %v1502
    %v1504 = vand.u32 %v308, 4294901760
    %v1505 = vsub.f32 %v308, %v1504
    %v1506 = vand.u32 %v1505, 4294901760
    %1507 = vmatpush1.msra.mxu0 %v1506
    %v1508 = vand.u32 %v311, 4294901760
    %v1509 = vsub.f32 %v311, %v1508
    %v1510 = vand.u32 %v1509, 4294901760
    %1511 = vmatprep.subr.mxu0 %v1510
    %v1512 = vand.u32 %v310, 4294901760
    %v1513 = vsub.f32 %v310, %v1512
    %v1514 = vand.u32 %v1513, 4294901760
    %1515 = vmatpush1.msra.mxu0 %v1514
    %v1516 = vand.u32 %v313, 4294901760
    %v1517 = vsub.f32 %v313, %v1516
    %v1518 = vand.u32 %v1517, 4294901760
    %1519 = vmatprep.subr.mxu0 %v1518
    %v1520 = vand.u32 %v312, 4294901760
    %v1521 = vsub.f32 %v312, %v1520
    %v1522 = vand.u32 %v1521, 4294901760
    %1523 = vmatpush1.msra.mxu0 %v1522
    %v1524 = vand.u32 %v315, 4294901760
    %v1525 = vsub.f32 %v315, %v1524
    %v1526 = vand.u32 %v1525, 4294901760
    %1527 = vmatprep.subr.mxu0 %v1526
    %v1528 = vand.u32 %v314, 4294901760
    %v1529 = vsub.f32 %v314, %v1528
    %v1530 = vand.u32 %v1529, 4294901760
    %1531 = vmatpush1.msra.mxu0 %v1530
    %v1532 = vand.u32 %v317, 4294901760
    %v1533 = vsub.f32 %v317, %v1532
    %v1534 = vand.u32 %v1533, 4294901760
    %1535 = vmatprep.subr.mxu0 %v1534
    %v1536 = vand.u32 %v316, 4294901760
    %v1537 = vsub.f32 %v316, %v1536
    %v1538 = vand.u32 %v1537, 4294901760
    %1539 = vmatpush1.msra.mxu0 %v1538
    %v1540 = vand.u32 %v319, 4294901760
    %v1541 = vsub.f32 %v319, %v1540
    %v1542 = vand.u32 %v1541, 4294901760
    %1543 = vmatprep.subr.mxu0 %v1542
    %v1544 = vand.u32 %v318, 4294901760
    %v1545 = vsub.f32 %v318, %v1544
    %v1546 = vand.u32 %v1545, 4294901760
    %1547 = vmatpush1.msra.mxu0 %v1546
    %v1548 = vand.u32 %v321, 4294901760
    %v1549 = vsub.f32 %v321, %v1548
    %v1550 = vand.u32 %v1549, 4294901760
    %1551 = vmatprep.subr.mxu0 %v1550
    %v1552 = vand.u32 %v320, 4294901760
    %v1553 = vsub.f32 %v320, %v1552
    %v1554 = vand.u32 %v1553, 4294901760
    %1555 = vmatpush1.msra.mxu0 %v1554
    %v1556 = vand.u32 %v323, 4294901760
    %v1557 = vsub.f32 %v323, %v1556
    %v1558 = vand.u32 %v1557, 4294901760
    %1559 = vmatprep.subr.mxu0 %v1558
    %v1560 = vand.u32 %v322, 4294901760
    %v1561 = vsub.f32 %v322, %v1560
    %v1562 = vand.u32 %v1561, 4294901760
    %1563 = vmatpush1.msra.mxu0 %v1562
    %v1564 = vand.u32 %v325, 4294901760
    %v1565 = vsub.f32 %v325, %v1564
    %v1566 = vand.u32 %v1565, 4294901760
    %1567 = vmatprep.subr.mxu0 %v1566
    %v1568 = vand.u32 %v324, 4294901760
    %v1569 = vsub.f32 %v324, %v1568
    %v1570 = vand.u32 %v1569, 4294901760
    %1571 = vmatpush1.msra.mxu0 %v1570
    %v1572 = vand.u32 %v327, 4294901760
    %v1573 = vsub.f32 %v327, %v1572
    %v1574 = vand.u32 %v1573, 4294901760
    %1575 = vmatprep.subr.mxu0 %v1574
    %v1576 = vand.u32 %v326, 4294901760
    %v1577 = vsub.f32 %v326, %v1576
    %v1578 = vand.u32 %v1577, 4294901760
    %1579 = vmatpush1.msra.mxu0 %v1578
    %v1580 = vand.u32 %v329, 4294901760
    %v1581 = vsub.f32 %v329, %v1580
    %v1582 = vand.u32 %v1581, 4294901760
    %1583 = vmatprep.subr.mxu0 %v1582
    %v1584 = vand.u32 %v328, 4294901760
    %v1585 = vsub.f32 %v328, %v1584
    %v1586 = vand.u32 %v1585, 4294901760
    %1587 = vmatpush1.msra.mxu0 %v1586
    %v1588 = vand.u32 %v331, 4294901760
    %v1589 = vsub.f32 %v331, %v1588
    %v1590 = vand.u32 %v1589, 4294901760
    %1591 = vmatprep.subr.mxu0 %v1590
    %v1592 = vand.u32 %v330, 4294901760
    %v1593 = vsub.f32 %v330, %v1592
    %v1594 = vand.u32 %v1593, 4294901760
    %1595 = vmatpush1.msra.mxu0 %v1594
    %v1596 = vand.u32 %v333, 4294901760
    %v1597 = vsub.f32 %v333, %v1596
    %v1598 = vand.u32 %v1597, 4294901760
    %1599 = vmatprep.subr.mxu0 %v1598
    %v1600 = vand.u32 %v332, 4294901760
    %v1601 = vsub.f32 %v332, %v1600
    %v1602 = vand.u32 %v1601, 4294901760
    %1603 = vmatpush1.msra.mxu0 %v1602
    %v1604 = vand.u32 %v335, 4294901760
    %v1605 = vsub.f32 %v335, %v1604
    %v1606 = vand.u32 %v1605, 4294901760
    %1607 = vmatprep.subr.mxu0 %v1606
    %v1608 = vand.u32 %v334, 4294901760
    %v1609 = vsub.f32 %v334, %v1608
    %v1610 = vand.u32 %v1609, 4294901760
    %1611 = vmatpush1.msra.mxu0 %v1610
    %v1612 = vand.u32 %v204, 4294901760
    %1613 = vmatprep.mubr.f32.mxu0 %v1612
    %v1614 = vand.u32 %v203, 4294901760
    %1615 = vmatmul.mubr.f32.gmra.mrb[0].mxu0 %v1614
    %v1616 = vpop.f32.mrb[0].mxu0
    %v1617 = vadd.f32 %v1316, %v1616
    %v1618 = vpop.f32.mrb[0].mxu0
    %v1619 = vadd.f32 %v1318, %v1618
    %v1620 = vand.u32 %v206, 4294901760
    %1621 = vmatprep.mubr.f32.mxu0 %v1620
    %v1622 = vand.u32 %v205, 4294901760
    %1623 = vmatmul.mubr.f32.gmra.mrb[0].mxu0 %v1622
    %v1624 = vpop.f32.mrb[0].mxu0
    %v1625 = vadd.f32 %v1328, %v1624
    %v1626 = vpop.f32.mrb[0].mxu0
    %v1627 = vadd.f32 %v1330, %v1626
    %v1628 = vand.u32 %v208, 4294901760
    %1629 = vmatprep.mubr.f32.mxu0 %v1628
    %v1630 = vand.u32 %v207, 4294901760
    %1631 = vmatmul.mubr.f32.gmra.mrb[0].mxu0 %v1630
    %v1632 = vpop.f32.mrb[0].mxu0
    %v1633 = vadd.f32 %v1340, %v1632
    %v1634 = vpop.f32.mrb[0].mxu0
    %v1635 = vadd.f32 %v1342, %v1634
    %v1636 = vand.u32 %v210, 4294901760
    %1637 = vmatprep.mubr.f32.mxu0 %v1636
    %v1638 = vand.u32 %v209, 4294901760
    %1639 = vmatmul.mubr.f32.gmra.mrb[0].mxu0 %v1638
    %v1640 = vpop.f32.mrb[0].mxu0
    %v1641 = vadd.f32 %v1352, %v1640
    %v1642 = vpop.f32.mrb[0].mxu0
    %v1643 = vadd.f32 %v1354, %v1642
    %1644 = vdwg.mxu0
    %v1645 = vand.u32 %v273, 4294901760
    %1646 = vmatprep.subr.mxu0 %v1645
    %v1647 = vand.u32 %v272, 4294901760
    %1648 = vmatpush1.msra.mxu0 %v1647
    %v1649 = vand.u32 %v275, 4294901760
    %1650 = vmatprep.subr.mxu0 %v1649
    %v1651 = vand.u32 %v274, 4294901760
    %1652 = vmatpush1.msra.mxu0 %v1651
    %v1653 = vand.u32 %v277, 4294901760
    %1654 = vmatprep.subr.mxu0 %v1653
    %v1655 = vand.u32 %v276, 4294901760
    %1656 = vmatpush1.msra.mxu0 %v1655
    %v1657 = vand.u32 %v279, 4294901760
    %1658 = vmatprep.subr.mxu0 %v1657
    %v1659 = vand.u32 %v278, 4294901760
    %1660 = vmatpush1.msra.mxu0 %v1659
    %v1661 = vand.u32 %v281, 4294901760
    %1662 = vmatprep.subr.mxu0 %v1661
    %v1663 = vand.u32 %v280, 4294901760
    %1664 = vmatpush1.msra.mxu0 %v1663
    %v1665 = vand.u32 %v283, 4294901760
    %1666 = vmatprep.subr.mxu0 %v1665
    %v1667 = vand.u32 %v282, 4294901760
    %1668 = vmatpush1.msra.mxu0 %v1667
    %v1669 = vand.u32 %v285, 4294901760
    %1670 = vmatprep.subr.mxu0 %v1669
    %v1671 = vand.u32 %v284, 4294901760
    %1672 = vmatpush1.msra.mxu0 %v1671
    %v1673 = vand.u32 %v287, 4294901760
    %1674 = vmatprep.subr.mxu0 %v1673
    %v1675 = vand.u32 %v286, 4294901760
    %1676 = vmatpush1.msra.mxu0 %v1675
    %v1677 = vand.u32 %v289, 4294901760
    %1678 = vmatprep.subr.mxu0 %v1677
    %v1679 = vand.u32 %v288, 4294901760
    %1680 = vmatpush1.msra.mxu0 %v1679
    %v1681 = vand.u32 %v291, 4294901760
    %1682 = vmatprep.subr.mxu0 %v1681
    %v1683 = vand.u32 %v290, 4294901760
    %1684 = vmatpush1.msra.mxu0 %v1683
    %v1685 = vand.u32 %v293, 4294901760
    %1686 = vmatprep.subr.mxu0 %v1685
    %v1687 = vand.u32 %v292, 4294901760
    %1688 = vmatpush1.msra.mxu0 %v1687
    %v1689 = vand.u32 %v295, 4294901760
    %1690 = vmatprep.subr.mxu0 %v1689
    %v1691 = vand.u32 %v294, 4294901760
    %1692 = vmatpush1.msra.mxu0 %v1691
    %v1693 = vand.u32 %v297, 4294901760
    %1694 = vmatprep.subr.mxu0 %v1693
    %v1695 = vand.u32 %v296, 4294901760
    %1696 = vmatpush1.msra.mxu0 %v1695
    %v1697 = vand.u32 %v299, 4294901760
    %1698 = vmatprep.subr.mxu0 %v1697
    %v1699 = vand.u32 %v298, 4294901760
    %1700 = vmatpush1.msra.mxu0 %v1699
    %v1701 = vand.u32 %v301, 4294901760
    %1702 = vmatprep.subr.mxu0 %v1701
    %v1703 = vand.u32 %v300, 4294901760
    %1704 = vmatpush1.msra.mxu0 %v1703
    %v1705 = vand.u32 %v303, 4294901760
    %1706 = vmatprep.subr.mxu0 %v1705
    %v1707 = vand.u32 %v302, 4294901760
    %1708 = vmatpush1.msra.mxu0 %v1707
    %v1709 = vand.u32 %v305, 4294901760
    %1710 = vmatprep.subr.mxu0 %v1709
    %v1711 = vand.u32 %v304, 4294901760
    %1712 = vmatpush1.msra.mxu0 %v1711
    %v1713 = vand.u32 %v307, 4294901760
    %1714 = vmatprep.subr.mxu0 %v1713
    %v1715 = vand.u32 %v306, 4294901760
    %1716 = vmatpush1.msra.mxu0 %v1715
    %v1717 = vand.u32 %v309, 4294901760
    %1718 = vmatprep.subr.mxu0 %v1717
    %v1719 = vand.u32 %v308, 4294901760
    %1720 = vmatpush1.msra.mxu0 %v1719
    %v1721 = vand.u32 %v311, 4294901760
    %1722 = vmatprep.subr.mxu0 %v1721
    %v1723 = vand.u32 %v310, 4294901760
    %1724 = vmatpush1.msra.mxu0 %v1723
    %v1725 = vand.u32 %v313, 4294901760
    %1726 = vmatprep.subr.mxu0 %v1725
    %v1727 = vand.u32 %v312, 4294901760
    %1728 = vmatpush1.msra.mxu0 %v1727
    %v1729 = vand.u32 %v315, 4294901760
    %1730 = vmatprep.subr.mxu0 %v1729
    %v1731 = vand.u32 %v314, 4294901760
    %1732 = vmatpush1.msra.mxu0 %v1731
    %v1733 = vand.u32 %v317, 4294901760
    %1734 = vmatprep.subr.mxu0 %v1733
    %v1735 = vand.u32 %v316, 4294901760
    %1736 = vmatpush1.msra.mxu0 %v1735
    %v1737 = vand.u32 %v319, 4294901760
    %1738 = vmatprep.subr.mxu0 %v1737
    %v1739 = vand.u32 %v318, 4294901760
    %1740 = vmatpush1.msra.mxu0 %v1739
    %v1741 = vand.u32 %v321, 4294901760
    %1742 = vmatprep.subr.mxu0 %v1741
    %v1743 = vand.u32 %v320, 4294901760
    %1744 = vmatpush1.msra.mxu0 %v1743
    %v1745 = vand.u32 %v323, 4294901760
    %1746 = vmatprep.subr.mxu0 %v1745
    %v1747 = vand.u32 %v322, 4294901760
    %1748 = vmatpush1.msra.mxu0 %v1747
    %v1749 = vand.u32 %v325, 4294901760
    %1750 = vmatprep.subr.mxu0 %v1749
    %v1751 = vand.u32 %v324, 4294901760
    %1752 = vmatpush1.msra.mxu0 %v1751
    %v1753 = vand.u32 %v327, 4294901760
    %1754 = vmatprep.subr.mxu0 %v1753
    %v1755 = vand.u32 %v326, 4294901760
    %1756 = vmatpush1.msra.mxu0 %v1755
    %v1757 = vand.u32 %v329, 4294901760
    %1758 = vmatprep.subr.mxu0 %v1757
    %v1759 = vand.u32 %v328, 4294901760
    %1760 = vmatpush1.msra.mxu0 %v1759
    %v1761 = vand.u32 %v331, 4294901760
    %1762 = vmatprep.subr.mxu0 %v1761
    %v1763 = vand.u32 %v330, 4294901760
    %1764 = vmatpush1.msra.mxu0 %v1763
    %v1765 = vand.u32 %v333, 4294901760
    %1766 = vmatprep.subr.mxu0 %v1765
    %v1767 = vand.u32 %v332, 4294901760
    %1768 = vmatpush1.msra.mxu0 %v1767
    %v1769 = vand.u32 %v335, 4294901760
    %1770 = vmatprep.subr.mxu0 %v1769
    %v1771 = vand.u32 %v334, 4294901760
    %1772 = vmatpush1.msra.mxu0 %v1771
    %v1773 = vand.u32 %v204, 4294901760
    %1774 = vmatprep.mubr.f32.mxu0 %v1773
    %v1775 = vand.u32 %v203, 4294901760
    %1776 = vmatmul.mubr.f32.gmra.mrb[0].mxu0 %v1775
    %v1777 = vpop.f32.mrb[0].mxu0
    %v1778 = vadd.f32 %v1617, %v1777
    %v1779 = vpop.f32.mrb[0].mxu0
    %v1780 = vadd.f32 %v1619, %v1779
    %v1781 = vand.u32 %v206, 4294901760
    %1782 = vmatprep.mubr.f32.mxu0 %v1781
    %v1783 = vand.u32 %v205, 4294901760
    %1784 = vmatmul.mubr.f32.gmra.mrb[0].mxu0 %v1783
    %v1785 = vpop.f32.mrb[0].mxu0
    %v1786 = vadd.f32 %v1625, %v1785
    %v1787 = vpop.f32.mrb[0].mxu0
    %v1788 = vadd.f32 %v1627, %v1787
    %v1789 = vand.u32 %v208, 4294901760
    %1790 = vmatprep.mubr.f32.mxu0 %v1789
    %v1791 = vand.u32 %v207, 4294901760
    %1792 = vmatmul.mubr.f32.gmra.mrb[0].mxu0 %v1791
    %v1793 = vpop.f32.mrb[0].mxu0
    %v1794 = vadd.f32 %v1633, %v1793
    %v1795 = vpop.f32.mrb[0].mxu0
    %v1796 = vadd.f32 %v1635, %v1795
    %v1797 = vand.u32 %v210, 4294901760
    %1798 = vmatprep.mubr.f32.mxu0 %v1797
    %v1799 = vand.u32 %v209, 4294901760
    %1800 = vmatmul.mubr.f32.gmra.mrb[0].mxu0 %v1799
    %v1801 = vpop.f32.mrb[0].mxu0
    %v1802 = vadd.f32 %v1641, %v1801
    %v1803 = vpop.f32.mrb[0].mxu0
    %v1804 = vadd.f32 %v1643, %v1803
    %1805 = vdwg.mxu0
    %v1806 = vrot.slane %v1778, 7
    %v1807 = vrot.slane %v1786, 7
    %v1808 = vrot.slane %v1794, 7
    %v1809 = vrot.slane %v1802, 7
    %vm1810 = vcmp.lt.s32.totalorder %v212, 1
    %v1811 = vsel %vm1810, %v1808, %v1809
    %v1812 = vsel %vm1810, %v1807, %v1808
    %v1813 = vsel %vm1810, %v1806, %v1807
    %v1814 = vsel %vm1810, %v1809, %v1806
    %v1815 = vsel %vm264, 1, 0
    %v1816 = vsel %vm265, 1, 0
    %v1817 = vsel %vm266, 1, 0
    %v1818 = vsel %vm267, 1, 0
    %vm1819 = vcmp.eq.s32.totalorder %v1815, 1
    %vm1820 = vcmp.eq.s32.totalorder %v1816, 1
    %vm1821 = vcmp.eq.s32.totalorder %v1817, 1
    %vm1822 = vcmp.eq.s32.totalorder %v1818, 1
    %v1823 = vsel %vm1819, %v1814, 0.0
    %v1824 = vsel %vm1820, %v1813, 0.0
    %v1825 = vsel %vm1821, %v1812, 0.0
    %v1826 = vsel %vm1822, %v1811, 0.0
    %1831 = vrot.lane.b32.xlu0 %v1823, 64
    %v1832 = vpop.permute.xlu0 %1831
    %1833 = vrot.lane.b32.xlu0 %v1824, 64
    %v1834 = vpop.permute.xlu0 %1833
    %1835 = vrot.lane.b32.xlu0 %v1825, 64
    %v1836 = vpop.permute.xlu0 %1835
    %1837 = vrot.lane.b32.xlu0 %v1826, 64
    %v1838 = vpop.permute.xlu0 %1837
    %v1843 = vadd.f32 %v1778, %v1832
    %v1844 = vadd.f32 %v1786, %v1834
    %v1845 = vadd.f32 %v1794, %v1836
    %v1846 = vadd.f32 %v1802, %v1838
    %v1847 = vrot.slane %v1780, 1
    %v1848 = vrot.slane %v1788, 1
    %v1849 = vrot.slane %v1796, 1
    %v1850 = vrot.slane %v1804, 1
    %vm1851 = vcmp.lt.s32.totalorder %v212, 7
    %v1852 = vsel %vm1851, %v1849, %v1850
    %v1853 = vsel %vm1851, %v1848, %v1849
    %v1854 = vsel %vm1851, %v1847, %v1848
    %v1855 = vsel %vm1851, %v1850, %v1847
    %v1856 = vsel %vm268, 1, 0
    %v1857 = vsel %vm269, 1, 0
    %v1858 = vsel %vm270, 1, 0
    %v1859 = vsel %vm271, 1, 0
    %vm1860 = vcmp.eq.s32.totalorder %v1856, 1
    %vm1861 = vcmp.eq.s32.totalorder %v1857, 1
    %vm1862 = vcmp.eq.s32.totalorder %v1858, 1
    %vm1863 = vcmp.eq.s32.totalorder %v1859, 1
    %v1864 = vsel %vm1860, %v1854, 0.0
    %v1865 = vsel %vm1861, %v1853, 0.0
    %v1866 = vsel %vm1862, %v1852, 0.0
    %v1867 = vsel %vm1863, %v1855, 0.0
    %1872 = vrot.lane.b32.xlu0 %v1864, 64
    %v1873 = vpop.permute.xlu0 %1872
    %1874 = vrot.lane.b32.xlu0 %v1865, 64
    %v1875 = vpop.permute.xlu0 %1874
    %1876 = vrot.lane.b32.xlu0 %v1866, 64
    %v1877 = vpop.permute.xlu0 %1876
    %1878 = vrot.lane.b32.xlu0 %v1867, 64
    %v1879 = vpop.permute.xlu0 %1878
    %v1884 = vadd.f32 %v1843, %v1873
    %v1885 = vadd.f32 %v1844, %v1875
    %v1886 = vadd.f32 %v1845, %v1877
    %v1887 = vadd.f32 %v1846, %v1879
    %v1888 = vld [vmem:[#allocation7] sm:$0x1]
    %v1890 = vlaneseq
    %v1891 = vshrl.u32 %v1890, 7
    %v1892 = vsub.s32 0, %v1891
    %v1893 = vrot.slane %v1888, %v1892
    %1894 = vrot.lane.b32.xlu0 %v1893, 64
    %v1895 = vpop.permute.xlu0 %1894
    %v1897 = vadd.f32 %v1884, %v1895
    %v1898 = vadd.f32 %v1885, %v1895
    %v1899 = vadd.f32 %v1886, %v1895
    %v1900 = vadd.f32 %v1887, %v1895
    %v1901 = vld [vmem:[#allocation8] sm:$0x1]
    %v1902 = vld [vmem:[#allocation10] sm:$0x1]
    %vm1903 = vcmask 1048064
    %v1904 = vsel %vm1903, %v1897, 0.0
    %v1905 = vsel %vm1903, %v1898, 0.0
    %v1906 = vadd.f32 %v1904, %v1905
    %v1907 = vsel %vm1903, %v1899, 0.0
    %v1908 = vadd.f32 %v1906, %v1907
    %v1909 = vsel %vm1903, %v1900, 0.0
    %v1910 = vadd.f32 %v1908, %v1909
    %v1911 = vrot.slane %v1910, 4
    %v1912 = vadd.f32 %v1910, %v1911
    %v1913 = vrot.slane %v1912, 2
    %v1914 = vadd.f32 %v1912, %v1913
    %v1915 = vrot.slane %v1914, 1
    %v1916 = vadd.f32 %v1914, %v1915
    %v1917 = vrcp.pop 32.0
    %v1918 = vmul.f32 %v1916, %v1917
    %v1919 = vmul.f32 %v1897, %v1897
    %v1920 = vmul.f32 %v1898, %v1898
    %v1921 = vmul.f32 %v1899, %v1899
    %v1922 = vmul.f32 %v1900, %v1900
    %v1923 = vsel %vm1903, %v1919, 0.0
    %v1924 = vsel %vm1903, %v1920, 0.0
    %v1925 = vadd.f32 %v1923, %v1924
    %v1926 = vsel %vm1903, %v1921, 0.0
    %v1927 = vadd.f32 %v1925, %v1926
    %v1928 = vsel %vm1903, %v1922, 0.0
    %v1929 = vadd.f32 %v1927, %v1928
    %v1930 = vrot.slane %v1929, 4
    %v1931 = vadd.f32 %v1929, %v1930
    %v1932 = vrot.slane %v1931, 2
    %v1933 = vadd.f32 %v1931, %v1932
    %v1934 = vrot.slane %v1933, 1
    %v1935 = vadd.f32 %v1933, %v1934
    %v1936 = vmul.f32 %v1935, %v1917
    %v1937 = vmul.f32 %v1918, %v1918
    %v1938 = vsub.f32 %v1936, %v1937
    %v1939 = vmax.f32 %v1938, 0.0
    %v1940 = vsub.f32 %v1897, %v1918
    %v1941 = vsub.f32 %v1898, %v1918
    %v1942 = vsub.f32 %v1899, %v1918
    %v1943 = vsub.f32 %v1900, %v1918
    %v1944 = vadd.f32 %v1939, 1e-05
    %v1945 = vrsqrt.pop %v1944
    %v1946 = vmul.f32 %v1940, %v1945
    %v1947 = vmul.f32 %v1941, %v1945
    %v1948 = vmul.f32 %v1942, %v1945
    %v1949 = vmul.f32 %v1943, %v1945
    %v1951 = vlaneseq
    %v1952 = vshrl.u32 %v1951, 7
    %v1953 = vsub.s32 0, %v1952
    %v1954 = vrot.slane %v1901, %v1953
    %1955 = vrot.lane.b32.xlu0 %v1954, 64
    %v1956 = vpop.permute.xlu0 %1955
    %v1958 = vmul.f32 %v1946, %v1956
    %v1959 = vmul.f32 %v1947, %v1956
    %v1960 = vmul.f32 %v1948, %v1956
    %v1961 = vmul.f32 %v1949, %v1956
    %v1963 = vlaneseq
    %v1964 = vshrl.u32 %v1963, 7
    %v1965 = vsub.s32 0, %v1964
    %v1966 = vrot.slane %v1902, %v1965
    %1967 = vrot.lane.b32.xlu0 %v1966, 64
    %v1968 = vpop.permute.xlu0 %1967
    %v1970 = vadd.f32 %v1958, %v1968
    %v1971 = vadd.f32 %v1959, %v1968
    %v1972 = vadd.f32 %v1960, %v1968
    %v1973 = vadd.f32 %v1961, %v1968
    %v1974 = vmax.f32 %v1970, 0.0
    %v1975 = vmax.f32 %v1971, 0.0
    %v1976 = vmax.f32 %v1972, 0.0
    %v1977 = vmax.f32 %v1973, 0.0
    %v1978 = vld [vmem:[#allocation11] sm:$0xff]
    %v1979 = vld [vmem:[#allocation11 + $0x8] sm:$0xff]
    %v1980 = vld [vmem:[#allocation11 + $0x10] sm:$0xff]
    %v1981 = vld [vmem:[#allocation11 + $0x18] sm:$0xff]
    %v1982 = vld [vmem:[#allocation11 + $0x20] sm:$0xff]
    %v1983 = vld [vmem:[#allocation11 + $0x28] sm:$0xff]
    %v1984 = vld [vmem:[#allocation11 + $0x30] sm:$0xff]
    %v1985 = vld [vmem:[#allocation11 + $0x38] sm:$0xff]
    %v1986 = vld [vmem:[#allocation13] sm:$0x1]
    %v1988 = vlaneseq
    %v1989 = vshrl.u32 %v1988, 7
    %v1990 = vsub.s32 0, %v1989
    %v1991 = vrot.slane %v1986, %v1990
    %1997 = vrot.lane.b32.xlu0 %v1974, 64
    %v1998 = vpop.permute.xlu0 %1997
    %1999 = vrot.lane.b32.xlu0 %v1975, 64
    %v2000 = vpop.permute.xlu0 %1999
    %2001 = vrot.lane.b32.xlu0 %v1976, 64
    %v2002 = vpop.permute.xlu0 %2001
    %2003 = vrot.lane.b32.xlu0 %v1977, 64
    %v2004 = vpop.permute.xlu0 %2003
    %vm2005 = vcmask 523264
    %v2006 = vsel %vm2005, %v1998, 0
    %v2008 = vsel %vm2005, %v2000, 0
    %v2010 = vsel %vm2005, %v2002, 0
    %v2012 = vsel %vm2005, %v2004, 0
    %2014 = vmatprep.subr.mxu0 0.0
    %v2015 = vand.u32 %v1978, 4294901760
    %2016 = vmatpush1.msra.mxu0 %v2015
    %2017 = vmatprep.subr.mxu0 0.0
    %v2018 = vand.u32 %v1979, 4294901760
    %2019 = vmatpush1.msra.mxu0 %v2018
    %2020 = vmatprep.subr.mxu0 0.0
    %v2021 = vand.u32 %v1980, 4294901760
    %2022 = vmatpush1.msra.mxu0 %v2021
    %2023 = vmatprep.subr.mxu0 0.0
    %v2024 = vand.u32 %v1981, 4294901760
    %2025 = vmatpush1.msra.mxu0 %v2024
    %2026 = vmatprep.subr.mxu0 0.0
    %v2027 = vand.u32 %v1982, 4294901760
    %2028 = vmatpush1.msra.mxu0 %v2027
    %2029 = vmatprep.subr.mxu0 0.0
    %v2030 = vand.u32 %v1983, 4294901760
    %2031 = vmatpush1.msra.mxu0 %v2030
    %2032 = vmatprep.subr.mxu0 0.0
    %v2033 = vand.u32 %v1984, 4294901760
    %2034 = vmatpush1.msra.mxu0 %v2033
    %2035 = vmatprep.subr.mxu0 0.0
    %v2036 = vand.u32 %v1985, 4294901760
    %2037 = vmatpush1.msra.mxu0 %v2036
    %2038 = vmatprep.subr.mxu0 0.0
    %2039 = vmatpush1.msra.mxu0 0.0
    %2040 = vmatprep.subr.mxu0 0.0
    %2041 = vmatpush1.msra.mxu0 0.0
    %2042 = vmatprep.subr.mxu0 0.0
    %2043 = vmatpush1.msra.mxu0 0.0
    %2044 = vmatprep.subr.mxu0 0.0
    %2045 = vmatpush1.msra.mxu0 0.0
    %2046 = vmatprep.subr.mxu0 0.0
    %2047 = vmatpush1.msra.mxu0 0.0
    %2048 = vmatprep.subr.mxu0 0.0
    %2049 = vmatpush1.msra.mxu0 0.0
    %2050 = vmatprep.subr.mxu0 0.0
    %2051 = vmatpush1.msra.mxu0 0.0
    %2052 = vmatprep.subr.mxu0 0.0
    %2053 = vmatpush1.msra.mxu0 0.0
    %2054 = vmatprep.subr.mxu0 0.0
    %2055 = vmatpush1.msra.mxu0 0.0
    %2056 = vmatprep.subr.mxu0 0.0
    %2057 = vmatpush1.msra.mxu0 0.0
    %2058 = vmatprep.subr.mxu0 0.0
    %2059 = vmatpush1.msra.mxu0 0.0
    %2060 = vmatprep.subr.mxu0 0.0
    %2061 = vmatpush1.msra.mxu0 0.0
    %2062 = vmatprep.subr.mxu0 0.0
    %2063 = vmatpush1.msra.mxu0 0.0
    %2064 = vmatprep.subr.mxu0 0.0
    %2065 = vmatpush1.msra.mxu0 0.0
    %2066 = vmatprep.subr.mxu0 0.0
    %2067 = vmatpush1.msra.mxu0 0.0
    %2068 = vmatprep.subr.mxu0 0.0
    %2069 = vmatpush1.msra.mxu0 0.0
    %2070 = vmatprep.subr.mxu0 0.0
    %2071 = vmatpush1.msra.mxu0 0.0
    %2072 = vmatprep.subr.mxu0 0.0
    %2073 = vmatpush1.msra.mxu0 0.0
    %2074 = vmatprep.subr.mxu0 0.0
    %2075 = vmatpush1.msra.mxu0 0.0
    %2076 = vmatprep.subr.mxu0 0.0
    %2077 = vmatpush1.msra.mxu0 0.0
    %2078 = vmatprep.subr.mxu0 0.0
    %2079 = vmatpush1.msra.mxu0 0.0
    %2080 = vmatprep.subr.mxu0 0.0
    %2081 = vmatpush1.msra.mxu0 0.0
    %2082 = vmatprep.subr.mxu0 0.0
    %2083 = vmatpush1.msra.mxu0 0.0
    %2084 = vmatprep.subr.mxu0 0.0
    %2085 = vmatpush1.msra.mxu0 0.0
    %2086 = vmatprep.mubr.f32.mxu0 0.0
    %v2087 = vand.u32 %v2006, 4294901760
    %v2088 = vsub.f32 %v2006, %v2087
    %v2089 = vand.u32 %v2088, 4294901760
    %v2090 = vsub.f32 %v2088, %v2089
    %v2091 = vand.u32 %v2090, 4294901760
    %2092 = vmatmul.mubr.f32.gmra.mrb[0].mxu0 %v2091
    %v2093 = vpop.f32.mrb[0].mxu0
    %v2094 = vadd.f32 %v1991, %v2093
    %v2095 = vpop.f32.mrb[0].mxu0
    %2096 = vmatprep.mubr.f32.mxu0 0.0
    %v2097 = vand.u32 %v2008, 4294901760
    %v2098 = vsub.f32 %v2008, %v2097
    %v2099 = vand.u32 %v2098, 4294901760
    %v2100 = vsub.f32 %v2098, %v2099
    %v2101 = vand.u32 %v2100, 4294901760
    %2102 = vmatmul.mubr.f32.gmra.mrb[0].mxu0 %v2101
    %v2103 = vpop.f32.mrb[0].mxu0
    %v2104 = vadd.f32 %v1991, %v2103
    %v2105 = vpop.f32.mrb[0].mxu0
    %2106 = vmatprep.mubr.f32.mxu0 0.0
    %v2107 = vand.u32 %v2010, 4294901760
    %v2108 = vsub.f32 %v2010, %v2107
    %v2109 = vand.u32 %v2108, 4294901760
    %v2110 = vsub.f32 %v2108, %v2109
    %v2111 = vand.u32 %v2110, 4294901760
    %2112 = vmatmul.mubr.f32.gmra.mrb[0].mxu0 %v2111
    %v2113 = vpop.f32.mrb[0].mxu0
    %v2114 = vadd.f32 %v1991, %v2113
    %v2115 = vpop.f32.mrb[0].mxu0
    %2116 = vmatprep.mubr.f32.mxu0 0.0
    %v2117 = vand.u32 %v2012, 4294901760
    %v2118 = vsub.f32 %v2012, %v2117
    %v2119 = vand.u32 %v2118, 4294901760
    %v2120 = vsub.f32 %v2118, %v2119
    %v2121 = vand.u32 %v2120, 4294901760
    %2122 = vmatmul.mubr.f32.gmra.mrb[0].mxu0 %v2121
    %v2123 = vpop.f32.mrb[0].mxu0
    %v2124 = vadd.f32 %v1991, %v2123
    %v2125 = vpop.f32.mrb[0].mxu0
    %2126 = vdwg.mxu0
    %2127 = vmatprep.subr.mxu0 0.0
    %v2128 = vand.u32 %v1978, 4294901760
    %v2129 = vsub.f32 %v1978, %v2128
    %v2130 = vand.u32 %v2129, 4294901760
    %v2131 = vsub.f32 %v2129, %v2130
    %v2132 = vand.u32 %v2131, 4294901760
    %2133 = vmatpush1.msra.mxu0 %v2132
    %2134 = vmatprep.subr.mxu0 0.0
    %v2135 = vand.u32 %v1979, 4294901760
    %v2136 = vsub.f32 %v1979, %v2135
    %v2137 = vand.u32 %v2136, 4294901760
    %v2138 = vsub.f32 %v2136, %v2137
    %v2139 = vand.u32 %v2138, 4294901760
    %2140 = vmatpush1.msra.mxu0 %v2139
    %2141 = vmatprep.subr.mxu0 0.0
    %v2142 = vand.u32 %v1980, 4294901760
    %v2143 = vsub.f32 %v1980, %v2142
    %v2144 = vand.u32 %v2143, 4294901760
    %v2145 = vsub.f32 %v2143, %v2144
    %v2146 = vand.u32 %v2145, 4294901760
    %2147 = vmatpush1.msra.mxu0 %v2146
    %2148 = vmatprep.subr.mxu0 0.0
    %v2149 = vand.u32 %v1981, 4294901760
    %v2150 = vsub.f32 %v1981, %v2149
    %v2151 = vand.u32 %v2150, 4294901760
    %v2152 = vsub.f32 %v2150, %v2151
    %v2153 = vand.u32 %v2152, 4294901760
    %2154 = vmatpush1.msra.mxu0 %v2153
    %2155 = vmatprep.subr.mxu0 0.0
    %v2156 = vand.u32 %v1982, 4294901760
    %v2157 = vsub.f32 %v1982, %v2156
    %v2158 = vand.u32 %v2157, 4294901760
    %v2159 = vsub.f32 %v2157, %v2158
    %v2160 = vand.u32 %v2159, 4294901760
    %2161 = vmatpush1.msra.mxu0 %v2160
    %2162 = vmatprep.subr.mxu0 0.0
    %v2163 = vand.u32 %v1983, 4294901760
    %v2164 = vsub.f32 %v1983, %v2163
    %v2165 = vand.u32 %v2164, 4294901760
    %v2166 = vsub.f32 %v2164, %v2165
    %v2167 = vand.u32 %v2166, 4294901760
    %2168 = vmatpush1.msra.mxu0 %v2167
    %2169 = vmatprep.subr.mxu0 0.0
    %v2170 = vand.u32 %v1984, 4294901760
    %v2171 = vsub.f32 %v1984, %v2170
    %v2172 = vand.u32 %v2171, 4294901760
    %v2173 = vsub.f32 %v2171, %v2172
    %v2174 = vand.u32 %v2173, 4294901760
    %2175 = vmatpush1.msra.mxu0 %v2174
    %2176 = vmatprep.subr.mxu0 0.0
    %v2177 = vand.u32 %v1985, 4294901760
    %v2178 = vsub.f32 %v1985, %v2177
    %v2179 = vand.u32 %v2178, 4294901760
    %v2180 = vsub.f32 %v2178, %v2179
    %v2181 = vand.u32 %v2180, 4294901760
    %2182 = vmatpush1.msra.mxu0 %v2181
    %2183 = vmatprep.subr.mxu0 0.0
    %2184 = vmatpush1.msra.mxu0 0.0
    %2185 = vmatprep.subr.mxu0 0.0
    %2186 = vmatpush1.msra.mxu0 0.0
    %2187 = vmatprep.subr.mxu0 0.0
    %2188 = vmatpush1.msra.mxu0 0.0
    %2189 = vmatprep.subr.mxu0 0.0
    %2190 = vmatpush1.msra.mxu0 0.0
    %2191 = vmatprep.subr.mxu0 0.0
    %2192 = vmatpush1.msra.mxu0 0.0
    %2193 = vmatprep.subr.mxu0 0.0
    %2194 = vmatpush1.msra.mxu0 0.0
    %2195 = vmatprep.subr.mxu0 0.0
    %2196 = vmatpush1.msra.mxu0 0.0
    %2197 = vmatprep.subr.mxu0 0.0
    %2198 = vmatpush1.msra.mxu0 0.0
    %2199 = vmatprep.subr.mxu0 0.0
    %2200 = vmatpush1.msra.mxu0 0.0
    %2201 = vmatprep.subr.mxu0 0.0
    %2202 = vmatpush1.msra.mxu0 0.0
    %2203 = vmatprep.subr.mxu0 0.0
    %2204 = vmatpush1.msra.mxu0 0.0
    %2205 = vmatprep.subr.mxu0 0.0
    %2206 = vmatpush1.msra.mxu0 0.0
    %2207 = vmatprep.subr.mxu0 0.0
    %2208 = vmatpush1.msra.mxu0 0.0
    %2209 = vmatprep.subr.mxu0 0.0
    %2210 = vmatpush1.msra.mxu0 0.0
    %2211 = vmatprep.subr.mxu0 0.0
    %2212 = vmatpush1.msra.mxu0 0.0
    %2213 = vmatprep.subr.mxu0 0.0
    %2214 = vmatpush1.msra.mxu0 0.0
    %2215 = vmatprep.subr.mxu0 0.0
    %2216 = vmatpush1.msra.mxu0 0.0
    %2217 = vmatprep.subr.mxu0 0.0
    %2218 = vmatpush1.msra.mxu0 0.0
    %2219 = vmatprep.subr.mxu0 0.0
    %2220 = vmatpush1.msra.mxu0 0.0
    %2221 = vmatprep.subr.mxu0 0.0
    %2222 = vmatpush1.msra.mxu0 0.0
    %2223 = vmatprep.subr.mxu0 0.0
    %2224 = vmatpush1.msra.mxu0 0.0
    %2225 = vmatprep.subr.mxu0 0.0
    %2226 = vmatpush1.msra.mxu0 0.0
    %2227 = vmatprep.subr.mxu0 0.0
    %2228 = vmatpush1.msra.mxu0 0.0
    %2229 = vmatprep.subr.mxu0 0.0
    %2230 = vmatpush1.msra.mxu0 0.0
    %2231 = vmatprep.mubr.f32.mxu0 0.0
    %v2232 = vand.u32 %v2006, 4294901760
    %2233 = vmatmul.mubr.f32.gmra.mrb[0].mxu0 %v2232
    %v2234 = vpop.f32.mrb[0].mxu0
    %v2235 = vadd.f32 %v2094, %v2234
    %v2236 = vpop.f32.mrb[0].mxu0
    %2237 = vmatprep.mubr.f32.mxu0 0.0
    %v2238 = vand.u32 %v2008, 4294901760
    %2239 = vmatmul.mubr.f32.gmra.mrb[0].mxu0 %v2238
    %v2240 = vpop.f32.mrb[0].mxu0
    %v2241 = vadd.f32 %v2104, %v2240
    %v2242 = vpop.f32.mrb[0].mxu0
    %2243 = vmatprep.mubr.f32.mxu0 0.0
    %v2244 = vand.u32 %v2010, 4294901760
    %2245 = vmatmul.mubr.f32.gmra.mrb[0].mxu0 %v2244
    %v2246 = vpop.f32.mrb[0].mxu0
    %v2247 = vadd.f32 %v2114, %v2246
    %v2248 = vpop.f32.mrb[0].mxu0
    %2249 = vmatprep.mubr.f32.mxu0 0.0
    %v2250 = vand.u32 %v2012, 4294901760
    %2251 = vmatmul.mubr.f32.gmra.mrb[0].mxu0 %v2250
    %v2252 = vpop.f32.mrb[0].mxu0
    %v2253 = vadd.f32 %v2124, %v2252
    %v2254 = vpop.f32.mrb[0].mxu0
    %2255 = vdwg.mxu0
    %2256 = vmatprep.subr.mxu0 0.0
    %v2257 = vand.u32 %v1978, 4294901760
    %v2258 = vsub.f32 %v1978, %v2257
    %2259 = vmatpush1.msra.mxu0 %v2258
    %2260 = vmatprep.subr.mxu0 0.0
    %v2261 = vand.u32 %v1979, 4294901760
    %v2262 = vsub.f32 %v1979, %v2261
    %2263 = vmatpush1.msra.mxu0 %v2262
    %2264 = vmatprep.subr.mxu0 0.0
    %v2265 = vand.u32 %v1980, 4294901760
    %v2266 = vsub.f32 %v1980, %v2265
    %2267 = vmatpush1.msra.mxu0 %v2266
    %2268 = vmatprep.subr.mxu0 0.0
    %v2269 = vand.u32 %v1981, 4294901760
    %v2270 = vsub.f32 %v1981, %v2269
    %2271 = vmatpush1.msra.mxu0 %v2270
    %2272 = vmatprep.subr.mxu0 0.0
    %v2273 = vand.u32 %v1982, 4294901760
    %v2274 = vsub.f32 %v1982, %v2273
    %2275 = vmatpush1.msra.mxu0 %v2274
    %2276 = vmatprep.subr.mxu0 0.0
    %v2277 = vand.u32 %v1983, 4294901760
    %v2278 = vsub.f32 %v1983, %v2277
    %2279 = vmatpush1.msra.mxu0 %v2278
    %2280 = vmatprep.subr.mxu0 0.0
    %v2281 = vand.u32 %v1984, 4294901760
    %v2282 = vsub.f32 %v1984, %v2281
    %2283 = vmatpush1.msra.mxu0 %v2282
    %2284 = vmatprep.subr.mxu0 0.0
    %v2285 = vand.u32 %v1985, 4294901760
    %v2286 = vsub.f32 %v1985, %v2285
    %2287 = vmatpush1.msra.mxu0 %v2286
    %2288 = vmatprep.subr.mxu0 0.0
    %2289 = vmatpush1.msra.mxu0 0.0
    %2290 = vmatprep.subr.mxu0 0.0
    %2291 = vmatpush1.msra.mxu0 0.0
    %2292 = vmatprep.subr.mxu0 0.0
    %2293 = vmatpush1.msra.mxu0 0.0
    %2294 = vmatprep.subr.mxu0 0.0
    %2295 = vmatpush1.msra.mxu0 0.0
    %2296 = vmatprep.subr.mxu0 0.0
    %2297 = vmatpush1.msra.mxu0 0.0
    %2298 = vmatprep.subr.mxu0 0.0
    %2299 = vmatpush1.msra.mxu0 0.0
    %2300 = vmatprep.subr.mxu0 0.0
    %2301 = vmatpush1.msra.mxu0 0.0
    %2302 = vmatprep.subr.mxu0 0.0
    %2303 = vmatpush1.msra.mxu0 0.0
    %2304 = vmatprep.subr.mxu0 0.0
    %2305 = vmatpush1.msra.mxu0 0.0
    %2306 = vmatprep.subr.mxu0 0.0
    %2307 = vmatpush1.msra.mxu0 0.0
    %2308 = vmatprep.subr.mxu0 0.0
    %2309 = vmatpush1.msra.mxu0 0.0
    %2310 = vmatprep.subr.mxu0 0.0
    %2311 = vmatpush1.msra.mxu0 0.0
    %2312 = vmatprep.subr.mxu0 0.0
    %2313 = vmatpush1.msra.mxu0 0.0
    %2314 = vmatprep.subr.mxu0 0.0
    %2315 = vmatpush1.msra.mxu0 0.0
    %2316 = vmatprep.subr.mxu0 0.0
    %2317 = vmatpush1.msra.mxu0 0.0
    %2318 = vmatprep.subr.mxu0 0.0
    %2319 = vmatpush1.msra.mxu0 0.0
    %2320 = vmatprep.subr.mxu0 0.0
    %2321 = vmatpush1.msra.mxu0 0.0
    %2322 = vmatprep.subr.mxu0 0.0
    %2323 = vmatpush1.msra.mxu0 0.0
    %2324 = vmatprep.subr.mxu0 0.0
    %2325 = vmatpush1.msra.mxu0 0.0
    %2326 = vmatprep.subr.mxu0 0.0
    %2327 = vmatpush1.msra.mxu0 0.0
    %2328 = vmatprep.subr.mxu0 0.0
    %2329 = vmatpush1.msra.mxu0 0.0
    %2330 = vmatprep.subr.mxu0 0.0
    %2331 = vmatpush1.msra.mxu0 0.0
    %2332 = vmatprep.subr.mxu0 0.0
    %2333 = vmatpush1.msra.mxu0 0.0
    %2334 = vmatprep.subr.mxu0 0.0
    %2335 = vmatpush1.msra.mxu0 0.0
    %2336 = vmatprep.mubr.f32.mxu0 0.0
    %v2337 = vand.u32 %v2006, 4294901760
    %v2338 = vsub.f32 %v2006, %v2337
    %2339 = vmatmul.mubr.f32.gmra.mrb[0].mxu0 %v2338
    %v2340 = vpop.f32.mrb[0].mxu0
    %v2341 = vadd.f32 %v2235, %v2340
    %v2342 = vpop.f32.mrb[0].mxu0
    %2343 = vmatprep.mubr.f32.mxu0 0.0
    %v2344 = vand.u32 %v2008, 4294901760
    %v2345 = vsub.f32 %v2008, %v2344
    %2346 = vmatmul.mubr.f32.gmra.mrb[0].mxu0 %v2345
    %v2347 = vpop.f32.mrb[0].mxu0
    %v2348 = vadd.f32 %v2241, %v2347
    %v2349 = vpop.f32.mrb[0].mxu0
    %2350 = vmatprep.mubr.f32.mxu0 0.0
    %v2351 = vand.u32 %v2010, 4294901760
    %v2352 = vsub.f32 %v2010, %v2351
    %2353 = vmatmul.mubr.f32.gmra.mrb[0].mxu0 %v2352
    %v2354 = vpop.f32.mrb[0].mxu0
    %v2355 = vadd.f32 %v2247, %v2354
    %v2356 = vpop.f32.mrb[0].mxu0
    %2357 = vmatprep.mubr.f32.mxu0 0.0
    %v2358 = vand.u32 %v2012, 4294901760
    %v2359 = vsub.f32 %v2012, %v2358
    %2360 = vmatmul.mubr.f32.gmra.mrb[0].mxu0 %v2359
    %v2361 = vpop.f32.mrb[0].mxu0
    %v2362 = vadd.f32 %v2253, %v2361
    %v2363 = vpop.f32.mrb[0].mxu0
    %2364 = vdwg.mxu0
    %2365 = vmatprep.subr.mxu0 0.0
    %v2366 = vand.u32 %v1978, 4294901760
    %2367 = vmatpush1.msra.mxu0 %v2366
    %2368 = vmatprep.subr.mxu0 0.0
    %v2369 = vand.u32 %v1979, 4294901760
    %2370 = vmatpush1.msra.mxu0 %v2369
    %2371 = vmatprep.subr.mxu0 0.0
    %v2372 = vand.u32 %v1980, 4294901760
    %2373 = vmatpush1.msra.mxu0 %v2372
    %2374 = vmatprep.subr.mxu0 0.0
    %v2375 = vand.u32 %v1981, 4294901760
    %2376 = vmatpush1.msra.mxu0 %v2375
    %2377 = vmatprep.subr.mxu0 0.0
    %v2378 = vand.u32 %v1982, 4294901760
    %2379 = vmatpush1.msra.mxu0 %v2378
    %2380 = vmatprep.subr.mxu0 0.0
    %v2381 = vand.u32 %v1983, 4294901760
    %2382 = vmatpush1.msra.mxu0 %v2381
    %2383 = vmatprep.subr.mxu0 0.0
    %v2384 = vand.u32 %v1984, 4294901760
    %2385 = vmatpush1.msra.mxu0 %v2384
    %2386 = vmatprep.subr.mxu0 0.0
    %v2387 = vand.u32 %v1985, 4294901760
    %2388 = vmatpush1.msra.mxu0 %v2387
    %2389 = vmatprep.subr.mxu0 0.0
    %2390 = vmatpush1.msra.mxu0 0.0
    %2391 = vmatprep.subr.mxu0 0.0
    %2392 = vmatpush1.msra.mxu0 0.0
    %2393 = vmatprep.subr.mxu0 0.0
    %2394 = vmatpush1.msra.mxu0 0.0
    %2395 = vmatprep.subr.mxu0 0.0
    %2396 = vmatpush1.msra.mxu0 0.0
    %2397 = vmatprep.subr.mxu0 0.0
    %2398 = vmatpush1.msra.mxu0 0.0
    %2399 = vmatprep.subr.mxu0 0.0
    %2400 = vmatpush1.msra.mxu0 0.0
    %2401 = vmatprep.subr.mxu0 0.0
    %2402 = vmatpush1.msra.mxu0 0.0
    %2403 = vmatprep.subr.mxu0 0.0
    %2404 = vmatpush1.msra.mxu0 0.0
    %2405 = vmatprep.subr.mxu0 0.0
    %2406 = vmatpush1.msra.mxu0 0.0
    %2407 = vmatprep.subr.mxu0 0.0
    %2408 = vmatpush1.msra.mxu0 0.0
    %2409 = vmatprep.subr.mxu0 0.0
    %2410 = vmatpush1.msra.mxu0 0.0
    %2411 = vmatprep.subr.mxu0 0.0
    %2412 = vmatpush1.msra.mxu0 0.0
    %2413 = vmatprep.subr.mxu0 0.0
    %2414 = vmatpush1.msra.mxu0 0.0
    %2415 = vmatprep.subr.mxu0 0.0
    %2416 = vmatpush1.msra.mxu0 0.0
    %2417 = vmatprep.subr.mxu0 0.0
    %2418 = vmatpush1.msra.mxu0 0.0
    %2419 = vmatprep.subr.mxu0 0.0
    %2420 = vmatpush1.msra.mxu0 0.0
    %2421 = vmatprep.subr.mxu0 0.0
    %2422 = vmatpush1.msra.mxu0 0.0
    %2423 = vmatprep.subr.mxu0 0.0
    %2424 = vmatpush1.msra.mxu0 0.0
    %2425 = vmatprep.subr.mxu0 0.0
    %2426 = vmatpush1.msra.mxu0 0.0
    %2427 = vmatprep.subr.mxu0 0.0
    %2428 = vmatpush1.msra.mxu0 0.0
    %2429 = vmatprep.subr.mxu0 0.0
    %2430 = vmatpush1.msra.mxu0 0.0
    %2431 = vmatprep.subr.mxu0 0.0
    %2432 = vmatpush1.msra.mxu0 0.0
    %2433 = vmatprep.subr.mxu0 0.0
    %2434 = vmatpush1.msra.mxu0 0.0
    %2435 = vmatprep.subr.mxu0 0.0
    %2436 = vmatpush1.msra.mxu0 0.0
    %2437 = vmatprep.mubr.f32.mxu0 0.0
    %v2438 = vand.u32 %v2006, 4294901760
    %v2439 = vsub.f32 %v2006, %v2438
    %v2440 = vand.u32 %v2439, 4294901760
    %2441 = vmatmul.mubr.f32.gmra.mrb[0].mxu0 %v2440
    %v2442 = vpop.f32.mrb[0].mxu0
    %v2443 = vadd.f32 %v2341, %v2442
    %v2444 = vpop.f32.mrb[0].mxu0
    %2445 = vmatprep.mubr.f32.mxu0 0.0
    %v2446 = vand.u32 %v2008, 4294901760
    %v2447 = vsub.f32 %v2008, %v2446
    %v2448 = vand.u32 %v2447, 4294901760
    %2449 = vmatmul.mubr.f32.gmra.mrb[0].mxu0 %v2448
    %v2450 = vpop.f32.mrb[0].mxu0
    %v2451 = vadd.f32 %v2348, %v2450
    %v2452 = vpop.f32.mrb[0].mxu0
    %2453 = vmatprep.mubr.f32.mxu0 0.0
    %v2454 = vand.u32 %v2010, 4294901760
    %v2455 = vsub.f32 %v2010, %v2454
    %v2456 = vand.u32 %v2455, 4294901760
    %2457 = vmatmul.mubr.f32.gmra.mrb[0].mxu0 %v2456
    %v2458 = vpop.f32.mrb[0].mxu0
    %v2459 = vadd.f32 %v2355, %v2458
    %v2460 = vpop.f32.mrb[0].mxu0
    %2461 = vmatprep.mubr.f32.mxu0 0.0
    %v2462 = vand.u32 %v2012, 4294901760
    %v2463 = vsub.f32 %v2012, %v2462
    %v2464 = vand.u32 %v2463, 4294901760
    %2465 = vmatmul.mubr.f32.gmra.mrb[0].mxu0 %v2464
    %v2466 = vpop.f32.mrb[0].mxu0
    %v2467 = vadd.f32 %v2362, %v2466
    %v2468 = vpop.f32.mrb[0].mxu0
    %2469 = vdwg.mxu0
    %2470 = vmatprep.subr.mxu0 0.0
    %v2471 = vand.u32 %v1978, 4294901760
    %v2472 = vsub.f32 %v1978, %v2471
    %v2473 = vand.u32 %v2472, 4294901760
    %2474 = vmatpush1.msra.mxu0 %v2473
    %2475 = vmatprep.subr.mxu0 0.0
    %v2476 = vand.u32 %v1979, 4294901760
    %v2477 = vsub.f32 %v1979, %v2476
    %v2478 = vand.u32 %v2477, 4294901760
    %2479 = vmatpush1.msra.mxu0 %v2478
    %2480 = vmatprep.subr.mxu0 0.0
    %v2481 = vand.u32 %v1980, 4294901760
    %v2482 = vsub.f32 %v1980, %v2481
    %v2483 = vand.u32 %v2482, 4294901760
    %2484 = vmatpush1.msra.mxu0 %v2483
    %2485 = vmatprep.subr.mxu0 0.0
    %v2486 = vand.u32 %v1981, 4294901760
    %v2487 = vsub.f32 %v1981, %v2486
    %v2488 = vand.u32 %v2487, 4294901760
    %2489 = vmatpush1.msra.mxu0 %v2488
    %2490 = vmatprep.subr.mxu0 0.0
    %v2491 = vand.u32 %v1982, 4294901760
    %v2492 = vsub.f32 %v1982, %v2491
    %v2493 = vand.u32 %v2492, 4294901760
    %2494 = vmatpush1.msra.mxu0 %v2493
    %2495 = vmatprep.subr.mxu0 0.0
    %v2496 = vand.u32 %v1983, 4294901760
    %v2497 = vsub.f32 %v1983, %v2496
    %v2498 = vand.u32 %v2497, 4294901760
    %2499 = vmatpush1.msra.mxu0 %v2498
    %2500 = vmatprep.subr.mxu0 0.0
    %v2501 = vand.u32 %v1984, 4294901760
    %v2502 = vsub.f32 %v1984, %v2501
    %v2503 = vand.u32 %v2502, 4294901760
    %2504 = vmatpush1.msra.mxu0 %v2503
    %2505 = vmatprep.subr.mxu0 0.0
    %v2506 = vand.u32 %v1985, 4294901760
    %v2507 = vsub.f32 %v1985, %v2506
    %v2508 = vand.u32 %v2507, 4294901760
    %2509 = vmatpush1.msra.mxu0 %v2508
    %2510 = vmatprep.subr.mxu0 0.0
    %2511 = vmatpush1.msra.mxu0 0.0
    %2512 = vmatprep.subr.mxu0 0.0
    %2513 = vmatpush1.msra.mxu0 0.0
    %2514 = vmatprep.subr.mxu0 0.0
    %2515 = vmatpush1.msra.mxu0 0.0
    %2516 = vmatprep.subr.mxu0 0.0
    %2517 = vmatpush1.msra.mxu0 0.0
    %2518 = vmatprep.subr.mxu0 0.0
    %2519 = vmatpush1.msra.mxu0 0.0
    %2520 = vmatprep.subr.mxu0 0.0
    %2521 = vmatpush1.msra.mxu0 0.0
    %2522 = vmatprep.subr.mxu0 0.0
    %2523 = vmatpush1.msra.mxu0 0.0
    %2524 = vmatprep.subr.mxu0 0.0
    %2525 = vmatpush1.msra.mxu0 0.0
    %2526 = vmatprep.subr.mxu0 0.0
    %2527 = vmatpush1.msra.mxu0 0.0
    %2528 = vmatprep.subr.mxu0 0.0
    %2529 = vmatpush1.msra.mxu0 0.0
    %2530 = vmatprep.subr.mxu0 0.0
    %2531 = vmatpush1.msra.mxu0 0.0
    %2532 = vmatprep.subr.mxu0 0.0
    %2533 = vmatpush1.msra.mxu0 0.0
    %2534 = vmatprep.subr.mxu0 0.0
    %2535 = vmatpush1.msra.mxu0 0.0
    %2536 = vmatprep.subr.mxu0 0.0
    %2537 = vmatpush1.msra.mxu0 0.0
    %2538 = vmatprep.subr.mxu0 0.0
    %2539 = vmatpush1.msra.mxu0 0.0
    %2540 = vmatprep.subr.mxu0 0.0
    %2541 = vmatpush1.msra.mxu0 0.0
    %2542 = vmatprep.subr.mxu0 0.0
    %2543 = vmatpush1.msra.mxu0 0.0
    %2544 = vmatprep.subr.mxu0 0.0
    %2545 = vmatpush1.msra.mxu0 0.0
    %2546 = vmatprep.subr.mxu0 0.0
    %2547 = vmatpush1.msra.mxu0 0.0
    %2548 = vmatprep.subr.mxu0 0.0
    %2549 = vmatpush1.msra.mxu0 0.0
    %2550 = vmatprep.subr.mxu0 0.0
    %2551 = vmatpush1.msra.mxu0 0.0
    %2552 = vmatprep.subr.mxu0 0.0
    %2553 = vmatpush1.msra.mxu0 0.0
    %2554 = vmatprep.subr.mxu0 0.0
    %2555 = vmatpush1.msra.mxu0 0.0
    %2556 = vmatprep.subr.mxu0 0.0
    %2557 = vmatpush1.msra.mxu0 0.0
    %2558 = vmatprep.mubr.f32.mxu0 0.0
    %v2559 = vand.u32 %v2006, 4294901760
    %2560 = vmatmul.mubr.f32.gmra.mrb[0].mxu0 %v2559
    %v2561 = vpop.f32.mrb[0].mxu0
    %v2562 = vadd.f32 %v2443, %v2561
    %v2563 = vpop.f32.mrb[0].mxu0
    %2564 = vmatprep.mubr.f32.mxu0 0.0
    %v2565 = vand.u32 %v2008, 4294901760
    %2566 = vmatmul.mubr.f32.gmra.mrb[0].mxu0 %v2565
    %v2567 = vpop.f32.mrb[0].mxu0
    %v2568 = vadd.f32 %v2451, %v2567
    %v2569 = vpop.f32.mrb[0].mxu0
    %2570 = vmatprep.mubr.f32.mxu0 0.0
    %v2571 = vand.u32 %v2010, 4294901760
    %2572 = vmatmul.mubr.f32.gmra.mrb[0].mxu0 %v2571
    %v2573 = vpop.f32.mrb[0].mxu0
    %v2574 = vadd.f32 %v2459, %v2573
    %v2575 = vpop.f32.mrb[0].mxu0
    %2576 = vmatprep.mubr.f32.mxu0 0.0
    %v2577 = vand.u32 %v2012, 4294901760
    %2578 = vmatmul.mubr.f32.gmra.mrb[0].mxu0 %v2577
    %v2579 = vpop.f32.mrb[0].mxu0
    %v2580 = vadd.f32 %v2467, %v2579
    %v2581 = vpop.f32.mrb[0].mxu0
    %2582 = vdwg.mxu0
    %2583 = vmatprep.subr.mxu0 0.0
    %v2584 = vand.u32 %v1978, 4294901760
    %2585 = vmatpush1.msra.mxu0 %v2584
    %2586 = vmatprep.subr.mxu0 0.0
    %v2587 = vand.u32 %v1979, 4294901760
    %2588 = vmatpush1.msra.mxu0 %v2587
    %2589 = vmatprep.subr.mxu0 0.0
    %v2590 = vand.u32 %v1980, 4294901760
    %2591 = vmatpush1.msra.mxu0 %v2590
    %2592 = vmatprep.subr.mxu0 0.0
    %v2593 = vand.u32 %v1981, 4294901760
    %2594 = vmatpush1.msra.mxu0 %v2593
    %2595 = vmatprep.subr.mxu0 0.0
    %v2596 = vand.u32 %v1982, 4294901760
    %2597 = vmatpush1.msra.mxu0 %v2596
    %2598 = vmatprep.subr.mxu0 0.0
    %v2599 = vand.u32 %v1983, 4294901760
    %2600 = vmatpush1.msra.mxu0 %v2599
    %2601 = vmatprep.subr.mxu0 0.0
    %v2602 = vand.u32 %v1984, 4294901760
    %2603 = vmatpush1.msra.mxu0 %v2602
    %2604 = vmatprep.subr.mxu0 0.0
    %v2605 = vand.u32 %v1985, 4294901760
    %2606 = vmatpush1.msra.mxu0 %v2605
    %2607 = vmatprep.subr.mxu0 0.0
    %2608 = vmatpush1.msra.mxu0 0.0
    %2609 = vmatprep.subr.mxu0 0.0
    %2610 = vmatpush1.msra.mxu0 0.0
    %2611 = vmatprep.subr.mxu0 0.0
    %2612 = vmatpush1.msra.mxu0 0.0
    %2613 = vmatprep.subr.mxu0 0.0
    %2614 = vmatpush1.msra.mxu0 0.0
    %2615 = vmatprep.subr.mxu0 0.0
    %2616 = vmatpush1.msra.mxu0 0.0
    %2617 = vmatprep.subr.mxu0 0.0
    %2618 = vmatpush1.msra.mxu0 0.0
    %2619 = vmatprep.subr.mxu0 0.0
    %2620 = vmatpush1.msra.mxu0 0.0
    %2621 = vmatprep.subr.mxu0 0.0
    %2622 = vmatpush1.msra.mxu0 0.0
    %2623 = vmatprep.subr.mxu0 0.0
    %2624 = vmatpush1.msra.mxu0 0.0
    %2625 = vmatprep.subr.mxu0 0.0
    %2626 = vmatpush1.msra.mxu0 0.0
    %2627 = vmatprep.subr.mxu0 0.0
    %2628 = vmatpush1.msra.mxu0 0.0
    %2629 = vmatprep.subr.mxu0 0.0
    %2630 = vmatpush1.msra.mxu0 0.0
    %2631 = vmatprep.subr.mxu0 0.0
    %2632 = vmatpush1.msra.mxu0 0.0
    %2633 = vmatprep.subr.mxu0 0.0
    %2634 = vmatpush1.msra.mxu0 0.0
    %2635 = vmatprep.subr.mxu0 0.0
    %2636 = vmatpush1.msra.mxu0 0.0
    %2637 = vmatprep.subr.mxu0 0.0
    %2638 = vmatpush1.msra.mxu0 0.0
    %2639 = vmatprep.subr.mxu0 0.0
    %2640 = vmatpush1.msra.mxu0 0.0
    %2641 = vmatprep.subr.mxu0 0.0
    %2642 = vmatpush1.msra.mxu0 0.0
    %2643 = vmatprep.subr.mxu0 0.0
    %2644 = vmatpush1.msra.mxu0 0.0
    %2645 = vmatprep.subr.mxu0 0.0
    %2646 = vmatpush1.msra.mxu0 0.0
    %2647 = vmatprep.subr.mxu0 0.0
    %2648 = vmatpush1.msra.mxu0 0.0
    %2649 = vmatprep.subr.mxu0 0.0
    %2650 = vmatpush1.msra.mxu0 0.0
    %2651 = vmatprep.subr.mxu0 0.0
    %2652 = vmatpush1.msra.mxu0 0.0
    %2653 = vmatprep.subr.mxu0 0.0
    %2654 = vmatpush1.msra.mxu0 0.0
    %2655 = vmatprep.mubr.f32.mxu0 0.0
    %v2656 = vand.u32 %v2006, 4294901760
    %2657 = vmatmul.mubr.f32.gmra.mrb[0].mxu0 %v2656
    %v2658 = vpop.f32.mrb[0].mxu0
    %v2659 = vadd.f32 %v2562, %v2658
    %v2660 = vpop.f32.mrb[0].mxu0
    %2661 = vmatprep.mubr.f32.mxu0 0.0
    %v2662 = vand.u32 %v2008, 4294901760
    %2663 = vmatmul.mubr.f32.gmra.mrb[0].mxu0 %v2662
    %v2664 = vpop.f32.mrb[0].mxu0
    %v2665 = vadd.f32 %v2568, %v2664
    %v2666 = vpop.f32.mrb[0].mxu0
    %2667 = vmatprep.mubr.f32.mxu0 0.0
    %v2668 = vand.u32 %v2010, 4294901760
    %2669 = vmatmul.mubr.f32.gmra.mrb[0].mxu0 %v2668
    %v2670 = vpop.f32.mrb[0].mxu0
    %v2671 = vadd.f32 %v2574, %v2670
    %v2672 = vpop.f32.mrb[0].mxu0
    %2673 = vmatprep.mubr.f32.mxu0 0.0
    %v2674 = vand.u32 %v2012, 4294901760
    %2675 = vmatmul.mubr.f32.gmra.mrb[0].mxu0 %v2674
    %v2676 = vpop.f32.mrb[0].mxu0
    %v2677 = vadd.f32 %v2580, %v2676
    %v2678 = vpop.f32.mrb[0].mxu0
    %2679 = vdwg.mxu0
    %v2680 = vld [vmem:[#allocation14] sm:$0x1]
    %v2681 = vld [vmem:[#allocation16] sm:$0x1]
    %v2682 = vsel %vm2005, %v2659, 0.0
    %v2683 = vsel %vm2005, %v2665, 0.0
    %v2684 = vadd.f32 %v2682, %v2683
    %v2685 = vsel %vm2005, %v2671, 0.0
    %v2686 = vadd.f32 %v2684, %v2685
    %v2687 = vsel %vm2005, %v2677, 0.0
    %v2688 = vadd.f32 %v2686, %v2687
    %v2689 = vrot.slane %v2688, 4
    %v2690 = vadd.f32 %v2688, %v2689
    %v2691 = vrot.slane %v2690, 2
    %v2692 = vadd.f32 %v2690, %v2691
    %v2693 = vrot.slane %v2692, 1
    %v2694 = vadd.f32 %v2692, %v2693
    %v2695 = vmul.f32 %v2694, %v1917
    %v2696 = vmul.f32 %v2659, %v2659
    %v2697 = vmul.f32 %v2665, %v2665
    %v2698 = vmul.f32 %v2671, %v2671
    %v2699 = vmul.f32 %v2677, %v2677
    %v2700 = vsel %vm2005, %v2696, 0.0
    %v2701 = vsel %vm2005, %v2697, 0.0
    %v2702 = vadd.f32 %v2700, %v2701
    %v2703 = vsel %vm2005, %v2698, 0.0
    %v2704 = vadd.f32 %v2702, %v2703
    %v2705 = vsel %vm2005, %v2699, 0.0
    %v2706 = vadd.f32 %v2704, %v2705
    %v2707 = vrot.slane %v2706, 4
    %v2708 = vadd.f32 %v2706, %v2707
    %v2709 = vrot.slane %v2708, 2
    %v2710 = vadd.f32 %v2708, %v2709
    %v2711 = vrot.slane %v2710, 1
    %v2712 = vadd.f32 %v2710, %v2711
    %v2713 = vmul.f32 %v2712, %v1917
    %v2714 = vmul.f32 %v2695, %v2695
    %v2715 = vsub.f32 %v2713, %v2714
    %v2716 = vmax.f32 %v2715, 0.0
    %v2717 = vsub.f32 %v2659, %v2695
    %v2718 = vsub.f32 %v2665, %v2695
    %v2719 = vsub.f32 %v2671, %v2695
    %v2720 = vsub.f32 %v2677, %v2695
    %v2721 = vadd.f32 %v2716, 1e-05
    %v2722 = vrsqrt.pop %v2721
    %v2723 = vmul.f32 %v2717, %v2722
    %v2724 = vmul.f32 %v2718, %v2722
    %v2725 = vmul.f32 %v2719, %v2722
    %v2726 = vmul.f32 %v2720, %v2722
    %v2728 = vlaneseq
    %v2729 = vshrl.u32 %v2728, 7
    %v2730 = vsub.s32 0, %v2729
    %v2731 = vrot.slane %v2680, %v2730
    %v2733 = vmul.f32 %v2723, %v2731
    %v2734 = vmul.f32 %v2724, %v2731
    %v2735 = vmul.f32 %v2725, %v2731
    %v2736 = vmul.f32 %v2726, %v2731
    %v2738 = vlaneseq
    %v2739 = vshrl.u32 %v2738, 7
    %v2740 = vsub.s32 0, %v2739
    %v2741 = vrot.slane %v2681, %v2740
    %v2743 = vadd.f32 %v2733, %v2741
    %v2744 = vadd.f32 %v2734, %v2741
    %v2745 = vadd.f32 %v2735, %v2741
    %v2746 = vadd.f32 %v2736, %v2741
    %v2747 = vmax.f32 %v2743, 0.0
    %v2748 = vmax.f32 %v2744, 0.0
    %v2749 = vmax.f32 %v2745, 0.0
    %v2750 = vmax.f32 %v2746, 0.0
    %v2751 = vrot.slane %v2747, 7
    %v2752 = vrot.slane %v2748, 7
    %v2753 = vrot.slane %v2749, 7
    %v2754 = vrot.slane %v2750, 7
    %v2755 = vsel %vm1810, %v2753, %v2754
    %v2756 = vsel %vm1810, %v2752, %v2753
    %v2757 = vsel %vm1810, %v2751, %v2752
    %v2758 = vsel %vm1810, %v2754, %v2751
    %v2759 = vsel %vm1819, %v2758, 0.0
    %v2760 = vsel %vm1820, %v2757, 0.0
    %v2761 = vsel %vm1821, %v2756, 0.0
    %v2762 = vsel %vm1822, %v2755, 0.0
    %v2763 = vrot.slane %v2747, 1
    %v2764 = vrot.slane %v2748, 1
    %v2765 = vrot.slane %v2749, 1
    %v2766 = vrot.slane %v2750, 1
    %v2767 = vsel %vm1851, %v2765, %v2766
    %v2768 = vsel %vm1851, %v2764, %v2765
    %v2769 = vsel %vm1851, %v2763, %v2764
    %v2770 = vsel %vm1851, %v2766, %v2763
    %v2771 = vsel %vm1860, %v2769, 0.0
    %v2772 = vsel %vm1861, %v2768, 0.0
    %v2773 = vsel %vm1862, %v2767, 0.0
    %v2774 = vsel %vm1863, %v2770, 0.0
    %2779 = vrot.lane.b32.xlu0 %v2747, 64
    %v2780 = vpop.permute.xlu0 %2779
    %2781 = vrot.lane.b32.xlu0 %v2748, 64
    %v2782 = vpop.permute.xlu0 %2781
    %2783 = vrot.lane.b32.xlu0 %v2749, 64
    %v2784 = vpop.permute.xlu0 %2783
    %2785 = vrot.lane.b32.xlu0 %v2750, 64
    %v2786 = vpop.permute.xlu0 %2785
    %v2791 = vsel %vm2005, %v2759, %v2780
    %v2792 = vsel %vm2005, %v2760, %v2782
    %v2793 = vsel %vm2005, %v2761, %v2784
    %v2794 = vsel %vm2005, %v2762, %v2786
    %v2795 = vld [vmem:[#allocation17] sm:$0xff]
    %v2796 = vld [vmem:[#allocation17 + $0x8] sm:$0xff]
    %v2797 = vld [vmem:[#allocation17 + $0x10] sm:$0xff]
    %v2798 = vld [vmem:[#allocation17 + $0x18] sm:$0xff]
    %v2799 = vld [vmem:[#allocation17 + $0x20] sm:$0xff]
    %v2800 = vld [vmem:[#allocation17 + $0x28] sm:$0xff]
    %v2801 = vld [vmem:[#allocation17 + $0x30] sm:$0xff]
    %v2802 = vld [vmem:[#allocation17 + $0x38] sm:$0xff]
    %v2803 = vld [vmem:[#allocation17 + $0x40] sm:$0xff]
    %v2804 = vld [vmem:[#allocation17 + $0x48] sm:$0xff]
    %v2805 = vld [vmem:[#allocation17 + $0x50] sm:$0xff]
    %v2806 = vld [vmem:[#allocation17 + $0x58] sm:$0xff]
    %v2807 = vld [vmem:[#allocation17 + $0x60] sm:$0xff]
    %v2808 = vld [vmem:[#allocation17 + $0x68] sm:$0xff]
    %v2809 = vld [vmem:[#allocation17 + $0x70] sm:$0xff]
    %v2810 = vld [vmem:[#allocation17 + $0x78] sm:$0xff]
    %v2811 = vld [vmem:[#allocation17 + $0x80] sm:$0xff]
    %v2812 = vld [vmem:[#allocation17 + $0x88] sm:$0xff]
    %v2813 = vld [vmem:[#allocation17 + $0x90] sm:$0xff]
    %v2814 = vld [vmem:[#allocation17 + $0x98] sm:$0xff]
    %v2815 = vld [vmem:[#allocation17 + $0xa0] sm:$0xff]
    %v2816 = vld [vmem:[#allocation17 + $0xa8] sm:$0xff]
    %v2817 = vld [vmem:[#allocation17 + $0xb0] sm:$0xff]
    %v2818 = vld [vmem:[#allocation17 + $0xb8] sm:$0xff]
    %v2819 = vld [vmem:[#allocation17 + $0xc0] sm:$0xff]
    %v2820 = vld [vmem:[#allocation17 + $0xc8] sm:$0xff]
    %v2821 = vld [vmem:[#allocation17 + $0xd0] sm:$0xff]
    %v2822 = vld [vmem:[#allocation17 + $0xd8] sm:$0xff]
    %v2823 = vld [vmem:[#allocation17 + $0xe0] sm:$0xff]
    %v2824 = vld [vmem:[#allocation17 + $0xe8] sm:$0xff]
    %v2825 = vld [vmem:[#allocation17 + $0xf0] sm:$0xff]
    %v2826 = vld [vmem:[#allocation17 + $0xf8] sm:$0xff]
    %v2827 = vld [vmem:[#allocation17 + $0x100] sm:$0xff]
    %v2828 = vld [vmem:[#allocation17 + $0x108] sm:$0xff]
    %v2829 = vld [vmem:[#allocation17 + $0x110] sm:$0xff]
    %v2830 = vld [vmem:[#allocation17 + $0x118] sm:$0xff]
    %v2831 = vld [vmem:[#allocation17 + $0x120] sm:$0xff]
    %v2832 = vld [vmem:[#allocation17 + $0x128] sm:$0xff]
    %v2833 = vld [vmem:[#allocation17 + $0x130] sm:$0xff]
    %v2834 = vld [vmem:[#allocation17 + $0x138] sm:$0xff]
    %v2835 = vld [vmem:[#allocation17 + $0x140] sm:$0xff]
    %v2836 = vld [vmem:[#allocation17 + $0x148] sm:$0xff]
    %v2837 = vld [vmem:[#allocation17 + $0x150] sm:$0xff]
    %v2838 = vld [vmem:[#allocation17 + $0x158] sm:$0xff]
    %v2839 = vld [vmem:[#allocation17 + $0x160] sm:$0xff]
    %v2840 = vld [vmem:[#allocation17 + $0x168] sm:$0xff]
    %v2841 = vld [vmem:[#allocation17 + $0x170] sm:$0xff]
    %v2842 = vld [vmem:[#allocation17 + $0x178] sm:$0xff]
    %v2843 = vld [vmem:[#allocation19] sm:$0x3]
    %v2845 = vlaneseq
    %v2846 = vshrl.u32 %v2845, 7
    %v2847 = vsub.s32 0, %v2846
    %v2848 = vrot.slane %v2843, %v2847
    %v2849 = vlaneseq
    %v2850 = vshrl.u32 %v2849, 7
    %v2851 = vsub.s32 1, %v2850
    %v2852 = vrot.slane %v2843, %v2851
    %v2856 = vsel %vm2005, %v2771, 0
    %v2859 = vsel %vm2005, %v2772, 0
    %v2862 = vsel %vm2005, %v2773, 0
    %v2865 = vsel %vm2005, %v2774, 0
    %v2867 = vand.u32 %v2796, 4294901760
    %2868 = vmatprep.subr.mxu0 %v2867
    %v2869 = vand.u32 %v2795, 4294901760
    %2870 = vmatpush1.msra.mxu0 %v2869
    %v2871 = vand.u32 %v2798, 4294901760
    %2872 = vmatprep.subr.mxu0 %v2871
    %v2873 = vand.u32 %v2797, 4294901760
    %2874 = vmatpush1.msra.mxu0 %v2873
    %v2875 = vand.u32 %v2800, 4294901760
    %2876 = vmatprep.subr.mxu0 %v2875
    %v2877 = vand.u32 %v2799, 4294901760
    %2878 = vmatpush1.msra.mxu0 %v2877
    %v2879 = vand.u32 %v2802, 4294901760
    %2880 = vmatprep.subr.mxu0 %v2879
    %v2881 = vand.u32 %v2801, 4294901760
    %2882 = vmatpush1.msra.mxu0 %v2881
    %v2883 = vand.u32 %v2804, 4294901760
    %2884 = vmatprep.subr.mxu0 %v2883
    %v2885 = vand.u32 %v2803, 4294901760
    %2886 = vmatpush1.msra.mxu0 %v2885
    %v2887 = vand.u32 %v2806, 4294901760
    %2888 = vmatprep.subr.mxu0 %v2887
    %v2889 = vand.u32 %v2805, 4294901760
    %2890 = vmatpush1.msra.mxu0 %v2889
    %v2891 = vand.u32 %v2808, 4294901760
    %2892 = vmatprep.subr.mxu0 %v2891
    %v2893 = vand.u32 %v2807, 4294901760
    %2894 = vmatpush1.msra.mxu0 %v2893
    %v2895 = vand.u32 %v2810, 4294901760
    %2896 = vmatprep.subr.mxu0 %v2895
    %v2897 = vand.u32 %v2809, 4294901760
    %2898 = vmatpush1.msra.mxu0 %v2897
    %v2899 = vand.u32 %v2812, 4294901760
    %2900 = vmatprep.subr.mxu0 %v2899
    %v2901 = vand.u32 %v2811, 4294901760
    %2902 = vmatpush1.msra.mxu0 %v2901
    %v2903 = vand.u32 %v2814, 4294901760
    %2904 = vmatprep.subr.mxu0 %v2903
    %v2905 = vand.u32 %v2813, 4294901760
    %2906 = vmatpush1.msra.mxu0 %v2905
    %v2907 = vand.u32 %v2816, 4294901760
    %2908 = vmatprep.subr.mxu0 %v2907
    %v2909 = vand.u32 %v2815, 4294901760
    %2910 = vmatpush1.msra.mxu0 %v2909
    %v2911 = vand.u32 %v2818, 4294901760
    %2912 = vmatprep.subr.mxu0 %v2911
    %v2913 = vand.u32 %v2817, 4294901760
    %2914 = vmatpush1.msra.mxu0 %v2913
    %v2915 = vand.u32 %v2820, 4294901760
    %2916 = vmatprep.subr.mxu0 %v2915
    %v2917 = vand.u32 %v2819, 4294901760
    %2918 = vmatpush1.msra.mxu0 %v2917
    %v2919 = vand.u32 %v2822, 4294901760
    %2920 = vmatprep.subr.mxu0 %v2919
    %v2921 = vand.u32 %v2821, 4294901760
    %2922 = vmatpush1.msra.mxu0 %v2921
    %v2923 = vand.u32 %v2824, 4294901760
    %2924 = vmatprep.subr.mxu0 %v2923
    %v2925 = vand.u32 %v2823, 4294901760
    %2926 = vmatpush1.msra.mxu0 %v2925
    %v2927 = vand.u32 %v2826, 4294901760
    %2928 = vmatprep.subr.mxu0 %v2927
    %v2929 = vand.u32 %v2825, 4294901760
    %2930 = vmatpush1.msra.mxu0 %v2929
    %v2931 = vand.u32 %v2828, 4294901760
    %2932 = vmatprep.subr.mxu0 %v2931
    %v2933 = vand.u32 %v2827, 4294901760
    %2934 = vmatpush1.msra.mxu0 %v2933
    %v2935 = vand.u32 %v2830, 4294901760
    %2936 = vmatprep.subr.mxu0 %v2935
    %v2937 = vand.u32 %v2829, 4294901760
    %2938 = vmatpush1.msra.mxu0 %v2937
    %v2939 = vand.u32 %v2832, 4294901760
    %2940 = vmatprep.subr.mxu0 %v2939
    %v2941 = vand.u32 %v2831, 4294901760
    %2942 = vmatpush1.msra.mxu0 %v2941
    %v2943 = vand.u32 %v2834, 4294901760
    %2944 = vmatprep.subr.mxu0 %v2943
    %v2945 = vand.u32 %v2833, 4294901760
    %2946 = vmatpush1.msra.mxu0 %v2945
    %v2947 = vand.u32 %v2836, 4294901760
    %2948 = vmatprep.subr.mxu0 %v2947
    %v2949 = vand.u32 %v2835, 4294901760
    %2950 = vmatpush1.msra.mxu0 %v2949
    %v2951 = vand.u32 %v2838, 4294901760
    %2952 = vmatprep.subr.mxu0 %v2951
    %v2953 = vand.u32 %v2837, 4294901760
    %2954 = vmatpush1.msra.mxu0 %v2953
    %v2955 = vand.u32 %v2840, 4294901760
    %2956 = vmatprep.subr.mxu0 %v2955
    %v2957 = vand.u32 %v2839, 4294901760
    %2958 = vmatpush1.msra.mxu0 %v2957
    %v2959 = vand.u32 %v2842, 4294901760
    %2960 = vmatprep.subr.mxu0 %v2959
    %v2961 = vand.u32 %v2841, 4294901760
    %2962 = vmatpush1.msra.mxu0 %v2961
    %2963 = vmatprep.subr.mxu0 0.0
    %2964 = vmatpush1.msra.mxu0 0.0
    %2965 = vmatprep.subr.mxu0 0.0
    %2966 = vmatpush1.msra.mxu0 0.0
    %2967 = vmatprep.subr.mxu0 0.0
    %2968 = vmatpush1.msra.mxu0 0.0
    %2969 = vmatprep.subr.mxu0 0.0
    %2970 = vmatpush1.msra.mxu0 0.0
    %2971 = vmatprep.subr.mxu0 0.0
    %2972 = vmatpush1.msra.mxu0 0.0
    %2973 = vmatprep.subr.mxu0 0.0
    %2974 = vmatpush1.msra.mxu0 0.0
    %2975 = vmatprep.subr.mxu0 0.0
    %2976 = vmatpush1.msra.mxu0 0.0
    %2977 = vmatprep.subr.mxu0 0.0
    %2978 = vmatpush1.msra.mxu0 0.0
    %v2979 = vand.u32 %v2856, 4294901760
    %v2980 = vsub.f32 %v2856, %v2979
    %v2981 = vand.u32 %v2980, 4294901760
    %v2982 = vsub.f32 %v2980, %v2981
    %v2983 = vand.u32 %v2982, 4294901760
    %2984 = vmatprep.mubr.f32.mxu0 %v2983
    %v2985 = vand.u32 %v2791, 4294901760
    %v2986 = vsub.f32 %v2791, %v2985
    %v2987 = vand.u32 %v2986, 4294901760
    %v2988 = vsub.f32 %v2986, %v2987
    %v2989 = vand.u32 %v2988, 4294901760
    %2990 = vmatmul.mubr.f32.gmra.mrb[0].mxu0 %v2989
    %v2991 = vpop.f32.mrb[0].mxu0
    %v2992 = vadd.f32 %v2848, %v2991
    %v2993 = vpop.f32.mrb[0].mxu0
    %v2994 = vadd.f32 %v2852, %v2993
    %v2995 = vand.u32 %v2859, 4294901760
    %v2996 = vsub.f32 %v2859, %v2995
    %v2997 = vand.u32 %v2996, 4294901760
    %v2998 = vsub.f32 %v2996, %v2997
    %v2999 = vand.u32 %v2998, 4294901760
    %3000 = vmatprep.mubr.f32.mxu0 %v2999
    %v3001 = vand.u32 %v2792, 4294901760
    %v3002 = vsub.f32 %v2792, %v3001
    %v3003 = vand.u32 %v3002, 4294901760
    %v3004 = vsub.f32 %v3002, %v3003
    %v3005 = vand.u32 %v3004, 4294901760
    %3006 = vmatmul.mubr.f32.gmra.mrb[0].mxu0 %v3005
    %v3007 = vpop.f32.mrb[0].mxu0
    %v3008 = vadd.f32 %v2848, %v3007
    %v3009 = vpop.f32.mrb[0].mxu0
    %v3010 = vadd.f32 %v2852, %v3009
    %v3011 = vand.u32 %v2862, 4294901760
    %v3012 = vsub.f32 %v2862, %v3011
    %v3013 = vand.u32 %v3012, 4294901760
    %v3014 = vsub.f32 %v3012, %v3013
    %v3015 = vand.u32 %v3014, 4294901760
    %3016 = vmatprep.mubr.f32.mxu0 %v3015
    %v3017 = vand.u32 %v2793, 4294901760
    %v3018 = vsub.f32 %v2793, %v3017
    %v3019 = vand.u32 %v3018, 4294901760
    %v3020 = vsub.f32 %v3018, %v3019
    %v3021 = vand.u32 %v3020, 4294901760
    %3022 = vmatmul.mubr.f32.gmra.mrb[0].mxu0 %v3021
    %v3023 = vpop.f32.mrb[0].mxu0
    %v3024 = vadd.f32 %v2848, %v3023
    %v3025 = vpop.f32.mrb[0].mxu0
    %v3026 = vadd.f32 %v2852, %v3025
    %v3027 = vand.u32 %v2865, 4294901760
    %v3028 = vsub.f32 %v2865, %v3027
    %v3029 = vand.u32 %v3028, 4294901760
    %v3030 = vsub.f32 %v3028, %v3029
    %v3031 = vand.u32 %v3030, 4294901760
    %3032 = vmatprep.mubr.f32.mxu0 %v3031
    %v3033 = vand.u32 %v2794, 4294901760
    %v3034 = vsub.f32 %v2794, %v3033
    %v3035 = vand.u32 %v3034, 4294901760
    %v3036 = vsub.f32 %v3034, %v3035
    %v3037 = vand.u32 %v3036, 4294901760
    %3038 = vmatmul.mubr.f32.gmra.mrb[0].mxu0 %v3037
    %v3039 = vpop.f32.mrb[0].mxu0
    %v3040 = vadd.f32 %v2848, %v3039
    %v3041 = vpop.f32.mrb[0].mxu0
    %v3042 = vadd.f32 %v2852, %v3041
    %3043 = vdwg.mxu0
    %v3044 = vand.u32 %v2796, 4294901760
    %v3045 = vsub.f32 %v2796, %v3044
    %v3046 = vand.u32 %v3045, 4294901760
    %v3047 = vsub.f32 %v3045, %v3046
    %v3048 = vand.u32 %v3047, 4294901760
    %3049 = vmatprep.subr.mxu0 %v3048
    %v3050 = vand.u32 %v2795, 4294901760
    %v3051 = vsub.f32 %v2795, %v3050
    %v3052 = vand.u32 %v3051, 4294901760
    %v3053 = vsub.f32 %v3051, %v3052
    %v3054 = vand.u32 %v3053, 4294901760
    %3055 = vmatpush1.msra.mxu0 %v3054
    %v3056 = vand.u32 %v2798, 4294901760
    %v3057 = vsub.f32 %v2798, %v3056
    %v3058 = vand.u32 %v3057, 4294901760
    %v3059 = vsub.f32 %v3057, %v3058
    %v3060 = vand.u32 %v3059, 4294901760
    %3061 = vmatprep.subr.mxu0 %v3060
    %v3062 = vand.u32 %v2797, 4294901760
    %v3063 = vsub.f32 %v2797, %v3062
    %v3064 = vand.u32 %v3063, 4294901760
    %v3065 = vsub.f32 %v3063, %v3064
    %v3066 = vand.u32 %v3065, 4294901760
    %3067 = vmatpush1.msra.mxu0 %v3066
    %v3068 = vand.u32 %v2800, 4294901760
    %v3069 = vsub.f32 %v2800, %v3068
    %v3070 = vand.u32 %v3069, 4294901760
    %v3071 = vsub.f32 %v3069, %v3070
    %v3072 = vand.u32 %v3071, 4294901760
    %3073 = vmatprep.subr.mxu0 %v3072
    %v3074 = vand.u32 %v2799, 4294901760
    %v3075 = vsub.f32 %v2799, %v3074
    %v3076 = vand.u32 %v3075, 4294901760
    %v3077 = vsub.f32 %v3075, %v3076
    %v3078 = vand.u32 %v3077, 4294901760
    %3079 = vmatpush1.msra.mxu0 %v3078
    %v3080 = vand.u32 %v2802, 4294901760
    %v3081 = vsub.f32 %v2802, %v3080
    %v3082 = vand.u32 %v3081, 4294901760
    %v3083 = vsub.f32 %v3081, %v3082
    %v3084 = vand.u32 %v3083, 4294901760
    %3085 = vmatprep.subr.mxu0 %v3084
    %v3086 = vand.u32 %v2801, 4294901760
    %v3087 = vsub.f32 %v2801, %v3086
    %v3088 = vand.u32 %v3087, 4294901760
    %v3089 = vsub.f32 %v3087, %v3088
    %v3090 = vand.u32 %v3089, 4294901760
    %3091 = vmatpush1.msra.mxu0 %v3090
    %v3092 = vand.u32 %v2804, 4294901760
    %v3093 = vsub.f32 %v2804, %v3092
    %v3094 = vand.u32 %v3093, 4294901760
    %v3095 = vsub.f32 %v3093, %v3094
    %v3096 = vand.u32 %v3095, 4294901760
    %3097 = vmatprep.subr.mxu0 %v3096
    %v3098 = vand.u32 %v2803, 4294901760
    %v3099 = vsub.f32 %v2803, %v3098
    %v3100 = vand.u32 %v3099, 4294901760
    %v3101 = vsub.f32 %v3099, %v3100
    %v3102 = vand.u32 %v3101, 4294901760
    %3103 = vmatpush1.msra.mxu0 %v3102
    %v3104 = vand.u32 %v2806, 4294901760
    %v3105 = vsub.f32 %v2806, %v3104
    %v3106 = vand.u32 %v3105, 4294901760
    %v3107 = vsub.f32 %v3105, %v3106
    %v3108 = vand.u32 %v3107, 4294901760
    %3109 = vmatprep.subr.mxu0 %v3108
    %v3110 = vand.u32 %v2805, 4294901760
    %v3111 = vsub.f32 %v2805, %v3110
    %v3112 = vand.u32 %v3111, 4294901760
    %v3113 = vsub.f32 %v3111, %v3112
    %v3114 = vand.u32 %v3113, 4294901760
    %3115 = vmatpush1.msra.mxu0 %v3114
    %v3116 = vand.u32 %v2808, 4294901760
    %v3117 = vsub.f32 %v2808, %v3116
    %v3118 = vand.u32 %v3117, 4294901760
    %v3119 = vsub.f32 %v3117, %v3118
    %v3120 = vand.u32 %v3119, 4294901760
    %3121 = vmatprep.subr.mxu0 %v3120
    %v3122 = vand.u32 %v2807, 4294901760
    %v3123 = vsub.f32 %v2807, %v3122
    %v3124 = vand.u32 %v3123, 4294901760
    %v3125 = vsub.f32 %v3123, %v3124
    %v3126 = vand.u32 %v3125, 4294901760
    %3127 = vmatpush1.msra.mxu0 %v3126
    %v3128 = vand.u32 %v2810, 4294901760
    %v3129 = vsub.f32 %v2810, %v3128
    %v3130 = vand.u32 %v3129, 4294901760
    %v3131 = vsub.f32 %v3129, %v3130
    %v3132 = vand.u32 %v3131, 4294901760
    %3133 = vmatprep.subr.mxu0 %v3132
    %v3134 = vand.u32 %v2809, 4294901760
    %v3135 = vsub.f32 %v2809, %v3134
    %v3136 = vand.u32 %v3135, 4294901760
    %v3137 = vsub.f32 %v3135, %v3136
    %v3138 = vand.u32 %v3137, 4294901760
    %3139 = vmatpush1.msra.mxu0 %v3138
    %v3140 = vand.u32 %v2812, 4294901760
    %v3141 = vsub.f32 %v2812, %v3140
    %v3142 = vand.u32 %v3141, 4294901760
    %v3143 = vsub.f32 %v3141, %v3142
    %v3144 = vand.u32 %v3143, 4294901760
    %3145 = vmatprep.subr.mxu0 %v3144
    %v3146 = vand.u32 %v2811, 4294901760
    %v3147 = vsub.f32 %v2811, %v3146
    %v3148 = vand.u32 %v3147, 4294901760
    %v3149 = vsub.f32 %v3147, %v3148
    %v3150 = vand.u32 %v3149, 4294901760
    %3151 = vmatpush1.msra.mxu0 %v3150
    %v3152 = vand.u32 %v2814, 4294901760
    %v3153 = vsub.f32 %v2814, %v3152
    %v3154 = vand.u32 %v3153, 4294901760
    %v3155 = vsub.f32 %v3153, %v3154
    %v3156 = vand.u32 %v3155, 4294901760
    %3157 = vmatprep.subr.mxu0 %v3156
    %v3158 = vand.u32 %v2813, 4294901760
    %v3159 = vsub.f32 %v2813, %v3158
    %v3160 = vand.u32 %v3159, 4294901760
    %v3161 = vsub.f32 %v3159, %v3160
    %v3162 = vand.u32 %v3161, 4294901760
    %3163 = vmatpush1.msra.mxu0 %v3162
    %v3164 = vand.u32 %v2816, 4294901760
    %v3165 = vsub.f32 %v2816, %v3164
    %v3166 = vand.u32 %v3165, 4294901760
    %v3167 = vsub.f32 %v3165, %v3166
    %v3168 = vand.u32 %v3167, 4294901760
    %3169 = vmatprep.subr.mxu0 %v3168
    %v3170 = vand.u32 %v2815, 4294901760
    %v3171 = vsub.f32 %v2815, %v3170
    %v3172 = vand.u32 %v3171, 4294901760
    %v3173 = vsub.f32 %v3171, %v3172
    %v3174 = vand.u32 %v3173, 4294901760
    %3175 = vmatpush1.msra.mxu0 %v3174
    %v3176 = vand.u32 %v2818, 4294901760
    %v3177 = vsub.f32 %v2818, %v3176
    %v3178 = vand.u32 %v3177, 4294901760
    %v3179 = vsub.f32 %v3177, %v3178
    %v3180 = vand.u32 %v3179, 4294901760
    %3181 = vmatprep.subr.mxu0 %v3180
    %v3182 = vand.u32 %v2817, 4294901760
    %v3183 = vsub.f32 %v2817, %v3182
    %v3184 = vand.u32 %v3183, 4294901760
    %v3185 = vsub.f32 %v3183, %v3184
    %v3186 = vand.u32 %v3185, 4294901760
    %3187 = vmatpush1.msra.mxu0 %v3186
    %v3188 = vand.u32 %v2820, 4294901760
    %v3189 = vsub.f32 %v2820, %v3188
    %v3190 = vand.u32 %v3189, 4294901760
    %v3191 = vsub.f32 %v3189, %v3190
    %v3192 = vand.u32 %v3191, 4294901760
    %3193 = vmatprep.subr.mxu0 %v3192
    %v3194 = vand.u32 %v2819, 4294901760
    %v3195 = vsub.f32 %v2819, %v3194
    %v3196 = vand.u32 %v3195, 4294901760
    %v3197 = vsub.f32 %v3195, %v3196
    %v3198 = vand.u32 %v3197, 4294901760
    %3199 = vmatpush1.msra.mxu0 %v3198
    %v3200 = vand.u32 %v2822, 4294901760
    %v3201 = vsub.f32 %v2822, %v3200
    %v3202 = vand.u32 %v3201, 4294901760
    %v3203 = vsub.f32 %v3201, %v3202
    %v3204 = vand.u32 %v3203, 4294901760
    %3205 = vmatprep.subr.mxu0 %v3204
    %v3206 = vand.u32 %v2821, 4294901760
    %v3207 = vsub.f32 %v2821, %v3206
    %v3208 = vand.u32 %v3207, 4294901760
    %v3209 = vsub.f32 %v3207, %v3208
    %v3210 = vand.u32 %v3209, 4294901760
    %3211 = vmatpush1.msra.mxu0 %v3210
    %v3212 = vand.u32 %v2824, 4294901760
    %v3213 = vsub.f32 %v2824, %v3212
    %v3214 = vand.u32 %v3213, 4294901760
    %v3215 = vsub.f32 %v3213, %v3214
    %v3216 = vand.u32 %v3215, 4294901760
    %3217 = vmatprep.subr.mxu0 %v3216
    %v3218 = vand.u32 %v2823, 4294901760
    %v3219 = vsub.f32 %v2823, %v3218
    %v3220 = vand.u32 %v3219, 4294901760
    %v3221 = vsub.f32 %v3219, %v3220
    %v3222 = vand.u32 %v3221, 4294901760
    %3223 = vmatpush1.msra.mxu0 %v3222
    %v3224 = vand.u32 %v2826, 4294901760
    %v3225 = vsub.f32 %v2826, %v3224
    %v3226 = vand.u32 %v3225, 4294901760
    %v3227 = vsub.f32 %v3225, %v3226
    %v3228 = vand.u32 %v3227, 4294901760
    %3229 = vmatprep.subr.mxu0 %v3228
    %v3230 = vand.u32 %v2825, 4294901760
    %v3231 = vsub.f32 %v2825, %v3230
    %v3232 = vand.u32 %v3231, 4294901760
    %v3233 = vsub.f32 %v3231, %v3232
    %v3234 = vand.u32 %v3233, 4294901760
    %3235 = vmatpush1.msra.mxu0 %v3234
    %v3236 = vand.u32 %v2828, 4294901760
    %v3237 = vsub.f32 %v2828, %v3236
    %v3238 = vand.u32 %v3237, 4294901760
    %v3239 = vsub.f32 %v3237, %v3238
    %v3240 = vand.u32 %v3239, 4294901760
    %3241 = vmatprep.subr.mxu0 %v3240
    %v3242 = vand.u32 %v2827, 4294901760
    %v3243 = vsub.f32 %v2827, %v3242
    %v3244 = vand.u32 %v3243, 4294901760
    %v3245 = vsub.f32 %v3243, %v3244
    %v3246 = vand.u32 %v3245, 4294901760
    %3247 = vmatpush1.msra.mxu0 %v3246
    %v3248 = vand.u32 %v2830, 4294901760
    %v3249 = vsub.f32 %v2830, %v3248
    %v3250 = vand.u32 %v3249, 4294901760
    %v3251 = vsub.f32 %v3249, %v3250
    %v3252 = vand.u32 %v3251, 4294901760
    %3253 = vmatprep.subr.mxu0 %v3252
    %v3254 = vand.u32 %v2829, 4294901760
    %v3255 = vsub.f32 %v2829, %v3254
    %v3256 = vand.u32 %v3255, 4294901760
    %v3257 = vsub.f32 %v3255, %v3256
    %v3258 = vand.u32 %v3257, 4294901760
    %3259 = vmatpush1.msra.mxu0 %v3258
    %v3260 = vand.u32 %v2832, 4294901760
    %v3261 = vsub.f32 %v2832, %v3260
    %v3262 = vand.u32 %v3261, 4294901760
    %v3263 = vsub.f32 %v3261, %v3262
    %v3264 = vand.u32 %v3263, 4294901760
    %3265 = vmatprep.subr.mxu0 %v3264
    %v3266 = vand.u32 %v2831, 4294901760
    %v3267 = vsub.f32 %v2831, %v3266
    %v3268 = vand.u32 %v3267, 4294901760
    %v3269 = vsub.f32 %v3267, %v3268
    %v3270 = vand.u32 %v3269, 4294901760
    %3271 = vmatpush1.msra.mxu0 %v3270
    %v3272 = vand.u32 %v2834, 4294901760
    %v3273 = vsub.f32 %v2834, %v3272
    %v3274 = vand.u32 %v3273, 4294901760
    %v3275 = vsub.f32 %v3273, %v3274
    %v3276 = vand.u32 %v3275, 4294901760
    %3277 = vmatprep.subr.mxu0 %v3276
    %v3278 = vand.u32 %v2833, 4294901760
    %v3279 = vsub.f32 %v2833, %v3278
    %v3280 = vand.u32 %v3279, 4294901760
    %v3281 = vsub.f32 %v3279, %v3280
    %v3282 = vand.u32 %v3281, 4294901760
    %3283 = vmatpush1.msra.mxu0 %v3282
    %v3284 = vand.u32 %v2836, 4294901760
    %v3285 = vsub.f32 %v2836, %v3284
    %v3286 = vand.u32 %v3285, 4294901760
    %v3287 = vsub.f32 %v3285, %v3286
    %v3288 = vand.u32 %v3287, 4294901760
    %3289 = vmatprep.subr.mxu0 %v3288
    %v3290 = vand.u32 %v2835, 4294901760
    %v3291 = vsub.f32 %v2835, %v3290
    %v3292 = vand.u32 %v3291, 4294901760
    %v3293 = vsub.f32 %v3291, %v3292
    %v3294 = vand.u32 %v3293, 4294901760
    %3295 = vmatpush1.msra.mxu0 %v3294
    %v3296 = vand.u32 %v2838, 4294901760
    %v3297 = vsub.f32 %v2838, %v3296
    %v3298 = vand.u32 %v3297, 4294901760
    %v3299 = vsub.f32 %v3297, %v3298
    %v3300 = vand.u32 %v3299, 4294901760
    %3301 = vmatprep.subr.mxu0 %v3300
    %v3302 = vand.u32 %v2837, 4294901760
    %v3303 = vsub.f32 %v2837, %v3302
    %v3304 = vand.u32 %v3303, 4294901760
    %v3305 = vsub.f32 %v3303, %v3304
    %v3306 = vand.u32 %v3305, 4294901760
    %3307 = vmatpush1.msra.mxu0 %v3306
    %v3308 = vand.u32 %v2840, 4294901760
    %v3309 = vsub.f32 %v2840, %v3308
    %v3310 = vand.u32 %v3309, 4294901760
    %v3311 = vsub.f32 %v3309, %v3310
    %v3312 = vand.u32 %v3311, 4294901760
    %3313 = vmatprep.subr.mxu0 %v3312
    %v3314 = vand.u32 %v2839, 4294901760
    %v3315 = vsub.f32 %v2839, %v3314
    %v3316 = vand.u32 %v3315, 4294901760
    %v3317 = vsub.f32 %v3315, %v3316
    %v3318 = vand.u32 %v3317, 4294901760
    %3319 = vmatpush1.msra.mxu0 %v3318
    %v3320 = vand.u32 %v2842, 4294901760
    %v3321 = vsub.f32 %v2842, %v3320
    %v3322 = vand.u32 %v3321, 4294901760
    %v3323 = vsub.f32 %v3321, %v3322
    %v3324 = vand.u32 %v3323, 4294901760
    %3325 = vmatprep.subr.mxu0 %v3324
    %v3326 = vand.u32 %v2841, 4294901760
    %v3327 = vsub.f32 %v2841, %v3326
    %v3328 = vand.u32 %v3327, 4294901760
    %v3329 = vsub.f32 %v3327, %v3328
    %v3330 = vand.u32 %v3329, 4294901760
    %3331 = vmatpush1.msra.mxu0 %v3330
    %3332 = vmatprep.subr.mxu0 0.0
    %3333 = vmatpush1.msra.mxu0 0.0
    %3334 = vmatprep.subr.mxu0 0.0
    %3335 = vmatpush1.msra.mxu0 0.0
    %3336 = vmatprep.subr.mxu0 0.0
    %3337 = vmatpush1.msra.mxu0 0.0
    %3338 = vmatprep.subr.mxu0 0.0
    %3339 = vmatpush1.msra.mxu0 0.0
    %3340 = vmatprep.subr.mxu0 0.0
    %3341 = vmatpush1.msra.mxu0 0.0
    %3342 = vmatprep.subr.mxu0 0.0
    %3343 = vmatpush1.msra.mxu0 0.0
    %3344 = vmatprep.subr.mxu0 0.0
    %3345 = vmatpush1.msra.mxu0 0.0
    %3346 = vmatprep.subr.mxu0 0.0
    %3347 = vmatpush1.msra.mxu0 0.0
    %v3348 = vand.u32 %v2856, 4294901760
    %3349 = vmatprep.mubr.f32.mxu0 %v3348
    %v3350 = vand.u32 %v2791, 4294901760
    %3351 = vmatmul.mubr.f32.gmra.mrb[0].mxu0 %v3350
    %v3352 = vpop.f32.mrb[0].mxu0
    %v3353 = vadd.f32 %v2992, %v3352
    %v3354 = vpop.f32.mrb[0].mxu0
    %v3355 = vadd.f32 %v2994, %v3354
    %v3356 = vand.u32 %v2859, 4294901760
    %3357 = vmatprep.mubr.f32.mxu0 %v3356
    %v3358 = vand.u32 %v2792, 4294901760
    %3359 = vmatmul.mubr.f32.gmra.mrb[0].mxu0 %v3358
    %v3360 = vpop.f32.mrb[0].mxu0
    %v3361 = vadd.f32 %v3008, %v3360
    %v3362 = vpop.f32.mrb[0].mxu0
    %v3363 = vadd.f32 %v3010, %v3362
    %v3364 = vand.u32 %v2862, 4294901760
    %3365 = vmatprep.mubr.f32.mxu0 %v3364
    %v3366 = vand.u32 %v2793, 4294901760
    %3367 = vmatmul.mubr.f32.gmra.mrb[0].mxu0 %v3366
    %v3368 = vpop.f32.mrb[0].mxu0
    %v3369 = vadd.f32 %v3024, %v3368
    %v3370 = vpop.f32.mrb[0].mxu0
    %v3371 = vadd.f32 %v3026, %v3370
    %v3372 = vand.u32 %v2865, 4294901760
    %3373 = vmatprep.mubr.f32.mxu0 %v3372
    %v3374 = vand.u32 %v2794, 4294901760
    %3375 = vmatmul.mubr.f32.gmra.mrb[0].mxu0 %v3374
    %v3376 = vpop.f32.mrb[0].mxu0
    %v3377 = vadd.f32 %v3040, %v3376
    %v3378 = vpop.f32.mrb[0].mxu0
    %v3379 = vadd.f32 %v3042, %v3378
    %3380 = vdwg.mxu0
    %v3381 = vand.u32 %v2796, 4294901760
    %v3382 = vsub.f32 %v2796, %v3381
    %3383 = vmatprep.subr.mxu0 %v3382
    %v3384 = vand.u32 %v2795, 4294901760
    %v3385 = vsub.f32 %v2795, %v3384
    %3386 = vmatpush1.msra.mxu0 %v3385
    %v3387 = vand.u32 %v2798, 4294901760
    %v3388 = vsub.f32 %v2798, %v3387
    %3389 = vmatprep.subr.mxu0 %v3388
    %v3390 = vand.u32 %v2797, 4294901760
    %v3391 = vsub.f32 %v2797, %v3390
    %3392 = vmatpush1.msra.mxu0 %v3391
    %v3393 = vand.u32 %v2800, 4294901760
    %v3394 = vsub.f32 %v2800, %v3393
    %3395 = vmatprep.subr.mxu0 %v3394
    %v3396 = vand.u32 %v2799, 4294901760
    %v3397 = vsub.f32 %v2799, %v3396
    %3398 = vmatpush1.msra.mxu0 %v3397
    %v3399 = vand.u32 %v2802, 4294901760
    %v3400 = vsub.f32 %v2802, %v3399
    %3401 = vmatprep.subr.mxu0 %v3400
    %v3402 = vand.u32 %v2801, 4294901760
    %v3403 = vsub.f32 %v2801, %v3402
    %3404 = vmatpush1.msra.mxu0 %v3403
    %v3405 = vand.u32 %v2804, 4294901760
    %v3406 = vsub.f32 %v2804, %v3405
    %3407 = vmatprep.subr.mxu0 %v3406
    %v3408 = vand.u32 %v2803, 4294901760
    %v3409 = vsub.f32 %v2803, %v3408
    %3410 = vmatpush1.msra.mxu0 %v3409
    %v3411 = vand.u32 %v2806, 4294901760
    %v3412 = vsub.f32 %v2806, %v3411
    %3413 = vmatprep.subr.mxu0 %v3412
    %v3414 = vand.u32 %v2805, 4294901760
    %v3415 = vsub.f32 %v2805, %v3414
    %3416 = vmatpush1.msra.mxu0 %v3415
    %v3417 = vand.u32 %v2808, 4294901760
    %v3418 = vsub.f32 %v2808, %v3417
    %3419 = vmatprep.subr.mxu0 %v3418
    %v3420 = vand.u32 %v2807, 4294901760
    %v3421 = vsub.f32 %v2807, %v3420
    %3422 = vmatpush1.msra.mxu0 %v3421
    %v3423 = vand.u32 %v2810, 4294901760
    %v3424 = vsub.f32 %v2810, %v3423
    %3425 = vmatprep.subr.mxu0 %v3424
    %v3426 = vand.u32 %v2809, 4294901760
    %v3427 = vsub.f32 %v2809, %v3426
    %3428 = vmatpush1.msra.mxu0 %v3427
    %v3429 = vand.u32 %v2812, 4294901760
    %v3430 = vsub.f32 %v2812, %v3429
    %3431 = vmatprep.subr.mxu0 %v3430
    %v3432 = vand.u32 %v2811, 4294901760
    %v3433 = vsub.f32 %v2811, %v3432
    %3434 = vmatpush1.msra.mxu0 %v3433
    %v3435 = vand.u32 %v2814, 4294901760
    %v3436 = vsub.f32 %v2814, %v3435
    %3437 = vmatprep.subr.mxu0 %v3436
    %v3438 = vand.u32 %v2813, 4294901760
    %v3439 = vsub.f32 %v2813, %v3438
    %3440 = vmatpush1.msra.mxu0 %v3439
    %v3441 = vand.u32 %v2816, 4294901760
    %v3442 = vsub.f32 %v2816, %v3441
    %3443 = vmatprep.subr.mxu0 %v3442
    %v3444 = vand.u32 %v2815, 4294901760
    %v3445 = vsub.f32 %v2815, %v3444
    %3446 = vmatpush1.msra.mxu0 %v3445
    %v3447 = vand.u32 %v2818, 4294901760
    %v3448 = vsub.f32 %v2818, %v3447
    %3449 = vmatprep.subr.mxu0 %v3448
    %v3450 = vand.u32 %v2817, 4294901760
    %v3451 = vsub.f32 %v2817, %v3450
    %3452 = vmatpush1.msra.mxu0 %v3451
    %v3453 = vand.u32 %v2820, 4294901760
    %v3454 = vsub.f32 %v2820, %v3453
    %3455 = vmatprep.subr.mxu0 %v3454
    %v3456 = vand.u32 %v2819, 4294901760
    %v3457 = vsub.f32 %v2819, %v3456
    %3458 = vmatpush1.msra.mxu0 %v3457
    %v3459 = vand.u32 %v2822, 4294901760
    %v3460 = vsub.f32 %v2822, %v3459
    %3461 = vmatprep.subr.mxu0 %v3460
    %v3462 = vand.u32 %v2821, 4294901760
    %v3463 = vsub.f32 %v2821, %v3462
    %3464 = vmatpush1.msra.mxu0 %v3463
    %v3465 = vand.u32 %v2824, 4294901760
    %v3466 = vsub.f32 %v2824, %v3465
    %3467 = vmatprep.subr.mxu0 %v3466
    %v3468 = vand.u32 %v2823, 4294901760
    %v3469 = vsub.f32 %v2823, %v3468
    %3470 = vmatpush1.msra.mxu0 %v3469
    %v3471 = vand.u32 %v2826, 4294901760
    %v3472 = vsub.f32 %v2826, %v3471
    %3473 = vmatprep.subr.mxu0 %v3472
    %v3474 = vand.u32 %v2825, 4294901760
    %v3475 = vsub.f32 %v2825, %v3474
    %3476 = vmatpush1.msra.mxu0 %v3475
    %v3477 = vand.u32 %v2828, 4294901760
    %v3478 = vsub.f32 %v2828, %v3477
    %3479 = vmatprep.subr.mxu0 %v3478
    %v3480 = vand.u32 %v2827, 4294901760
    %v3481 = vsub.f32 %v2827, %v3480
    %3482 = vmatpush1.msra.mxu0 %v3481
    %v3483 = vand.u32 %v2830, 4294901760
    %v3484 = vsub.f32 %v2830, %v3483
    %3485 = vmatprep.subr.mxu0 %v3484
    %v3486 = vand.u32 %v2829, 4294901760
    %v3487 = vsub.f32 %v2829, %v3486
    %3488 = vmatpush1.msra.mxu0 %v3487
    %v3489 = vand.u32 %v2832, 4294901760
    %v3490 = vsub.f32 %v2832, %v3489
    %3491 = vmatprep.subr.mxu0 %v3490
    %v3492 = vand.u32 %v2831, 4294901760
    %v3493 = vsub.f32 %v2831, %v3492
    %3494 = vmatpush1.msra.mxu0 %v3493
    %v3495 = vand.u32 %v2834, 4294901760
    %v3496 = vsub.f32 %v2834, %v3495
    %3497 = vmatprep.subr.mxu0 %v3496
    %v3498 = vand.u32 %v2833, 4294901760
    %v3499 = vsub.f32 %v2833, %v3498
    %3500 = vmatpush1.msra.mxu0 %v3499
    %v3501 = vand.u32 %v2836, 4294901760
    %v3502 = vsub.f32 %v2836, %v3501
    %3503 = vmatprep.subr.mxu0 %v3502
    %v3504 = vand.u32 %v2835, 4294901760
    %v3505 = vsub.f32 %v2835, %v3504
    %3506 = vmatpush1.msra.mxu0 %v3505
    %v3507 = vand.u32 %v2838, 4294901760
    %v3508 = vsub.f32 %v2838, %v3507
    %3509 = vmatprep.subr.mxu0 %v3508
    %v3510 = vand.u32 %v2837, 4294901760
    %v3511 = vsub.f32 %v2837, %v3510
    %3512 = vmatpush1.msra.mxu0 %v3511
    %v3513 = vand.u32 %v2840, 4294901760
    %v3514 = vsub.f32 %v2840, %v3513
    %3515 = vmatprep.subr.mxu0 %v3514
    %v3516 = vand.u32 %v2839, 4294901760
    %v3517 = vsub.f32 %v2839, %v3516
    %3518 = vmatpush1.msra.mxu0 %v3517
    %v3519 = vand.u32 %v2842, 4294901760
    %v3520 = vsub.f32 %v2842, %v3519
    %3521 = vmatprep.subr.mxu0 %v3520
    %v3522 = vand.u32 %v2841, 4294901760
    %v3523 = vsub.f32 %v2841, %v3522
    %3524 = vmatpush1.msra.mxu0 %v3523
    %3525 = vmatprep.subr.mxu0 0.0
    %3526 = vmatpush1.msra.mxu0 0.0
    %3527 = vmatprep.subr.mxu0 0.0
    %3528 = vmatpush1.msra.mxu0 0.0
    %3529 = vmatprep.subr.mxu0 0.0
    %3530 = vmatpush1.msra.mxu0 0.0
    %3531 = vmatprep.subr.mxu0 0.0
    %3532 = vmatpush1.msra.mxu0 0.0
    %3533 = vmatprep.subr.mxu0 0.0
    %3534 = vmatpush1.msra.mxu0 0.0
    %3535 = vmatprep.subr.mxu0 0.0
    %3536 = vmatpush1.msra.mxu0 0.0
    %3537 = vmatprep.subr.mxu0 0.0
    %3538 = vmatpush1.msra.mxu0 0.0
    %3539 = vmatprep.subr.mxu0 0.0
    %3540 = vmatpush1.msra.mxu0 0.0
    %v3541 = vand.u32 %v2856, 4294901760
    %v3542 = vsub.f32 %v2856, %v3541
    %3543 = vmatprep.mubr.f32.mxu0 %v3542
    %v3544 = vand.u32 %v2791, 4294901760
    %v3545 = vsub.f32 %v2791, %v3544
    %3546 = vmatmul.mubr.f32.gmra.mrb[0].mxu0 %v3545
    %v3547 = vpop.f32.mrb[0].mxu0
    %v3548 = vadd.f32 %v3353, %v3547
    %v3549 = vpop.f32.mrb[0].mxu0
    %v3550 = vadd.f32 %v3355, %v3549
    %v3551 = vand.u32 %v2859, 4294901760
    %v3552 = vsub.f32 %v2859, %v3551
    %3553 = vmatprep.mubr.f32.mxu0 %v3552
    %v3554 = vand.u32 %v2792, 4294901760
    %v3555 = vsub.f32 %v2792, %v3554
    %3556 = vmatmul.mubr.f32.gmra.mrb[0].mxu0 %v3555
    %v3557 = vpop.f32.mrb[0].mxu0
    %v3558 = vadd.f32 %v3361, %v3557
    %v3559 = vpop.f32.mrb[0].mxu0
    %v3560 = vadd.f32 %v3363, %v3559
    %v3561 = vand.u32 %v2862, 4294901760
    %v3562 = vsub.f32 %v2862, %v3561
    %3563 = vmatprep.mubr.f32.mxu0 %v3562
    %v3564 = vand.u32 %v2793, 4294901760
    %v3565 = vsub.f32 %v2793, %v3564
    %3566 = vmatmul.mubr.f32.gmra.mrb[0].mxu0 %v3565
    %v3567 = vpop.f32.mrb[0].mxu0
    %v3568 = vadd.f32 %v3369, %v3567
    %v3569 = vpop.f32.mrb[0].mxu0
    %v3570 = vadd.f32 %v3371, %v3569
    %v3571 = vand.u32 %v2865, 4294901760
    %v3572 = vsub.f32 %v2865, %v3571
    %3573 = vmatprep.mubr.f32.mxu0 %v3572
    %v3574 = vand.u32 %v2794, 4294901760
    %v3575 = vsub.f32 %v2794, %v3574
    %3576 = vmatmul.mubr.f32.gmra.mrb[0].mxu0 %v3575
    %v3577 = vpop.f32.mrb[0].mxu0
    %v3578 = vadd.f32 %v3377, %v3577
    %v3579 = vpop.f32.mrb[0].mxu0
    %v3580 = vadd.f32 %v3379, %v3579
    %3581 = vdwg.mxu0
    %v3582 = vand.u32 %v2796, 4294901760
    %3583 = vmatprep.subr.mxu0 %v3582
    %v3584 = vand.u32 %v2795, 4294901760
    %3585 = vmatpush1.msra.mxu0 %v3584
    %v3586 = vand.u32 %v2798, 4294901760
    %3587 = vmatprep.subr.mxu0 %v3586
    %v3588 = vand.u32 %v2797, 4294901760
    %3589 = vmatpush1.msra.mxu0 %v3588
    %v3590 = vand.u32 %v2800, 4294901760
    %3591 = vmatprep.subr.mxu0 %v3590
    %v3592 = vand.u32 %v2799, 4294901760
    %3593 = vmatpush1.msra.mxu0 %v3592
    %v3594 = vand.u32 %v2802, 4294901760
    %3595 = vmatprep.subr.mxu0 %v3594
    %v3596 = vand.u32 %v2801, 4294901760
    %3597 = vmatpush1.msra.mxu0 %v3596
    %v3598 = vand.u32 %v2804, 4294901760
    %3599 = vmatprep.subr.mxu0 %v3598
    %v3600 = vand.u32 %v2803, 4294901760
    %3601 = vmatpush1.msra.mxu0 %v3600
    %v3602 = vand.u32 %v2806, 4294901760
    %3603 = vmatprep.subr.mxu0 %v3602
    %v3604 = vand.u32 %v2805, 4294901760
    %3605 = vmatpush1.msra.mxu0 %v3604
    %v3606 = vand.u32 %v2808, 4294901760
    %3607 = vmatprep.subr.mxu0 %v3606
    %v3608 = vand.u32 %v2807, 4294901760
    %3609 = vmatpush1.msra.mxu0 %v3608
    %v3610 = vand.u32 %v2810, 4294901760
    %3611 = vmatprep.subr.mxu0 %v3610
    %v3612 = vand.u32 %v2809, 4294901760
    %3613 = vmatpush1.msra.mxu0 %v3612
    %v3614 = vand.u32 %v2812, 4294901760
    %3615 = vmatprep.subr.mxu0 %v3614
    %v3616 = vand.u32 %v2811, 4294901760
    %3617 = vmatpush1.msra.mxu0 %v3616
    %v3618 = vand.u32 %v2814, 4294901760
    %3619 = vmatprep.subr.mxu0 %v3618
    %v3620 = vand.u32 %v2813, 4294901760
    %3621 = vmatpush1.msra.mxu0 %v3620
    %v3622 = vand.u32 %v2816, 4294901760
    %3623 = vmatprep.subr.mxu0 %v3622
    %v3624 = vand.u32 %v2815, 4294901760
    %3625 = vmatpush1.msra.mxu0 %v3624
    %v3626 = vand.u32 %v2818, 4294901760
    %3627 = vmatprep.subr.mxu0 %v3626
    %v3628 = vand.u32 %v2817, 4294901760
    %3629 = vmatpush1.msra.mxu0 %v3628
    %v3630 = vand.u32 %v2820, 4294901760
    %3631 = vmatprep.subr.mxu0 %v3630
    %v3632 = vand.u32 %v2819, 4294901760
    %3633 = vmatpush1.msra.mxu0 %v3632
    %v3634 = vand.u32 %v2822, 4294901760
    %3635 = vmatprep.subr.mxu0 %v3634
    %v3636 = vand.u32 %v2821, 4294901760
    %3637 = vmatpush1.msra.mxu0 %v3636
    %v3638 = vand.u32 %v2824, 4294901760
    %3639 = vmatprep.subr.mxu0 %v3638
    %v3640 = vand.u32 %v2823, 4294901760
    %3641 = vmatpush1.msra.mxu0 %v3640
    %v3642 = vand.u32 %v2826, 4294901760
    %3643 = vmatprep.subr.mxu0 %v3642
    %v3644 = vand.u32 %v2825, 4294901760
    %3645 = vmatpush1.msra.mxu0 %v3644
    %v3646 = vand.u32 %v2828, 4294901760
    %3647 = vmatprep.subr.mxu0 %v3646
    %v3648 = vand.u32 %v2827, 4294901760
    %3649 = vmatpush1.msra.mxu0 %v3648
    %v3650 = vand.u32 %v2830, 4294901760
    %3651 = vmatprep.subr.mxu0 %v3650
    %v3652 = vand.u32 %v2829, 4294901760
    %3653 = vmatpush1.msra.mxu0 %v3652
    %v3654 = vand.u32 %v2832, 4294901760
    %3655 = vmatprep.subr.mxu0 %v3654
    %v3656 = vand.u32 %v2831, 4294901760
    %3657 = vmatpush1.msra.mxu0 %v3656
    %v3658 = vand.u32 %v2834, 4294901760
    %3659 = vmatprep.subr.mxu0 %v3658
    %v3660 = vand.u32 %v2833, 4294901760
    %3661 = vmatpush1.msra.mxu0 %v3660
    %v3662 = vand.u32 %v2836, 4294901760
    %3663 = vmatprep.subr.mxu0 %v3662
    %v3664 = vand.u32 %v2835, 4294901760
    %3665 = vmatpush1.msra.mxu0 %v3664
    %v3666 = vand.u32 %v2838, 4294901760
    %3667 = vmatprep.subr.mxu0 %v3666
    %v3668 = vand.u32 %v2837, 4294901760
    %3669 = vmatpush1.msra.mxu0 %v3668
    %v3670 = vand.u32 %v2840, 4294901760
    %3671 = vmatprep.subr.mxu0 %v3670
    %v3672 = vand.u32 %v2839, 4294901760
    %3673 = vmatpush1.msra.mxu0 %v3672
    %v3674 = vand.u32 %v2842, 4294901760
    %3675 = vmatprep.subr.mxu0 %v3674
    %v3676 = vand.u32 %v2841, 4294901760
    %3677 = vmatpush1.msra.mxu0 %v3676
    %3678 = vmatprep.subr.mxu0 0.0
    %3679 = vmatpush1.msra.mxu0 0.0
    %3680 = vmatprep.subr.mxu0 0.0
    %3681 = vmatpush1.msra.mxu0 0.0
    %3682 = vmatprep.subr.mxu0 0.0
    %3683 = vmatpush1.msra.mxu0 0.0
    %3684 = vmatprep.subr.mxu0 0.0
    %3685 = vmatpush1.msra.mxu0 0.0
    %3686 = vmatprep.subr.mxu0 0.0
    %3687 = vmatpush1.msra.mxu0 0.0
    %3688 = vmatprep.subr.mxu0 0.0
    %3689 = vmatpush1.msra.mxu0 0.0
    %3690 = vmatprep.subr.mxu0 0.0
    %3691 = vmatpush1.msra.mxu0 0.0
    %3692 = vmatprep.subr.mxu0 0.0
    %3693 = vmatpush1.msra.mxu0 0.0
    %v3694 = vand.u32 %v2856, 4294901760
    %v3695 = vsub.f32 %v2856, %v3694
    %v3696 = vand.u32 %v3695, 4294901760
    %3697 = vmatprep.mubr.f32.mxu0 %v3696
    %v3698 = vand.u32 %v2791, 4294901760
    %v3699 = vsub.f32 %v2791, %v3698
    %v3700 = vand.u32 %v3699, 4294901760
    %3701 = vmatmul.mubr.f32.gmra.mrb[0].mxu0 %v3700
    %v3702 = vpop.f32.mrb[0].mxu0
    %v3703 = vadd.f32 %v3548, %v3702
    %v3704 = vpop.f32.mrb[0].mxu0
    %v3705 = vadd.f32 %v3550, %v3704
    %v3706 = vand.u32 %v2859, 4294901760
    %v3707 = vsub.f32 %v2859, %v3706
    %v3708 = vand.u32 %v3707, 4294901760
    %3709 = vmatprep.mubr.f32.mxu0 %v3708
    %v3710 = vand.u32 %v2792, 4294901760
    %v3711 = vsub.f32 %v2792, %v3710
    %v3712 = vand.u32 %v3711, 4294901760
    %3713 = vmatmul.mubr.f32.gmra.mrb[0].mxu0 %v3712
    %v3714 = vpop.f32.mrb[0].mxu0
    %v3715 = vadd.f32 %v3558, %v3714
    %v3716 = vpop.f32.mrb[0].mxu0
    %v3717 = vadd.f32 %v3560, %v3716
    %v3718 = vand.u32 %v2862, 4294901760
    %v3719 = vsub.f32 %v2862, %v3718
    %v3720 = vand.u32 %v3719, 4294901760
    %3721 = vmatprep.mubr.f32.mxu0 %v3720
    %v3722 = vand.u32 %v2793, 4294901760
    %v3723 = vsub.f32 %v2793, %v3722
    %v3724 = vand.u32 %v3723, 4294901760
    %3725 = vmatmul.mubr.f32.gmra.mrb[0].mxu0 %v3724
    %v3726 = vpop.f32.mrb[0].mxu0
    %v3727 = vadd.f32 %v3568, %v3726
    %v3728 = vpop.f32.mrb[0].mxu0
    %v3729 = vadd.f32 %v3570, %v3728
    %v3730 = vand.u32 %v2865, 4294901760
    %v3731 = vsub.f32 %v2865, %v3730
    %v3732 = vand.u32 %v3731, 4294901760
    %3733 = vmatprep.mubr.f32.mxu0 %v3732
    %v3734 = vand.u32 %v2794, 4294901760
    %v3735 = vsub.f32 %v2794, %v3734
    %v3736 = vand.u32 %v3735, 4294901760
    %3737 = vmatmul.mubr.f32.gmra.mrb[0].mxu0 %v3736
    %v3738 = vpop.f32.mrb[0].mxu0
    %v3739 = vadd.f32 %v3578, %v3738
    %v3740 = vpop.f32.mrb[0].mxu0
    %v3741 = vadd.f32 %v3580, %v3740
    %3742 = vdwg.mxu0
    %v3743 = vand.u32 %v2796, 4294901760
    %v3744 = vsub.f32 %v2796, %v3743
    %v3745 = vand.u32 %v3744, 4294901760
    %3746 = vmatprep.subr.mxu0 %v3745
    %v3747 = vand.u32 %v2795, 4294901760
    %v3748 = vsub.f32 %v2795, %v3747
    %v3749 = vand.u32 %v3748, 4294901760
    %3750 = vmatpush1.msra.mxu0 %v3749
    %v3751 = vand.u32 %v2798, 4294901760
    %v3752 = vsub.f32 %v2798, %v3751
    %v3753 = vand.u32 %v3752, 4294901760
    %3754 = vmatprep.subr.mxu0 %v3753
    %v3755 = vand.u32 %v2797, 4294901760
    %v3756 = vsub.f32 %v2797, %v3755
    %v3757 = vand.u32 %v3756, 4294901760
    %3758 = vmatpush1.msra.mxu0 %v3757
    %v3759 = vand.u32 %v2800, 4294901760
    %v3760 = vsub.f32 %v2800, %v3759
    %v3761 = vand.u32 %v3760, 4294901760
    %3762 = vmatprep.subr.mxu0 %v3761
    %v3763 = vand.u32 %v2799, 4294901760
    %v3764 = vsub.f32 %v2799, %v3763
    %v3765 = vand.u32 %v3764, 4294901760
    %3766 = vmatpush1.msra.mxu0 %v3765
    %v3767 = vand.u32 %v2802, 4294901760
    %v3768 = vsub.f32 %v2802, %v3767
    %v3769 = vand.u32 %v3768, 4294901760
    %3770 = vmatprep.subr.mxu0 %v3769
    %v3771 = vand.u32 %v2801, 4294901760
    %v3772 = vsub.f32 %v2801, %v3771
    %v3773 = vand.u32 %v3772, 4294901760
    %3774 = vmatpush1.msra.mxu0 %v3773
    %v3775 = vand.u32 %v2804, 4294901760
    %v3776 = vsub.f32 %v2804, %v3775
    %v3777 = vand.u32 %v3776, 4294901760
    %3778 = vmatprep.subr.mxu0 %v3777
    %v3779 = vand.u32 %v2803, 4294901760
    %v3780 = vsub.f32 %v2803, %v3779
    %v3781 = vand.u32 %v3780, 4294901760
    %3782 = vmatpush1.msra.mxu0 %v3781
    %v3783 = vand.u32 %v2806, 4294901760
    %v3784 = vsub.f32 %v2806, %v3783
    %v3785 = vand.u32 %v3784, 4294901760
    %3786 = vmatprep.subr.mxu0 %v3785
    %v3787 = vand.u32 %v2805, 4294901760
    %v3788 = vsub.f32 %v2805, %v3787
    %v3789 = vand.u32 %v3788, 4294901760
    %3790 = vmatpush1.msra.mxu0 %v3789
    %v3791 = vand.u32 %v2808, 4294901760
    %v3792 = vsub.f32 %v2808, %v3791
    %v3793 = vand.u32 %v3792, 4294901760
    %3794 = vmatprep.subr.mxu0 %v3793
    %v3795 = vand.u32 %v2807, 4294901760
    %v3796 = vsub.f32 %v2807, %v3795
    %v3797 = vand.u32 %v3796, 4294901760
    %3798 = vmatpush1.msra.mxu0 %v3797
    %v3799 = vand.u32 %v2810, 4294901760
    %v3800 = vsub.f32 %v2810, %v3799
    %v3801 = vand.u32 %v3800, 4294901760
    %3802 = vmatprep.subr.mxu0 %v3801
    %v3803 = vand.u32 %v2809, 4294901760
    %v3804 = vsub.f32 %v2809, %v3803
    %v3805 = vand.u32 %v3804, 4294901760
    %3806 = vmatpush1.msra.mxu0 %v3805
    %v3807 = vand.u32 %v2812, 4294901760
    %v3808 = vsub.f32 %v2812, %v3807
    %v3809 = vand.u32 %v3808, 4294901760
    %3810 = vmatprep.subr.mxu0 %v3809
    %v3811 = vand.u32 %v2811, 4294901760
    %v3812 = vsub.f32 %v2811, %v3811
    %v3813 = vand.u32 %v3812, 4294901760
    %3814 = vmatpush1.msra.mxu0 %v3813
    %v3815 = vand.u32 %v2814, 4294901760
    %v3816 = vsub.f32 %v2814, %v3815
    %v3817 = vand.u32 %v3816, 4294901760
    %3818 = vmatprep.subr.mxu0 %v3817
    %v3819 = vand.u32 %v2813, 4294901760
    %v3820 = vsub.f32 %v2813, %v3819
    %v3821 = vand.u32 %v3820, 4294901760
    %3822 = vmatpush1.msra.mxu0 %v3821
    %v3823 = vand.u32 %v2816, 4294901760
    %v3824 = vsub.f32 %v2816, %v3823
    %v3825 = vand.u32 %v3824, 4294901760
    %3826 = vmatprep.subr.mxu0 %v3825
    %v3827 = vand.u32 %v2815, 4294901760
    %v3828 = vsub.f32 %v2815, %v3827
    %v3829 = vand.u32 %v3828, 4294901760
    %3830 = vmatpush1.msra.mxu0 %v3829
    %v3831 = vand.u32 %v2818, 4294901760
    %v3832 = vsub.f32 %v2818, %v3831
    %v3833 = vand.u32 %v3832, 4294901760
    %3834 = vmatprep.subr.mxu0 %v3833
    %v3835 = vand.u32 %v2817, 4294901760
    %v3836 = vsub.f32 %v2817, %v3835
    %v3837 = vand.u32 %v3836, 4294901760
    %3838 = vmatpush1.msra.mxu0 %v3837
    %v3839 = vand.u32 %v2820, 4294901760
    %v3840 = vsub.f32 %v2820, %v3839
    %v3841 = vand.u32 %v3840, 4294901760
    %3842 = vmatprep.subr.mxu0 %v3841
    %v3843 = vand.u32 %v2819, 4294901760
    %v3844 = vsub.f32 %v2819, %v3843
    %v3845 = vand.u32 %v3844, 4294901760
    %3846 = vmatpush1.msra.mxu0 %v3845
    %v3847 = vand.u32 %v2822, 4294901760
    %v3848 = vsub.f32 %v2822, %v3847
    %v3849 = vand.u32 %v3848, 4294901760
    %3850 = vmatprep.subr.mxu0 %v3849
    %v3851 = vand.u32 %v2821, 4294901760
    %v3852 = vsub.f32 %v2821, %v3851
    %v3853 = vand.u32 %v3852, 4294901760
    %3854 = vmatpush1.msra.mxu0 %v3853
    %v3855 = vand.u32 %v2824, 4294901760
    %v3856 = vsub.f32 %v2824, %v3855
    %v3857 = vand.u32 %v3856, 4294901760
    %3858 = vmatprep.subr.mxu0 %v3857
    %v3859 = vand.u32 %v2823, 4294901760
    %v3860 = vsub.f32 %v2823, %v3859
    %v3861 = vand.u32 %v3860, 4294901760
    %3862 = vmatpush1.msra.mxu0 %v3861
    %v3863 = vand.u32 %v2826, 4294901760
    %v3864 = vsub.f32 %v2826, %v3863
    %v3865 = vand.u32 %v3864, 4294901760
    %3866 = vmatprep.subr.mxu0 %v3865
    %v3867 = vand.u32 %v2825, 4294901760
    %v3868 = vsub.f32 %v2825, %v3867
    %v3869 = vand.u32 %v3868, 4294901760
    %3870 = vmatpush1.msra.mxu0 %v3869
    %v3871 = vand.u32 %v2828, 4294901760
    %v3872 = vsub.f32 %v2828, %v3871
    %v3873 = vand.u32 %v3872, 4294901760
    %3874 = vmatprep.subr.mxu0 %v3873
    %v3875 = vand.u32 %v2827, 4294901760
    %v3876 = vsub.f32 %v2827, %v3875
    %v3877 = vand.u32 %v3876, 4294901760
    %3878 = vmatpush1.msra.mxu0 %v3877
    %v3879 = vand.u32 %v2830, 4294901760
    %v3880 = vsub.f32 %v2830, %v3879
    %v3881 = vand.u32 %v3880, 4294901760
    %3882 = vmatprep.subr.mxu0 %v3881
    %v3883 = vand.u32 %v2829, 4294901760
    %v3884 = vsub.f32 %v2829, %v3883
    %v3885 = vand.u32 %v3884, 4294901760
    %3886 = vmatpush1.msra.mxu0 %v3885
    %v3887 = vand.u32 %v2832, 4294901760
    %v3888 = vsub.f32 %v2832, %v3887
    %v3889 = vand.u32 %v3888, 4294901760
    %3890 = vmatprep.subr.mxu0 %v3889
    %v3891 = vand.u32 %v2831, 4294901760
    %v3892 = vsub.f32 %v2831, %v3891
    %v3893 = vand.u32 %v3892, 4294901760
    %3894 = vmatpush1.msra.mxu0 %v3893
    %v3895 = vand.u32 %v2834, 4294901760
    %v3896 = vsub.f32 %v2834, %v3895
    %v3897 = vand.u32 %v3896, 4294901760
    %3898 = vmatprep.subr.mxu0 %v3897
    %v3899 = vand.u32 %v2833, 4294901760
    %v3900 = vsub.f32 %v2833, %v3899
    %v3901 = vand.u32 %v3900, 4294901760
    %3902 = vmatpush1.msra.mxu0 %v3901
    %v3903 = vand.u32 %v2836, 4294901760
    %v3904 = vsub.f32 %v2836, %v3903
    %v3905 = vand.u32 %v3904, 4294901760
    %3906 = vmatprep.subr.mxu0 %v3905
    %v3907 = vand.u32 %v2835, 4294901760
    %v3908 = vsub.f32 %v2835, %v3907
    %v3909 = vand.u32 %v3908, 4294901760
    %3910 = vmatpush1.msra.mxu0 %v3909
    %v3911 = vand.u32 %v2838, 4294901760
    %v3912 = vsub.f32 %v2838, %v3911
    %v3913 = vand.u32 %v3912, 4294901760
    %3914 = vmatprep.subr.mxu0 %v3913
    %v3915 = vand.u32 %v2837, 4294901760
    %v3916 = vsub.f32 %v2837, %v3915
    %v3917 = vand.u32 %v3916, 4294901760
    %3918 = vmatpush1.msra.mxu0 %v3917
    %v3919 = vand.u32 %v2840, 4294901760
    %v3920 = vsub.f32 %v2840, %v3919
    %v3921 = vand.u32 %v3920, 4294901760
    %3922 = vmatprep.subr.mxu0 %v3921
    %v3923 = vand.u32 %v2839, 4294901760
    %v3924 = vsub.f32 %v2839, %v3923
    %v3925 = vand.u32 %v3924, 4294901760
    %3926 = vmatpush1.msra.mxu0 %v3925
    %v3927 = vand.u32 %v2842, 4294901760
    %v3928 = vsub.f32 %v2842, %v3927
    %v3929 = vand.u32 %v3928, 4294901760
    %3930 = vmatprep.subr.mxu0 %v3929
    %v3931 = vand.u32 %v2841, 4294901760
    %v3932 = vsub.f32 %v2841, %v3931
    %v3933 = vand.u32 %v3932, 4294901760
    %3934 = vmatpush1.msra.mxu0 %v3933
    %3935 = vmatprep.subr.mxu0 0.0
    %3936 = vmatpush1.msra.mxu0 0.0
    %3937 = vmatprep.subr.mxu0 0.0
    %3938 = vmatpush1.msra.mxu0 0.0
    %3939 = vmatprep.subr.mxu0 0.0
    %3940 = vmatpush1.msra.mxu0 0.0
    %3941 = vmatprep.subr.mxu0 0.0
    %3942 = vmatpush1.msra.mxu0 0.0
    %3943 = vmatprep.subr.mxu0 0.0
    %3944 = vmatpush1.msra.mxu0 0.0
    %3945 = vmatprep.subr.mxu0 0.0
    %3946 = vmatpush1.msra.mxu0 0.0
    %3947 = vmatprep.subr.mxu0 0.0
    %3948 = vmatpush1.msra.mxu0 0.0
    %3949 = vmatprep.subr.mxu0 0.0
    %3950 = vmatpush1.msra.mxu0 0.0
    %v3951 = vand.u32 %v2856, 4294901760
    %3952 = vmatprep.mubr.f32.mxu0 %v3951
    %v3953 = vand.u32 %v2791, 4294901760
    %3954 = vmatmul.mubr.f32.gmra.mrb[0].mxu0 %v3953
    %v3955 = vpop.f32.mrb[0].mxu0
    %v3956 = vadd.f32 %v3703, %v3955
    %v3957 = vpop.f32.mrb[0].mxu0
    %v3958 = vadd.f32 %v3705, %v3957
    %v3959 = vand.u32 %v2859, 4294901760
    %3960 = vmatprep.mubr.f32.mxu0 %v3959
    %v3961 = vand.u32 %v2792, 4294901760
    %3962 = vmatmul.mubr.f32.gmra.mrb[0].mxu0 %v3961
    %v3963 = vpop.f32.mrb[0].mxu0
    %v3964 = vadd.f32 %v3715, %v3963
    %v3965 = vpop.f32.mrb[0].mxu0
    %v3966 = vadd.f32 %v3717, %v3965
    %v3967 = vand.u32 %v2862, 4294901760
    %3968 = vmatprep.mubr.f32.mxu0 %v3967
    %v3969 = vand.u32 %v2793, 4294901760
    %3970 = vmatmul.mubr.f32.gmra.mrb[0].mxu0 %v3969
    %v3971 = vpop.f32.mrb[0].mxu0
    %v3972 = vadd.f32 %v3727, %v3971
    %v3973 = vpop.f32.mrb[0].mxu0
    %v3974 = vadd.f32 %v3729, %v3973
    %v3975 = vand.u32 %v2865, 4294901760
    %3976 = vmatprep.mubr.f32.mxu0 %v3975
    %v3977 = vand.u32 %v2794, 4294901760
    %3978 = vmatmul.mubr.f32.gmra.mrb[0].mxu0 %v3977
    %v3979 = vpop.f32.mrb[0].mxu0
    %v3980 = vadd.f32 %v3739, %v3979
    %v3981 = vpop.f32.mrb[0].mxu0
    %v3982 = vadd.f32 %v3741, %v3981
    %3983 = vdwg.mxu0
    %v3984 = vand.u32 %v2796, 4294901760
    %3985 = vmatprep.subr.mxu0 %v3984
    %v3986 = vand.u32 %v2795, 4294901760
    %3987 = vmatpush1.msra.mxu0 %v3986
    %v3988 = vand.u32 %v2798, 4294901760
    %3989 = vmatprep.subr.mxu0 %v3988
    %v3990 = vand.u32 %v2797, 4294901760
    %3991 = vmatpush1.msra.mxu0 %v3990
    %v3992 = vand.u32 %v2800, 4294901760
    %3993 = vmatprep.subr.mxu0 %v3992
    %v3994 = vand.u32 %v2799, 4294901760
    %3995 = vmatpush1.msra.mxu0 %v3994
    %v3996 = vand.u32 %v2802, 4294901760
    %3997 = vmatprep.subr.mxu0 %v3996
    %v3998 = vand.u32 %v2801, 4294901760
    %3999 = vmatpush1.msra.mxu0 %v3998
    %v4000 = vand.u32 %v2804, 4294901760
    %4001 = vmatprep.subr.mxu0 %v4000
    %v4002 = vand.u32 %v2803, 4294901760
    %4003 = vmatpush1.msra.mxu0 %v4002
    %v4004 = vand.u32 %v2806, 4294901760
    %4005 = vmatprep.subr.mxu0 %v4004
    %v4006 = vand.u32 %v2805, 4294901760
    %4007 = vmatpush1.msra.mxu0 %v4006
    %v4008 = vand.u32 %v2808, 4294901760
    %4009 = vmatprep.subr.mxu0 %v4008
    %v4010 = vand.u32 %v2807, 4294901760
    %4011 = vmatpush1.msra.mxu0 %v4010
    %v4012 = vand.u32 %v2810, 4294901760
    %4013 = vmatprep.subr.mxu0 %v4012
    %v4014 = vand.u32 %v2809, 4294901760
    %4015 = vmatpush1.msra.mxu0 %v4014
    %v4016 = vand.u32 %v2812, 4294901760
    %4017 = vmatprep.subr.mxu0 %v4016
    %v4018 = vand.u32 %v2811, 4294901760
    %4019 = vmatpush1.msra.mxu0 %v4018
    %v4020 = vand.u32 %v2814, 4294901760
    %4021 = vmatprep.subr.mxu0 %v4020
    %v4022 = vand.u32 %v2813, 4294901760
    %4023 = vmatpush1.msra.mxu0 %v4022
    %v4024 = vand.u32 %v2816, 4294901760
    %4025 = vmatprep.subr.mxu0 %v4024
    %v4026 = vand.u32 %v2815, 4294901760
    %4027 = vmatpush1.msra.mxu0 %v4026
    %v4028 = vand.u32 %v2818, 4294901760
    %4029 = vmatprep.subr.mxu0 %v4028
    %v4030 = vand.u32 %v2817, 4294901760
    %4031 = vmatpush1.msra.mxu0 %v4030
    %v4032 = vand.u32 %v2820, 4294901760
    %4033 = vmatprep.subr.mxu0 %v4032
    %v4034 = vand.u32 %v2819, 4294901760
    %4035 = vmatpush1.msra.mxu0 %v4034
    %v4036 = vand.u32 %v2822, 4294901760
    %4037 = vmatprep.subr.mxu0 %v4036
    %v4038 = vand.u32 %v2821, 4294901760
    %4039 = vmatpush1.msra.mxu0 %v4038
    %v4040 = vand.u32 %v2824, 4294901760
    %4041 = vmatprep.subr.mxu0 %v4040
    %v4042 = vand.u32 %v2823, 4294901760
    %4043 = vmatpush1.msra.mxu0 %v4042
    %v4044 = vand.u32 %v2826, 4294901760
    %4045 = vmatprep.subr.mxu0 %v4044
    %v4046 = vand.u32 %v2825, 4294901760
    %4047 = vmatpush1.msra.mxu0 %v4046
    %v4048 = vand.u32 %v2828, 4294901760
    %4049 = vmatprep.subr.mxu0 %v4048
    %v4050 = vand.u32 %v2827, 4294901760
    %4051 = vmatpush1.msra.mxu0 %v4050
    %v4052 = vand.u32 %v2830, 4294901760
    %4053 = vmatprep.subr.mxu0 %v4052
    %v4054 = vand.u32 %v2829, 4294901760
    %4055 = vmatpush1.msra.mxu0 %v4054
    %v4056 = vand.u32 %v2832, 4294901760
    %4057 = vmatprep.subr.mxu0 %v4056
    %v4058 = vand.u32 %v2831, 4294901760
    %4059 = vmatpush1.msra.mxu0 %v4058
    %v4060 = vand.u32 %v2834, 4294901760
    %4061 = vmatprep.subr.mxu0 %v4060
    %v4062 = vand.u32 %v2833, 4294901760
    %4063 = vmatpush1.msra.mxu0 %v4062
    %v4064 = vand.u32 %v2836, 4294901760
    %4065 = vmatprep.subr.mxu0 %v4064
    %v4066 = vand.u32 %v2835, 4294901760
    %4067 = vmatpush1.msra.mxu0 %v4066
    %v4068 = vand.u32 %v2838, 4294901760
    %4069 = vmatprep.subr.mxu0 %v4068
    %v4070 = vand.u32 %v2837, 4294901760
    %4071 = vmatpush1.msra.mxu0 %v4070
    %v4072 = vand.u32 %v2840, 4294901760
    %4073 = vmatprep.subr.mxu0 %v4072
    %v4074 = vand.u32 %v2839, 4294901760
    %4075 = vmatpush1.msra.mxu0 %v4074
    %v4076 = vand.u32 %v2842, 4294901760
    %4077 = vmatprep.subr.mxu0 %v4076
    %v4078 = vand.u32 %v2841, 4294901760
    %4079 = vmatpush1.msra.mxu0 %v4078
    %4080 = vmatprep.subr.mxu0 0.0
    %4081 = vmatpush1.msra.mxu0 0.0
    %4082 = vmatprep.subr.mxu0 0.0
    %4083 = vmatpush1.msra.mxu0 0.0
    %4084 = vmatprep.subr.mxu0 0.0
    %4085 = vmatpush1.msra.mxu0 0.0
    %4086 = vmatprep.subr.mxu0 0.0
    %4087 = vmatpush1.msra.mxu0 0.0
    %4088 = vmatprep.subr.mxu0 0.0
    %4089 = vmatpush1.msra.mxu0 0.0
    %4090 = vmatprep.subr.mxu0 0.0
    %4091 = vmatpush1.msra.mxu0 0.0
    %4092 = vmatprep.subr.mxu0 0.0
    %4093 = vmatpush1.msra.mxu0 0.0
    %4094 = vmatprep.subr.mxu0 0.0
    %4095 = vmatpush1.msra.mxu0 0.0
    %v4096 = vand.u32 %v2856, 4294901760
    %4097 = vmatprep.mubr.f32.mxu0 %v4096
    %v4098 = vand.u32 %v2791, 4294901760
    %4099 = vmatmul.mubr.f32.gmra.mrb[0].mxu0 %v4098
    %v4100 = vpop.f32.mrb[0].mxu0
    %v4101 = vadd.f32 %v3956, %v4100
    %v4102 = vpop.f32.mrb[0].mxu0
    %v4103 = vadd.f32 %v3958, %v4102
    %v4104 = vand.u32 %v2859, 4294901760
    %4105 = vmatprep.mubr.f32.mxu0 %v4104
    %v4106 = vand.u32 %v2792, 4294901760
    %4107 = vmatmul.mubr.f32.gmra.mrb[0].mxu0 %v4106
    %v4108 = vpop.f32.mrb[0].mxu0
    %v4109 = vadd.f32 %v3964, %v4108
    %v4110 = vpop.f32.mrb[0].mxu0
    %v4111 = vadd.f32 %v3966, %v4110
    %v4112 = vand.u32 %v2862, 4294901760
    %4113 = vmatprep.mubr.f32.mxu0 %v4112
    %v4114 = vand.u32 %v2793, 4294901760
    %4115 = vmatmul.mubr.f32.gmra.mrb[0].mxu0 %v4114
    %v4116 = vpop.f32.mrb[0].mxu0
    %v4117 = vadd.f32 %v3972, %v4116
    %v4118 = vpop.f32.mrb[0].mxu0
    %v4119 = vadd.f32 %v3974, %v4118
    %v4120 = vand.u32 %v2865, 4294901760
    %4121 = vmatprep.mubr.f32.mxu0 %v4120
    %v4122 = vand.u32 %v2794, 4294901760
    %4123 = vmatmul.mubr.f32.gmra.mrb[0].mxu0 %v4122
    %v4124 = vpop.f32.mrb[0].mxu0
    %v4125 = vadd.f32 %v3980, %v4124
    %v4126 = vpop.f32.mrb[0].mxu0
    %v4127 = vadd.f32 %v3982, %v4126
    %4128 = vdwg.mxu0
    %v4129 = vld [vmem:[#allocation20] sm:$0x3]
    %v4130 = vld [vmem:[#allocation22] sm:$0x3]
    %v4131 = vadd.f32 %v4101, %v4109
    %v4132 = vadd.f32 %v4131, %v4117
    %v4133 = vadd.f32 %v4132, %v4125
    %v4134 = vrot.slane %v4133, 4
    %v4135 = vadd.f32 %v4133, %v4134
    %v4136 = vrot.slane %v4135, 2
    %v4137 = vadd.f32 %v4135, %v4136
    %v4138 = vrot.slane %v4137, 1
    %v4139 = vadd.f32 %v4137, %v4138
    %v4140 = vadd.f32 %v4103, %v4111
    %v4141 = vadd.f32 %v4140, %v4119
    %v4142 = vadd.f32 %v4141, %v4127
    %v4143 = vrot.slane %v4142, 4
    %v4144 = vadd.f32 %v4142, %v4143
    %v4145 = vrot.slane %v4144, 2
    %v4146 = vadd.f32 %v4144, %v4145
    %v4147 = vrot.slane %v4146, 1
    %v4148 = vadd.f32 %v4146, %v4147
    %v4149 = vmul.f32 %v4139, %v1917
    %v4150 = vmul.f32 %v4148, %v1917
    %v4151 = vmul.f32 %v4101, %v4101
    %v4152 = vmul.f32 %v4103, %v4103
    %v4153 = vmul.f32 %v4109, %v4109
    %v4154 = vmul.f32 %v4111, %v4111
    %v4155 = vmul.f32 %v4117, %v4117
    %v4156 = vmul.f32 %v4119, %v4119
    %v4157 = vmul.f32 %v4125, %v4125
    %v4158 = vmul.f32 %v4127, %v4127
    %v4159 = vadd.f32 %v4151, %v4153
    %v4160 = vadd.f32 %v4159, %v4155
    %v4161 = vadd.f32 %v4160, %v4157
    %v4162 = vrot.slane %v4161, 4
    %v4163 = vadd.f32 %v4161, %v4162
    %v4164 = vrot.slane %v4163, 2
    %v4165 = vadd.f32 %v4163, %v4164
    %v4166 = vrot.slane %v4165, 1
    %v4167 = vadd.f32 %v4165, %v4166
    %v4168 = vadd.f32 %v4152, %v4154
    %v4169 = vadd.f32 %v4168, %v4156
    %v4170 = vadd.f32 %v4169, %v4158
    %v4171 = vrot.slane %v4170, 4
    %v4172 = vadd.f32 %v4170, %v4171
    %v4173 = vrot.slane %v4172, 2
    %v4174 = vadd.f32 %v4172, %v4173
    %v4175 = vrot.slane %v4174, 1
    %v4176 = vadd.f32 %v4174, %v4175
    %v4177 = vmul.f32 %v4167, %v1917
    %v4178 = vmul.f32 %v4176, %v1917
    %v4179 = vmul.f32 %v4149, %v4149
    %v4180 = vmul.f32 %v4150, %v4150
    %v4181 = vsub.f32 %v4177, %v4179
    %v4182 = vsub.f32 %v4178, %v4180
    %v4183 = vmax.f32 %v4181, 0.0
    %v4184 = vmax.f32 %v4182, 0.0
    %v4185 = vsub.f32 %v4101, %v4149
    %v4186 = vsub.f32 %v4103, %v4150
    %v4187 = vsub.f32 %v4109, %v4149
    %v4188 = vsub.f32 %v4111, %v4150
    %v4189 = vsub.f32 %v4117, %v4149
    %v4190 = vsub.f32 %v4119, %v4150
    %v4191 = vsub.f32 %v4125, %v4149
    %v4192 = vsub.f32 %v4127, %v4150
    %v4193 = vadd.f32 %v4183, 1e-05
    %v4194 = vadd.f32 %v4184, 1e-05
    %v4195 = vrsqrt.pop %v4193
    %v4196 = vrsqrt.pop %v4194
    %v4197 = vmul.f32 %v4185, %v4195
    %v4198 = vmul.f32 %v4186, %v4196
    %v4199 = vmul.f32 %v4187, %v4195
    %v4200 = vmul.f32 %v4188, %v4196
    %v4201 = vmul.f32 %v4189, %v4195
    %v4202 = vmul.f32 %v4190, %v4196
    %v4203 = vmul.f32 %v4191, %v4195
    %v4204 = vmul.f32 %v4192, %v4196
    %v4206 = vlaneseq
    %v4207 = vshrl.u32 %v4206, 7
    %v4208 = vsub.s32 0, %v4207
    %v4209 = vrot.slane %v4129, %v4208
    %v4210 = vlaneseq
    %v4211 = vshrl.u32 %v4210, 7
    %v4212 = vsub.s32 1, %v4211
    %v4213 = vrot.slane %v4129, %v4212
    %v4216 = vmul.f32 %v4197, %v4209
    %v4217 = vmul.f32 %v4198, %v4213
    %v4218 = vmul.f32 %v4199, %v4209
    %v4219 = vmul.f32 %v4200, %v4213
    %v4220 = vmul.f32 %v4201, %v4209
    %v4221 = vmul.f32 %v4202, %v4213
    %v4222 = vmul.f32 %v4203, %v4209
    %v4223 = vmul.f32 %v4204, %v4213
    %v4225 = vlaneseq
    %v4226 = vshrl.u32 %v4225, 7
    %v4227 = vsub.s32 0, %v4226
    %v4228 = vrot.slane %v4130, %v4227
    %v4229 = vlaneseq
    %v4230 = vshrl.u32 %v4229, 7
    %v4231 = vsub.s32 1, %v4230
    %v4232 = vrot.slane %v4130, %v4231
    %v4235 = vadd.f32 %v4216, %v4228
    %v4236 = vadd.f32 %v4217, %v4232
    %v4237 = vadd.f32 %v4218, %v4228
    %v4238 = vadd.f32 %v4219, %v4232
    %v4239 = vadd.f32 %v4220, %v4228
    %v4240 = vadd.f32 %v4221, %v4232
    %v4241 = vadd.f32 %v4222, %v4228
    %v4242 = vadd.f32 %v4223, %v4232
    %v4243 = vadd.f32 %v203, %v4235
    %v4244 = vadd.f32 %v204, %v4236
    %v4245 = vadd.f32 %v205, %v4237
    %v4246 = vadd.f32 %v206, %v4238
    %v4247 = vadd.f32 %v207, %v4239
    %v4248 = vadd.f32 %v208, %v4240
    %v4249 = vadd.f32 %v209, %v4241
    %v4250 = vadd.f32 %v210, %v4242
    %v4251 = vadd.f32 %v4243, %v4245
    %v4252 = vrot.slane %v4251, 4
    %v4253 = vadd.f32 %v4251, %v4252
    %v4254 = vrot.slane %v4253, 2
    %v4255 = vadd.f32 %v4253, %v4254
    %v4256 = vrot.slane %v4255, 1
    %v4257 = vadd.f32 %v4255, %v4256
    %v4258 = vadd.f32 %v4244, %v4246
    %v4259 = vrot.slane %v4258, 4
    %v4260 = vadd.f32 %v4258, %v4259
    %v4261 = vrot.slane %v4260, 2
    %v4262 = vadd.f32 %v4260, %v4261
    %v4263 = vrot.slane %v4262, 1
    %v4264 = vadd.f32 %v4262, %v4263
    %v4265 = vadd.f32 %v4247, %v4249
    %v4266 = vrot.slane %v4265, 4
    %v4267 = vadd.f32 %v4265, %v4266
    %v4268 = vrot.slane %v4267, 2
    %v4269 = vadd.f32 %v4267, %v4268
    %v4270 = vrot.slane %v4269, 1
    %v4271 = vadd.f32 %v4269, %v4270
    %v4272 = vadd.f32 %v4248, %v4250
    %v4273 = vrot.slane %v4272, 4
    %v4274 = vadd.f32 %v4272, %v4273
    %v4275 = vrot.slane %v4274, 2
    %v4276 = vadd.f32 %v4274, %v4275
    %v4277 = vrot.slane %v4276, 1
    %v4278 = vadd.f32 %v4276, %v4277
    %v4279 = vrcp.pop 16.0
    %v4280 = vmul.f32 %v4257, %v4279
    %v4281 = vmul.f32 %v4264, %v4279
    %v4282 = vmul.f32 %v4271, %v4279
    %v4283 = vmul.f32 %v4278, %v4279
    %v4284 = vmul.f32 %v4243, %v4243
    %v4285 = vmul.f32 %v4244, %v4244
    %v4286 = vmul.f32 %v4245, %v4245
    %v4287 = vmul.f32 %v4246, %v4246
    %v4288 = vmul.f32 %v4247, %v4247
    %v4289 = vmul.f32 %v4248, %v4248
    %v4290 = vmul.f32 %v4249, %v4249
    %v4291 = vmul.f32 %v4250, %v4250
    %v4292 = vadd.f32 %v4284, %v4286
    %v4293 = vrot.slane %v4292, 4
    %v4294 = vadd.f32 %v4292, %v4293
    %v4295 = vrot.slane %v4294, 2
    %v4296 = vadd.f32 %v4294, %v4295
    %v4297 = vrot.slane %v4296, 1
    %v4298 = vadd.f32 %v4296, %v4297
    %v4299 = vadd.f32 %v4285, %v4287
    %v4300 = vrot.slane %v4299, 4
    %v4301 = vadd.f32 %v4299, %v4300
    %v4302 = vrot.slane %v4301, 2
    %v4303 = vadd.f32 %v4301, %v4302
    %v4304 = vrot.slane %v4303, 1
    %v4305 = vadd.f32 %v4303, %v4304
    %v4306 = vadd.f32 %v4288, %v4290
    %v4307 = vrot.slane %v4306, 4
    %v4308 = vadd.f32 %v4306, %v4307
    %v4309 = vrot.slane %v4308, 2
    %v4310 = vadd.f32 %v4308, %v4309
    %v4311 = vrot.slane %v4310, 1
    %v4312 = vadd.f32 %v4310, %v4311
    %v4313 = vadd.f32 %v4289, %v4291
    %v4314 = vrot.slane %v4313, 4
    %v4315 = vadd.f32 %v4313, %v4314
    %v4316 = vrot.slane %v4315, 2
    %v4317 = vadd.f32 %v4315, %v4316
    %v4318 = vrot.slane %v4317, 1
    %v4319 = vadd.f32 %v4317, %v4318
    %v4320 = vmul.f32 %v4298, %v4279
    %v4321 = vmul.f32 %v4305, %v4279
    %v4322 = vmul.f32 %v4312, %v4279
    %v4323 = vmul.f32 %v4319, %v4279
    %v4324 = vmul.f32 %v4280, %v4280
    %v4325 = vmul.f32 %v4281, %v4281
    %v4326 = vmul.f32 %v4282, %v4282
    %v4327 = vmul.f32 %v4283, %v4283
    %v4328 = vsub.f32 %v4320, %v4324
    %v4329 = vsub.f32 %v4321, %v4325
    %v4330 = vsub.f32 %v4322, %v4326
    %v4331 = vsub.f32 %v4323, %v4327
    %v4332 = vmax.f32 %v4328, 0.0
    %v4333 = vmax.f32 %v4329, 0.0
    %v4334 = vmax.f32 %v4330, 0.0
    %v4335 = vmax.f32 %v4331, 0.0
    %v4336 = vsub.f32 %v4243, %v4280
    %v4337 = vsub.f32 %v4244, %v4281
    %v4338 = vsub.f32 %v4245, %v4280
    %v4339 = vsub.f32 %v4246, %v4281
    %v4340 = vsub.f32 %v4247, %v4282
    %v4341 = vsub.f32 %v4248, %v4283
    %v4342 = vsub.f32 %v4249, %v4282
    %v4343 = vsub.f32 %v4250, %v4283
    %v4344 = vadd.f32 %v4332, 1e-05
    %v4345 = vadd.f32 %v4333, 1e-05
    %v4346 = vadd.f32 %v4334, 1e-05
    %v4347 = vadd.f32 %v4335, 1e-05
    %v4348 = vrsqrt.pop %v4344
    %v4349 = vrsqrt.pop %v4345
    %v4350 = vrsqrt.pop %v4346
    %v4351 = vrsqrt.pop %v4347
    %v4352 = vmul.f32 %v4336, %v4348
    %v4353 = vmul.f32 %v4337, %v4349
    %v4354 = vmul.f32 %v4338, %v4348
    %v4355 = vmul.f32 %v4339, %v4349
    %v4356 = vmul.f32 %v4340, %v4350
    %v4357 = vmul.f32 %v4341, %v4351
    %v4358 = vmul.f32 %v4342, %v4350
    %v4359 = vmul.f32 %v4343, %v4351
    %v4360 = vmax.f32 %v4352, 0.0
    %v4361 = vmax.f32 %v4353, 0.0
    %v4362 = vmax.f32 %v4354, 0.0
    %v4363 = vmax.f32 %v4355, 0.0
    %v4364 = vmax.f32 %v4356, 0.0
    %v4365 = vmax.f32 %v4357, 0.0
    %v4366 = vmax.f32 %v4358, 0.0
    %v4367 = vmax.f32 %v4359, 0.0
    %4368 = vst [vmem:[#allocation23] sm:$0xff] %v4360
    %4369 = vst [vmem:[#allocation23 + $0x8] sm:$0xff] %v4361
    %4370 = vst [vmem:[#allocation23 + $0x10] sm:$0xff] %v4362
    %4371 = vst [vmem:[#allocation23 + $0x18] sm:$0xff] %v4363
    %4372 = vst [vmem:[#allocation23 + $0x20] sm:$0xff] %v4364
    %4373 = vst [vmem:[#allocation23 + $0x28] sm:$0xff] %v4365
    %4374 = vst [vmem:[#allocation23 + $0x30] sm:$0xff] %v4366
    %4375 = vst [vmem:[#allocation23 + $0x38] sm:$0xff] %v4367
    // Predicated region
    $region106: #{tpu_custom_call.1} parent=1 // pred_check
      _
    $region107: #{tpu_custom_call.1} parent=1 // pred_check_branch
      %4377 = sbr.rel (0) target = $region109
    $region108: #{tpu_custom_call.1} parent=1 // pred_region
      %s4379 = ssub.s32 1024, 1024
      %4380 = vsyncadd [#allocation4], %s4379
      %s4381 = sshll.u32 [#allocation23], 4
      %s4382 = int_to_ptr.vmem [resolvable:$true] %s4381
      %4387 = dma.vmem_to_hbm [thread:$0]  %s4382, 1024, %s13, [#allocation4], 256, 256, 16
    $region109: #{tpu_custom_call.1} parent=1 // pred_fallthru
      _
    // Predicated region
    $region110: #{tpu_custom_call.1} parent=1 // pred_check
      _
    $region111: #{tpu_custom_call.1} parent=1 // pred_check_branch
      %4389 = sbr.rel (0) target = $region113
    $region112: #{tpu_custom_call.1} parent=1 // pred_region
      %4390 = dma.done [#allocation4], 1024
    $region113: #{tpu_custom_call.1} parent=1 // pred_fallthru
      _
    %4391 = vsyncpa [#allocation3], 1
    %4392 = vsyncpa [#allocation6], 1
    %4393 = vsyncpa [#allocation9], 1
    %4394 = vsyncpa [#allocation12], 1
    %4395 = vsyncpa [#allocation15], 1
    %4396 = vsyncpa [#allocation18], 1
    %4397 = vsyncpa [#allocation21], 1
    %4398 = vsyncpa [#allocation4], 1

</llo_original>
